<compile_context>
chip_gen: v7x
topology: tpu7x:2x2x1
jax: 0.10.0
libtpu: 0.0.40
codegen_flags: <defaults>
</compile_context>

<pallas_src>
import functools

import jax
import jax.numpy as jnp
import numpy as np
from jax.experimental import pallas as pl
from jax.experimental.pallas import tpu as pltpu

WINDOW_SIZE = 11
SIGMA = 1.5
PAD = WINDOW_SIZE // 2
C1 = 0.01 ** 2
C2 = 0.03 ** 2
LAMBDA1, LAMBDA2, LAMBDA3, LAMBDA4 = 0.4, 0.2, 0.3, 0.3


# ---------------------------------------------------------------------------
# Gaussian taps (mirrors gaussian() in the PyTorch module), baked as constants
# ---------------------------------------------------------------------------
def gaussian_taps(window_size=WINDOW_SIZE, sigma=SIGMA):
    x = np.arange(window_size, dtype=np.float64)
    g = np.exp(-((x - window_size // 2) ** 2) / (2.0 * sigma ** 2))
    g = g / g.sum()
    return tuple(float(v) for v in g.astype(np.float32))


# ---------------------------------------------------------------------------
# Pallas kernel: one batch element per grid step, separable 11-tap blur.
# ---------------------------------------------------------------------------
def _genloss2_kernel(img1_ref, bgnow_ref, bgprev_ref,
                     ssim_out_ref, l1_out_ref,
                     cpad_ref, rpad_ref,
                     *, height, width, taps, approx_recip):
    H, W = height, width

    # Zero the padded scratches each step: the 5-wide halos stay zero across
    # all five planes; only the interior is overwritten per plane.
    cpad_ref[...] = jnp.zeros_like(cpad_ref)
    rpad_ref[...] = jnp.zeros_like(rpad_ref)

    x1 = img1_ref[0, 0, 0] * 255.0        # now_img = imgs_now[:, 0, 0] * 255.0
    x2 = bgnow_ref[0, 0]                  # bg_now
    xp = bgprev_ref[0, 0]                 # bg_prev

    def blur(plane):
        # 'same' zero-padded separable 11-tap Gaussian correlation
        # (== F.conv2d(img, window, padding=5, groups=1); window = outer(g, g)).
        cpad_ref[:, PAD:PAD + W] = plane
        bw = taps[0] * cpad_ref[:, 0:W]
        for t in range(1, WINDOW_SIZE):
            bw = bw + taps[t] * cpad_ref[:, t:t + W]
        rpad_ref[PAD:PAD + H, :] = bw
        bh = taps[0] * rpad_ref[0:H, :]
        for t in range(1, WINDOW_SIZE):
            bh = bh + taps[t] * rpad_ref[t:t + H, :]
        return bh

    mu1 = blur(x1)
    mu2 = blur(x2)
    e11 = blur(x1 * x1)
    e22 = blur(x2 * x2)
    e12 = blur(x1 * x2)

    mu1_sq = mu1 * mu1
    mu2_sq = mu2 * mu2
    mu1_mu2 = mu1 * mu2
    sigma1_sq = e11 - mu1_sq
    sigma2_sq = e22 - mu2_sq
    sigma12 = e12 - mu1_mu2

    num = (2.0 * mu1_mu2 + C1) * (2.0 * sigma12 + C2)
    den = (mu1_sq + mu2_sq + C1) * (sigma1_sq + sigma2_sq + C2)
    if approx_recip:
        ssim_map = num * pl.reciprocal(den, approx=True)   # EUP slot; VALU free
    else:
        ssim_map = num / den

    ssim_sum = jnp.sum(ssim_map)
    l1_sum = jnp.sum(jnp.abs(xp - x2))

    # Lane-dense (1, 8, 128) partial-sum tiles; wrapper reads element [b, 0, 0].
    ssim_out_ref[...] = jnp.broadcast_to(ssim_sum, ssim_out_ref.shape)
    l1_out_ref[...] = jnp.broadcast_to(l1_sum, l1_out_ref.shape)


# ---------------------------------------------------------------------------
# Wrapper
# ---------------------------------------------------------------------------
def gen_loss2(imgs_now, bg_prev, bg_now, rain_now, d_rain, d_bg,
              window_size=WINDOW_SIZE, approx_recip=True):
    # rain_now is accepted but unused, exactly as in the PyTorch forward.
    del rain_now
    B, T, C, H, W = imgs_now.shape
    assert C == 1, "GenLoss2 uses channel=1 SSIM window"
    assert window_size == WINDOW_SIZE

    taps = gaussian_taps(window_size, SIGMA)
    f32 = jnp.float32

    kernel = functools.partial(_genloss2_kernel, height=H, width=W,
                               taps=taps, approx_recip=approx_recip)

    plane_bytes = H * W * 4
    scratch_bytes = (H * (W + 2 * PAD) + (H + 2 * PAD) * W) * 4
    step_bytes = (2 * 3 * plane_bytes          # double-buffered input blocks
                  + 2 * 2 * 8 * 128 * 4        # double-buffered output tiles
                  + scratch_bytes
                  + 14 * plane_bytes)          # live temporaries headroom
    vmem_limit = int(min(max(2 * step_bytes, 4 << 20), 48 << 20))

    cost = pl.CostEstimate(
        flops=B * H * W * (5 * 2 * 2 * WINDOW_SIZE + 30),
        transcendentals=B * H * W,
        bytes_accessed=4 * (3 * B * H * W + 2 * B * 8 * 128),
    )

    ssim_parts, l1_parts = pl.pallas_call(
        kernel,
        out_shape=(jax.ShapeDtypeStruct((B, 8, 128), f32),
                   jax.ShapeDtypeStruct((B, 8, 128), f32)),
        grid_spec=pltpu.PrefetchScalarGridSpec(
            num_scalar_prefetch=0,
            grid=(B,),
            in_specs=[
                pl.BlockSpec((1, 1, 1, H, W), lambda b: (b, 0, 0, 0, 0)),  # imgs_now
                pl.BlockSpec((1, 1, H, W), lambda b: (b, 0, 0, 0)),        # bg_now
                pl.BlockSpec((1, 1, H, W), lambda b: (b, 0, 0, 0)),        # bg_prev
            ],
            out_specs=[
                pl.BlockSpec((1, 8, 128), lambda b: (b, 0, 0)),            # ssim partial sums
                pl.BlockSpec((1, 8, 128), lambda b: (b, 0, 0)),            # l1 partial sums
            ],
            scratch_shapes=[
                pltpu.VMEM((H, W + 2 * PAD), jnp.float32),   # column-padded plane
                pltpu.VMEM((H + 2 * PAD, W), jnp.float32),   # row-padded plane
            ],
        ),
        compiler_params=pltpu.CompilerParams(
            dimension_semantics=("parallel",),
            vmem_limit_bytes=vmem_limit,
        ),
        cost_estimate=cost,
    )(imgs_now.astype(f32), bg_now.astype(f32), bg_prev.astype(f32))

    # Tiny scalar epilogue in the wrapper (moved out of the kernel per review).
    n_elems = jnp.float32(B * H * W)
    ssim_mean = jnp.sum(ssim_parts[:, 0, 0]) / n_elems
    l1_mean = jnp.sum(l1_parts[:, 0, 0]) / n_elems
    term2 = jnp.sum(1.0 - d_rain.astype(f32))   # sum_b (1 - D_rain[b])
    term3 = jnp.sum(d_bg.astype(f32))           # sum_b D_bg[b]
    loss = (LAMBDA1 * (-ssim_mean) + LAMBDA2 * l1_mean
            + LAMBDA3 * term2 + LAMBDA4 * term3)
    return jnp.reshape(loss, (1,))   # shape (1,), matching the PyTorch module


# ---------------------------------------------------------------------------
# Independent NumPy (float64) reference for verification
# ---------------------------------------------------------------------------
def gen_loss2_ref(imgs_now, bg_prev, bg_now, d_rain, d_bg,
                  window_size=WINDOW_SIZE, sigma=SIGMA):
    x = np.arange(window_size, dtype=np.float64)
    g = np.exp(-((x - window_size // 2) ** 2) / (2.0 * sigma ** 2))
    g /= g.sum()
    w2d = np.outer(g, g)
    pad = window_size // 2

    def conv(img):  # 'same' zero-padded correlation, img: (B, H, W)
        B, H, W = img.shape
        p = np.zeros((B, H + 2 * pad, W + 2 * pad), dtype=np.float64)
        p[:, pad:pad + H, pad:pad + W] = img
        out = np.zeros((B, H, W), dtype=np.float64)
        for u in range(window_size):
            for v in range(window_size):
                out += w2d[u, v] * p[:, u:u + H, v:v + W]
        return out

    img1 = np.asarray(imgs_now, np.float64)[:, 0, 0] * 255.0
    img2 = np.asarray(bg_now, np.float64)[:, 0]
    bgp = np.asarray(bg_prev, np.float64)[:, 0]

    mu1, mu2 = conv(img1), conv(img2)
    s1 = conv(img1 * img1) - mu1 ** 2
    s2 = conv(img2 * img2) - mu2 ** 2
    s12 = conv(img1 * img2) - mu1 * mu2
    ssim_map = ((2 * mu1 * mu2 + C1) * (2 * s12 + C2)) / (
        (mu1 ** 2 + mu2 ** 2 + C1) * (s1 + s2 + C2))
    ssim_mean = ssim_map.mean()
    l1 = np.abs(bgp - img2).mean()
    t2 = np.sum(1.0 - np.asarray(d_rain, np.float64))
    t3 = np.sum(np.asarray(d_bg, np.float64))
    return LAMBDA1 * (-ssim_mean) + LAMBDA2 * l1 + LAMBDA3 * t2 + LAMBDA4 * t3


if __name__ == "__main__":
    key = jax.random.PRNGKey(0)
    k1, k2, k3, k4, k5, k6 = jax.random.split(key, 6)

    B, T, C, H, W = 2, 3, 1, 32, 32
    imgs_now = jax.random.uniform(k1, (B, T, C, H, W), jnp.float32)
    bg_prev = jax.random.uniform(k2, (B, C, H, W), jnp.float32)
    bg_now = jax.random.uniform(k3, (B, C, H, W), jnp.float32)
    rain_now = jax.random.uniform(k4, (B, C, H, W), jnp.float32)
    d_rain = jax.random.uniform(k5, (B,), jnp.float32)
    d_bg = jax.random.uniform(k6, (B,), jnp.float32)

    out = gen_loss2(imgs_now, bg_prev, bg_now, rain_now, d_rain, d_bg)
    out = jax.block_until_ready(out)

    ref = gen_loss2_ref(imgs_now, bg_prev, bg_now, d_rain, d_bg)
    np.testing.assert_allclose(np.asarray(out)[0], ref, rtol=1e-2, atol=1e-2)

    print("KERNEL_OK")
</pallas_src>

<mosaic_0001>
module attributes {stable_mosaic.version = 11 : i64} {
  func.func @_genloss2_kernel(%arg0: i32, %arg1: memref<1x1x1x32x32xf32, #tpu.memory_space<vmem>>, %arg2: memref<1x1x32x32xf32, #tpu.memory_space<vmem>>, %arg3: memref<1x1x32x32xf32, #tpu.memory_space<vmem>>, %arg4: memref<1x8x128xf32, #tpu.memory_space<vmem>>, %arg5: memref<1x8x128xf32, #tpu.memory_space<vmem>>, %arg6: memref<32x42xf32, #tpu.memory_space<vmem>>, %arg7: memref<42x32xf32, #tpu.memory_space<vmem>>) attributes {dimension_semantics = [#tpu.dimension_semantics<parallel>], iteration_bounds = array<i64: 2>, scalar_prefetch = 0 : i64, scratch_operands = 2 : i64, tpu.core_type = #tpu.core_type<tc>, window_params = [{transform_indices = @transform_0, window_bounds = array<i64: 1, 1, 1, 32, 32>}, {transform_indices = @transform_1, window_bounds = array<i64: 1, 1, 32, 32>}, {transform_indices = @transform_2, window_bounds = array<i64: 1, 1, 32, 32>}, {transform_indices = @transform_3, window_bounds = array<i64: 1, 8, 128>}, {transform_indices = @transform_4, window_bounds = array<i64: 1, 8, 128>}]} {
    %cst = arith.constant 0.000000e+00 : f32
    %0 = vector.broadcast %cst : f32 to vector<32x42xf32>
    %c0 = arith.constant 0 : index
    %c0_0 = arith.constant 0 : index
    %1 = vector.load %arg6[%c0, %c0_0] : memref<32x42xf32, #tpu.memory_space<vmem>>, vector<32x42xf32>
    tpu.vector_store %arg6[%c0, %c0_0], %0 {strides = array<i32>} : memref<32x42xf32, #tpu.memory_space<vmem>>, vector<32x42xf32>,
    %cst_1 = arith.constant 0.000000e+00 : f32
    %2 = vector.broadcast %cst_1 : f32 to vector<42x32xf32>
    %c0_2 = arith.constant 0 : index
    %c0_3 = arith.constant 0 : index
    %3 = vector.load %arg7[%c0_2, %c0_3] : memref<42x32xf32, #tpu.memory_space<vmem>>, vector<42x32xf32>
    tpu.vector_store %arg7[%c0_2, %c0_3], %2 {strides = array<i32>} : memref<42x32xf32, #tpu.memory_space<vmem>>, vector<42x32xf32>,
    %c0_4 = arith.constant 0 : index
    %c0_5 = arith.constant 0 : index
    %c0_6 = arith.constant 0 : index
    %c0_7 = arith.constant 0 : index
    %c0_8 = arith.constant 0 : index
    %4 = vector.load %arg1[%c0_4, %c0_5, %c0_6, %c0_7, %c0_8] : memref<1x1x1x32x32xf32, #tpu.memory_space<vmem>>, vector<1x1x1x32x32xf32>
    %5 = vector.shape_cast %4 : vector<1x1x1x32x32xf32> to vector<32x32xf32>
    %cst_9 = arith.constant 2.550000e+02 : f32
    %6 = vector.broadcast %cst_9 : f32 to vector<32x32xf32>
    %7 = arith.mulf %5, %6 : vector<32x32xf32>
    %c0_10 = arith.constant 0 : index
    %c0_11 = arith.constant 0 : index
    %c0_12 = arith.constant 0 : index
    %c0_13 = arith.constant 0 : index
    %8 = vector.load %arg2[%c0_10, %c0_11, %c0_12, %c0_13] : memref<1x1x32x32xf32, #tpu.memory_space<vmem>>, vector<1x1x32x32xf32>
    %9 = vector.shape_cast %8 : vector<1x1x32x32xf32> to vector<32x32xf32>
    %c0_14 = arith.constant 0 : index
    %c0_15 = arith.constant 0 : index
    %c0_16 = arith.constant 0 : index
    %c0_17 = arith.constant 0 : index
    %10 = vector.load %arg3[%c0_14, %c0_15, %c0_16, %c0_17] : memref<1x1x32x32xf32, #tpu.memory_space<vmem>>, vector<1x1x32x32xf32>
    %11 = vector.shape_cast %10 : vector<1x1x32x32xf32> to vector<32x32xf32>
    %c0_18 = arith.constant 0 : index
    %c5 = arith.constant 5 : index
    %12 = vector.load %arg6[%c0_18, %c5] : memref<32x42xf32, #tpu.memory_space<vmem>>, vector<32x32xf32>
    tpu.vector_store %arg6[%c0_18, %c5], %7 {strides = array<i32>} : memref<32x42xf32, #tpu.memory_space<vmem>>, vector<32x32xf32>,
    %c0_19 = arith.constant 0 : index
    %c0_20 = arith.constant 0 : index
    %13 = vector.load %arg6[%c0_19, %c0_20] : memref<32x42xf32, #tpu.memory_space<vmem>>, vector<32x32xf32>
    %cst_21 = arith.constant 0.00102838012 : f32
    %14 = vector.broadcast %cst_21 : f32 to vector<32x32xf32>
    %15 = arith.mulf %14, %13 : vector<32x32xf32>
    %c0_22 = arith.constant 0 : index
    %c1 = arith.constant 1 : index
    %16 = vector.load %arg6[%c0_22, %c1] : memref<32x42xf32, #tpu.memory_space<vmem>>, vector<32x32xf32>
    %cst_23 = arith.constant 0.00759875821 : f32
    %17 = vector.broadcast %cst_23 : f32 to vector<32x32xf32>
    %18 = arith.mulf %17, %16 : vector<32x32xf32>
    %19 = arith.addf %15, %18 : vector<32x32xf32>
    %c0_24 = arith.constant 0 : index
    %c2 = arith.constant 2 : index
    %20 = vector.load %arg6[%c0_24, %c2] : memref<32x42xf32, #tpu.memory_space<vmem>>, vector<32x32xf32>
    %cst_25 = arith.constant 0.0360007733 : f32
    %21 = vector.broadcast %cst_25 : f32 to vector<32x32xf32>
    %22 = arith.mulf %21, %20 : vector<32x32xf32>
    %23 = arith.addf %19, %22 : vector<32x32xf32>
    %c0_26 = arith.constant 0 : index
    %c3 = arith.constant 3 : index
    %24 = vector.load %arg6[%c0_26, %c3] : memref<32x42xf32, #tpu.memory_space<vmem>>, vector<32x32xf32>
    %cst_27 = arith.constant 0.109360687 : f32
    %25 = vector.broadcast %cst_27 : f32 to vector<32x32xf32>
    %26 = arith.mulf %25, %24 : vector<32x32xf32>
    %27 = arith.addf %23, %26 : vector<32x32xf32>
    %c0_28 = arith.constant 0 : index
    %c4 = arith.constant 4 : index
    %28 = vector.load %arg6[%c0_28, %c4] : memref<32x42xf32, #tpu.memory_space<vmem>>, vector<32x32xf32>
    %cst_29 = arith.constant 0.213005543 : f32
    %29 = vector.broadcast %cst_29 : f32 to vector<32x32xf32>
    %30 = arith.mulf %29, %28 : vector<32x32xf32>
    %31 = arith.addf %27, %30 : vector<32x32xf32>
    %c0_30 = arith.constant 0 : index
    %c5_31 = arith.constant 5 : index
    %32 = vector.load %arg6[%c0_30, %c5_31] : memref<32x42xf32, #tpu.memory_space<vmem>>, vector<32x32xf32>
    %cst_32 = arith.constant 0.266011715 : f32
    %33 = vector.broadcast %cst_32 : f32 to vector<32x32xf32>
    %34 = arith.mulf %33, %32 : vector<32x32xf32>
    %35 = arith.addf %31, %34 : vector<32x32xf32>
    %c0_33 = arith.constant 0 : index
    %c6 = arith.constant 6 : index
    %36 = vector.load %arg6[%c0_33, %c6] : memref<32x42xf32, #tpu.memory_space<vmem>>, vector<32x32xf32>
    %cst_34 = arith.constant 0.213005543 : f32
    %37 = vector.broadcast %cst_34 : f32 to vector<32x32xf32>
    %38 = arith.mulf %37, %36 : vector<32x32xf32>
    %39 = arith.addf %35, %38 : vector<32x32xf32>
    %c0_35 = arith.constant 0 : index
    %c7 = arith.constant 7 : index
    %40 = vector.load %arg6[%c0_35, %c7] : memref<32x42xf32, #tpu.memory_space<vmem>>, vector<32x32xf32>
    %cst_36 = arith.constant 0.109360687 : f32
    %41 = vector.broadcast %cst_36 : f32 to vector<32x32xf32>
    %42 = arith.mulf %41, %40 : vector<32x32xf32>
    %43 = arith.addf %39, %42 : vector<32x32xf32>
    %c0_37 = arith.constant 0 : index
    %c8 = arith.constant 8 : index
    %44 = vector.load %arg6[%c0_37, %c8] : memref<32x42xf32, #tpu.memory_space<vmem>>, vector<32x32xf32>
    %cst_38 = arith.constant 0.0360007733 : f32
    %45 = vector.broadcast %cst_38 : f32 to vector<32x32xf32>
    %46 = arith.mulf %45, %44 : vector<32x32xf32>
    %47 = arith.addf %43, %46 : vector<32x32xf32>
    %c0_39 = arith.constant 0 : index
    %c9 = arith.constant 9 : index
    %48 = vector.load %arg6[%c0_39, %c9] : memref<32x42xf32, #tpu.memory_space<vmem>>, vector<32x32xf32>
    %cst_40 = arith.constant 0.00759875821 : f32
    %49 = vector.broadcast %cst_40 : f32 to vector<32x32xf32>
    %50 = arith.mulf %49, %48 : vector<32x32xf32>
    %51 = arith.addf %47, %50 : vector<32x32xf32>
    %c0_41 = arith.constant 0 : index
    %c10 = arith.constant 10 : index
    %52 = vector.load %arg6[%c0_41, %c10] : memref<32x42xf32, #tpu.memory_space<vmem>>, vector<32x32xf32>
    %cst_42 = arith.constant 0.00102838012 : f32
    %53 = vector.broadcast %cst_42 : f32 to vector<32x32xf32>
    %54 = arith.mulf %53, %52 : vector<32x32xf32>
    %55 = arith.addf %51, %54 : vector<32x32xf32>
    %c5_43 = arith.constant 5 : index
    %c0_44 = arith.constant 0 : index
    %56 = vector.load %arg7[%c5_43, %c0_44] : memref<42x32xf32, #tpu.memory_space<vmem>>, vector<32x32xf32>
    tpu.vector_store %arg7[%c5_43, %c0_44], %55 {strides = array<i32>} : memref<42x32xf32, #tpu.memory_space<vmem>>, vector<32x32xf32>,
    %c0_45 = arith.constant 0 : index
    %c0_46 = arith.constant 0 : index
    %57 = vector.load %arg7[%c0_45, %c0_46] : memref<42x32xf32, #tpu.memory_space<vmem>>, vector<32x32xf32>
    %cst_47 = arith.constant 0.00102838012 : f32
    %58 = vector.broadcast %cst_47 : f32 to vector<32x32xf32>
    %59 = arith.mulf %58, %57 : vector<32x32xf32>
    %c1_48 = arith.constant 1 : index
    %c0_49 = arith.constant 0 : index
    %60 = vector.load %arg7[%c1_48, %c0_49] : memref<42x32xf32, #tpu.memory_space<vmem>>, vector<32x32xf32>
    %cst_50 = arith.constant 0.00759875821 : f32
    %61 = vector.broadcast %cst_50 : f32 to vector<32x32xf32>
    %62 = arith.mulf %61, %60 : vector<32x32xf32>
    %63 = arith.addf %59, %62 : vector<32x32xf32>
    %c2_51 = arith.constant 2 : index
    %c0_52 = arith.constant 0 : index
    %64 = vector.load %arg7[%c2_51, %c0_52] : memref<42x32xf32, #tpu.memory_space<vmem>>, vector<32x32xf32>
    %cst_53 = arith.constant 0.0360007733 : f32
    %65 = vector.broadcast %cst_53 : f32 to vector<32x32xf32>
    %66 = arith.mulf %65, %64 : vector<32x32xf32>
    %67 = arith.addf %63, %66 : vector<32x32xf32>
    %c3_54 = arith.constant 3 : index
    %c0_55 = arith.constant 0 : index
    %68 = vector.load %arg7[%c3_54, %c0_55] : memref<42x32xf32, #tpu.memory_space<vmem>>, vector<32x32xf32>
    %cst_56 = arith.constant 0.109360687 : f32
    %69 = vector.broadcast %cst_56 : f32 to vector<32x32xf32>
    %70 = arith.mulf %69, %68 : vector<32x32xf32>
    %71 = arith.addf %67, %70 : vector<32x32xf32>
    %c4_57 = arith.constant 4 : index
    %c0_58 = arith.constant 0 : index
    %72 = vector.load %arg7[%c4_57, %c0_58] : memref<42x32xf32, #tpu.memory_space<vmem>>, vector<32x32xf32>
    %cst_59 = arith.constant 0.213005543 : f32
    %73 = vector.broadcast %cst_59 : f32 to vector<32x32xf32>
    %74 = arith.mulf %73, %72 : vector<32x32xf32>
    %75 = arith.addf %71, %74 : vector<32x32xf32>
    %c5_60 = arith.constant 5 : index
    %c0_61 = arith.constant 0 : index
    %76 = vector.load %arg7[%c5_60, %c0_61] : memref<42x32xf32, #tpu.memory_space<vmem>>, vector<32x32xf32>
    %cst_62 = arith.constant 0.266011715 : f32
    %77 = vector.broadcast %cst_62 : f32 to vector<32x32xf32>
    %78 = arith.mulf %77, %76 : vector<32x32xf32>
    %79 = arith.addf %75, %78 : vector<32x32xf32>
    %c6_63 = arith.constant 6 : index
    %c0_64 = arith.constant 0 : index
    %80 = vector.load %arg7[%c6_63, %c0_64] : memref<42x32xf32, #tpu.memory_space<vmem>>, vector<32x32xf32>
    %cst_65 = arith.constant 0.213005543 : f32
    %81 = vector.broadcast %cst_65 : f32 to vector<32x32xf32>
    %82 = arith.mulf %81, %80 : vector<32x32xf32>
    %83 = arith.addf %79, %82 : vector<32x32xf32>
    %c7_66 = arith.constant 7 : index
    %c0_67 = arith.constant 0 : index
    %84 = vector.load %arg7[%c7_66, %c0_67] : memref<42x32xf32, #tpu.memory_space<vmem>>, vector<32x32xf32>
    %cst_68 = arith.constant 0.109360687 : f32
    %85 = vector.broadcast %cst_68 : f32 to vector<32x32xf32>
    %86 = arith.mulf %85, %84 : vector<32x32xf32>
    %87 = arith.addf %83, %86 : vector<32x32xf32>
    %c8_69 = arith.constant 8 : index
    %c0_70 = arith.constant 0 : index
    %88 = vector.load %arg7[%c8_69, %c0_70] : memref<42x32xf32, #tpu.memory_space<vmem>>, vector<32x32xf32>
    %cst_71 = arith.constant 0.0360007733 : f32
    %89 = vector.broadcast %cst_71 : f32 to vector<32x32xf32>
    %90 = arith.mulf %89, %88 : vector<32x32xf32>
    %91 = arith.addf %87, %90 : vector<32x32xf32>
    %c9_72 = arith.constant 9 : index
    %c0_73 = arith.constant 0 : index
    %92 = vector.load %arg7[%c9_72, %c0_73] : memref<42x32xf32, #tpu.memory_space<vmem>>, vector<32x32xf32>
    %cst_74 = arith.constant 0.00759875821 : f32
    %93 = vector.broadcast %cst_74 : f32 to vector<32x32xf32>
    %94 = arith.mulf %93, %92 : vector<32x32xf32>
    %95 = arith.addf %91, %94 : vector<32x32xf32>
    %c10_75 = arith.constant 10 : index
    %c0_76 = arith.constant 0 : index
    %96 = vector.load %arg7[%c10_75, %c0_76] : memref<42x32xf32, #tpu.memory_space<vmem>>, vector<32x32xf32>
    %cst_77 = arith.constant 0.00102838012 : f32
    %97 = vector.broadcast %cst_77 : f32 to vector<32x32xf32>
    %98 = arith.mulf %97, %96 : vector<32x32xf32>
    %99 = arith.addf %95, %98 : vector<32x32xf32>
    %c0_78 = arith.constant 0 : index
    %c5_79 = arith.constant 5 : index
    %100 = vector.load %arg6[%c0_78, %c5_79] : memref<32x42xf32, #tpu.memory_space<vmem>>, vector<32x32xf32>
    tpu.vector_store %arg6[%c0_78, %c5_79], %9 {strides = array<i32>} : memref<32x42xf32, #tpu.memory_space<vmem>>, vector<32x32xf32>,
    %c0_80 = arith.constant 0 : index
    %c0_81 = arith.constant 0 : index
    %101 = vector.load %arg6[%c0_80, %c0_81] : memref<32x42xf32, #tpu.memory_space<vmem>>, vector<32x32xf32>
    %cst_82 = arith.constant 0.00102838012 : f32
    %102 = vector.broadcast %cst_82 : f32 to vector<32x32xf32>
    %103 = arith.mulf %102, %101 : vector<32x32xf32>
    %c0_83 = arith.constant 0 : index
    %c1_84 = arith.constant 1 : index
    %104 = vector.load %arg6[%c0_83, %c1_84] : memref<32x42xf32, #tpu.memory_space<vmem>>, vector<32x32xf32>
    %cst_85 = arith.constant 0.00759875821 : f32
    %105 = vector.broadcast %cst_85 : f32 to vector<32x32xf32>
    %106 = arith.mulf %105, %104 : vector<32x32xf32>
    %107 = arith.addf %103, %106 : vector<32x32xf32>
    %c0_86 = arith.constant 0 : index
    %c2_87 = arith.constant 2 : index
    %108 = vector.load %arg6[%c0_86, %c2_87] : memref<32x42xf32, #tpu.memory_space<vmem>>, vector<32x32xf32>
    %cst_88 = arith.constant 0.0360007733 : f32
    %109 = vector.broadcast %cst_88 : f32 to vector<32x32xf32>
    %110 = arith.mulf %109, %108 : vector<32x32xf32>
    %111 = arith.addf %107, %110 : vector<32x32xf32>
    %c0_89 = arith.constant 0 : index
    %c3_90 = arith.constant 3 : index
    %112 = vector.load %arg6[%c0_89, %c3_90] : memref<32x42xf32, #tpu.memory_space<vmem>>, vector<32x32xf32>
    %cst_91 = arith.constant 0.109360687 : f32
    %113 = vector.broadcast %cst_91 : f32 to vector<32x32xf32>
    %114 = arith.mulf %113, %112 : vector<32x32xf32>
    %115 = arith.addf %111, %114 : vector<32x32xf32>
    %c0_92 = arith.constant 0 : index
    %c4_93 = arith.constant 4 : index
    %116 = vector.load %arg6[%c0_92, %c4_93] : memref<32x42xf32, #tpu.memory_space<vmem>>, vector<32x32xf32>
    %cst_94 = arith.constant 0.213005543 : f32
    %117 = vector.broadcast %cst_94 : f32 to vector<32x32xf32>
    %118 = arith.mulf %117, %116 : vector<32x32xf32>
    %119 = arith.addf %115, %118 : vector<32x32xf32>
    %c0_95 = arith.constant 0 : index
    %c5_96 = arith.constant 5 : index
    %120 = vector.load %arg6[%c0_95, %c5_96] : memref<32x42xf32, #tpu.memory_space<vmem>>, vector<32x32xf32>
    %cst_97 = arith.constant 0.266011715 : f32
    %121 = vector.broadcast %cst_97 : f32 to vector<32x32xf32>
    %122 = arith.mulf %121, %120 : vector<32x32xf32>
    %123 = arith.addf %119, %122 : vector<32x32xf32>
    %c0_98 = arith.constant 0 : index
    %c6_99 = arith.constant 6 : index
    %124 = vector.load %arg6[%c0_98, %c6_99] : memref<32x42xf32, #tpu.memory_space<vmem>>, vector<32x32xf32>
    %cst_100 = arith.constant 0.213005543 : f32
    %125 = vector.broadcast %cst_100 : f32 to vector<32x32xf32>
    %126 = arith.mulf %125, %124 : vector<32x32xf32>
    %127 = arith.addf %123, %126 : vector<32x32xf32>
    %c0_101 = arith.constant 0 : index
    %c7_102 = arith.constant 7 : index
    %128 = vector.load %arg6[%c0_101, %c7_102] : memref<32x42xf32, #tpu.memory_space<vmem>>, vector<32x32xf32>
    %cst_103 = arith.constant 0.109360687 : f32
    %129 = vector.broadcast %cst_103 : f32 to vector<32x32xf32>
    %130 = arith.mulf %129, %128 : vector<32x32xf32>
    %131 = arith.addf %127, %130 : vector<32x32xf32>
    %c0_104 = arith.constant 0 : index
    %c8_105 = arith.constant 8 : index
    %132 = vector.load %arg6[%c0_104, %c8_105] : memref<32x42xf32, #tpu.memory_space<vmem>>, vector<32x32xf32>
    %cst_106 = arith.constant 0.0360007733 : f32
    %133 = vector.broadcast %cst_106 : f32 to vector<32x32xf32>
    %134 = arith.mulf %133, %132 : vector<32x32xf32>
    %135 = arith.addf %131, %134 : vector<32x32xf32>
    %c0_107 = arith.constant 0 : index
    %c9_108 = arith.constant 9 : index
    %136 = vector.load %arg6[%c0_107, %c9_108] : memref<32x42xf32, #tpu.memory_space<vmem>>, vector<32x32xf32>
    %cst_109 = arith.constant 0.00759875821 : f32
    %137 = vector.broadcast %cst_109 : f32 to vector<32x32xf32>
    %138 = arith.mulf %137, %136 : vector<32x32xf32>
    %139 = arith.addf %135, %138 : vector<32x32xf32>
    %c0_110 = arith.constant 0 : index
    %c10_111 = arith.constant 10 : index
    %140 = vector.load %arg6[%c0_110, %c10_111] : memref<32x42xf32, #tpu.memory_space<vmem>>, vector<32x32xf32>
    %cst_112 = arith.constant 0.00102838012 : f32
    %141 = vector.broadcast %cst_112 : f32 to vector<32x32xf32>
    %142 = arith.mulf %141, %140 : vector<32x32xf32>
    %143 = arith.addf %139, %142 : vector<32x32xf32>
    %c5_113 = arith.constant 5 : index
    %c0_114 = arith.constant 0 : index
    %144 = vector.load %arg7[%c5_113, %c0_114] : memref<42x32xf32, #tpu.memory_space<vmem>>, vector<32x32xf32>
    tpu.vector_store %arg7[%c5_113, %c0_114], %143 {strides = array<i32>} : memref<42x32xf32, #tpu.memory_space<vmem>>, vector<32x32xf32>,
    %c0_115 = arith.constant 0 : index
    %c0_116 = arith.constant 0 : index
    %145 = vector.load %arg7[%c0_115, %c0_116] : memref<42x32xf32, #tpu.memory_space<vmem>>, vector<32x32xf32>
    %cst_117 = arith.constant 0.00102838012 : f32
    %146 = vector.broadcast %cst_117 : f32 to vector<32x32xf32>
    %147 = arith.mulf %146, %145 : vector<32x32xf32>
    %c1_118 = arith.constant 1 : index
    %c0_119 = arith.constant 0 : index
    %148 = vector.load %arg7[%c1_118, %c0_119] : memref<42x32xf32, #tpu.memory_space<vmem>>, vector<32x32xf32>
    %cst_120 = arith.constant 0.00759875821 : f32
    %149 = vector.broadcast %cst_120 : f32 to vector<32x32xf32>
    %150 = arith.mulf %149, %148 : vector<32x32xf32>
    %151 = arith.addf %147, %150 : vector<32x32xf32>
    %c2_121 = arith.constant 2 : index
    %c0_122 = arith.constant 0 : index
    %152 = vector.load %arg7[%c2_121, %c0_122] : memref<42x32xf32, #tpu.memory_space<vmem>>, vector<32x32xf32>
    %cst_123 = arith.constant 0.0360007733 : f32
    %153 = vector.broadcast %cst_123 : f32 to vector<32x32xf32>
    %154 = arith.mulf %153, %152 : vector<32x32xf32>
    %155 = arith.addf %151, %154 : vector<32x32xf32>
    %c3_124 = arith.constant 3 : index
    %c0_125 = arith.constant 0 : index
    %156 = vector.load %arg7[%c3_124, %c0_125] : memref<42x32xf32, #tpu.memory_space<vmem>>, vector<32x32xf32>
    %cst_126 = arith.constant 0.109360687 : f32
    %157 = vector.broadcast %cst_126 : f32 to vector<32x32xf32>
    %158 = arith.mulf %157, %156 : vector<32x32xf32>
    %159 = arith.addf %155, %158 : vector<32x32xf32>
    %c4_127 = arith.constant 4 : index
    %c0_128 = arith.constant 0 : index
    %160 = vector.load %arg7[%c4_127, %c0_128] : memref<42x32xf32, #tpu.memory_space<vmem>>, vector<32x32xf32>
    %cst_129 = arith.constant 0.213005543 : f32
    %161 = vector.broadcast %cst_129 : f32 to vector<32x32xf32>
    %162 = arith.mulf %161, %160 : vector<32x32xf32>
    %163 = arith.addf %159, %162 : vector<32x32xf32>
    %c5_130 = arith.constant 5 : index
    %c0_131 = arith.constant 0 : index
    %164 = vector.load %arg7[%c5_130, %c0_131] : memref<42x32xf32, #tpu.memory_space<vmem>>, vector<32x32xf32>
    %cst_132 = arith.constant 0.266011715 : f32
    %165 = vector.broadcast %cst_132 : f32 to vector<32x32xf32>
    %166 = arith.mulf %165, %164 : vector<32x32xf32>
    %167 = arith.addf %163, %166 : vector<32x32xf32>
    %c6_133 = arith.constant 6 : index
    %c0_134 = arith.constant 0 : index
    %168 = vector.load %arg7[%c6_133, %c0_134] : memref<42x32xf32, #tpu.memory_space<vmem>>, vector<32x32xf32>
    %cst_135 = arith.constant 0.213005543 : f32
    %169 = vector.broadcast %cst_135 : f32 to vector<32x32xf32>
    %170 = arith.mulf %169, %168 : vector<32x32xf32>
    %171 = arith.addf %167, %170 : vector<32x32xf32>
    %c7_136 = arith.constant 7 : index
    %c0_137 = arith.constant 0 : index
    %172 = vector.load %arg7[%c7_136, %c0_137] : memref<42x32xf32, #tpu.memory_space<vmem>>, vector<32x32xf32>
    %cst_138 = arith.constant 0.109360687 : f32
    %173 = vector.broadcast %cst_138 : f32 to vector<32x32xf32>
    %174 = arith.mulf %173, %172 : vector<32x32xf32>
    %175 = arith.addf %171, %174 : vector<32x32xf32>
    %c8_139 = arith.constant 8 : index
    %c0_140 = arith.constant 0 : index
    %176 = vector.load %arg7[%c8_139, %c0_140] : memref<42x32xf32, #tpu.memory_space<vmem>>, vector<32x32xf32>
    %cst_141 = arith.constant 0.0360007733 : f32
    %177 = vector.broadcast %cst_141 : f32 to vector<32x32xf32>
    %178 = arith.mulf %177, %176 : vector<32x32xf32>
    %179 = arith.addf %175, %178 : vector<32x32xf32>
    %c9_142 = arith.constant 9 : index
    %c0_143 = arith.constant 0 : index
    %180 = vector.load %arg7[%c9_142, %c0_143] : memref<42x32xf32, #tpu.memory_space<vmem>>, vector<32x32xf32>
    %cst_144 = arith.constant 0.00759875821 : f32
    %181 = vector.broadcast %cst_144 : f32 to vector<32x32xf32>
    %182 = arith.mulf %181, %180 : vector<32x32xf32>
    %183 = arith.addf %179, %182 : vector<32x32xf32>
    %c10_145 = arith.constant 10 : index
    %c0_146 = arith.constant 0 : index
    %184 = vector.load %arg7[%c10_145, %c0_146] : memref<42x32xf32, #tpu.memory_space<vmem>>, vector<32x32xf32>
    %cst_147 = arith.constant 0.00102838012 : f32
    %185 = vector.broadcast %cst_147 : f32 to vector<32x32xf32>
    %186 = arith.mulf %185, %184 : vector<32x32xf32>
    %187 = arith.addf %183, %186 : vector<32x32xf32>
    %188 = arith.mulf %7, %7 : vector<32x32xf32>
    %c0_148 = arith.constant 0 : index
    %c5_149 = arith.constant 5 : index
    %189 = vector.load %arg6[%c0_148, %c5_149] : memref<32x42xf32, #tpu.memory_space<vmem>>, vector<32x32xf32>
    tpu.vector_store %arg6[%c0_148, %c5_149], %188 {strides = array<i32>} : memref<32x42xf32, #tpu.memory_space<vmem>>, vector<32x32xf32>,
    %c0_150 = arith.constant 0 : index
    %c0_151 = arith.constant 0 : index
    %190 = vector.load %arg6[%c0_150, %c0_151] : memref<32x42xf32, #tpu.memory_space<vmem>>, vector<32x32xf32>
    %cst_152 = arith.constant 0.00102838012 : f32
    %191 = vector.broadcast %cst_152 : f32 to vector<32x32xf32>
    %192 = arith.mulf %191, %190 : vector<32x32xf32>
    %c0_153 = arith.constant 0 : index
    %c1_154 = arith.constant 1 : index
    %193 = vector.load %arg6[%c0_153, %c1_154] : memref<32x42xf32, #tpu.memory_space<vmem>>, vector<32x32xf32>
    %cst_155 = arith.constant 0.00759875821 : f32
    %194 = vector.broadcast %cst_155 : f32 to vector<32x32xf32>
    %195 = arith.mulf %194, %193 : vector<32x32xf32>
    %196 = arith.addf %192, %195 : vector<32x32xf32>
    %c0_156 = arith.constant 0 : index
    %c2_157 = arith.constant 2 : index
    %197 = vector.load %arg6[%c0_156, %c2_157] : memref<32x42xf32, #tpu.memory_space<vmem>>, vector<32x32xf32>
    %cst_158 = arith.constant 0.0360007733 : f32
    %198 = vector.broadcast %cst_158 : f32 to vector<32x32xf32>
    %199 = arith.mulf %198, %197 : vector<32x32xf32>
    %200 = arith.addf %196, %199 : vector<32x32xf32>
    %c0_159 = arith.constant 0 : index
    %c3_160 = arith.constant 3 : index
    %201 = vector.load %arg6[%c0_159, %c3_160] : memref<32x42xf32, #tpu.memory_space<vmem>>, vector<32x32xf32>
    %cst_161 = arith.constant 0.109360687 : f32
    %202 = vector.broadcast %cst_161 : f32 to vector<32x32xf32>
    %203 = arith.mulf %202, %201 : vector<32x32xf32>
    %204 = arith.addf %200, %203 : vector<32x32xf32>
    %c0_162 = arith.constant 0 : index
    %c4_163 = arith.constant 4 : index
    %205 = vector.load %arg6[%c0_162, %c4_163] : memref<32x42xf32, #tpu.memory_space<vmem>>, vector<32x32xf32>
    %cst_164 = arith.constant 0.213005543 : f32
    %206 = vector.broadcast %cst_164 : f32 to vector<32x32xf32>
    %207 = arith.mulf %206, %205 : vector<32x32xf32>
    %208 = arith.addf %204, %207 : vector<32x32xf32>
    %c0_165 = arith.constant 0 : index
    %c5_166 = arith.constant 5 : index
    %209 = vector.load %arg6[%c0_165, %c5_166] : memref<32x42xf32, #tpu.memory_space<vmem>>, vector<32x32xf32>
    %cst_167 = arith.constant 0.266011715 : f32
    %210 = vector.broadcast %cst_167 : f32 to vector<32x32xf32>
    %211 = arith.mulf %210, %209 : vector<32x32xf32>
    %212 = arith.addf %208, %211 : vector<32x32xf32>
    %c0_168 = arith.constant 0 : index
    %c6_169 = arith.constant 6 : index
    %213 = vector.load %arg6[%c0_168, %c6_169] : memref<32x42xf32, #tpu.memory_space<vmem>>, vector<32x32xf32>
    %cst_170 = arith.constant 0.213005543 : f32
    %214 = vector.broadcast %cst_170 : f32 to vector<32x32xf32>
    %215 = arith.mulf %214, %213 : vector<32x32xf32>
    %216 = arith.addf %212, %215 : vector<32x32xf32>
    %c0_171 = arith.constant 0 : index
    %c7_172 = arith.constant 7 : index
    %217 = vector.load %arg6[%c0_171, %c7_172] : memref<32x42xf32, #tpu.memory_space<vmem>>, vector<32x32xf32>
    %cst_173 = arith.constant 0.109360687 : f32
    %218 = vector.broadcast %cst_173 : f32 to vector<32x32xf32>
    %219 = arith.mulf %218, %217 : vector<32x32xf32>
    %220 = arith.addf %216, %219 : vector<32x32xf32>
    %c0_174 = arith.constant 0 : index
    %c8_175 = arith.constant 8 : index
    %221 = vector.load %arg6[%c0_174, %c8_175] : memref<32x42xf32, #tpu.memory_space<vmem>>, vector<32x32xf32>
    %cst_176 = arith.constant 0.0360007733 : f32
    %222 = vector.broadcast %cst_176 : f32 to vector<32x32xf32>
    %223 = arith.mulf %222, %221 : vector<32x32xf32>
    %224 = arith.addf %220, %223 : vector<32x32xf32>
    %c0_177 = arith.constant 0 : index
    %c9_178 = arith.constant 9 : index
    %225 = vector.load %arg6[%c0_177, %c9_178] : memref<32x42xf32, #tpu.memory_space<vmem>>, vector<32x32xf32>
    %cst_179 = arith.constant 0.00759875821 : f32
    %226 = vector.broadcast %cst_179 : f32 to vector<32x32xf32>
    %227 = arith.mulf %226, %225 : vector<32x32xf32>
    %228 = arith.addf %224, %227 : vector<32x32xf32>
    %c0_180 = arith.constant 0 : index
    %c10_181 = arith.constant 10 : index
    %229 = vector.load %arg6[%c0_180, %c10_181] : memref<32x42xf32, #tpu.memory_space<vmem>>, vector<32x32xf32>
    %cst_182 = arith.constant 0.00102838012 : f32
    %230 = vector.broadcast %cst_182 : f32 to vector<32x32xf32>
    %231 = arith.mulf %230, %229 : vector<32x32xf32>
    %232 = arith.addf %228, %231 : vector<32x32xf32>
    %c5_183 = arith.constant 5 : index
    %c0_184 = arith.constant 0 : index
    %233 = vector.load %arg7[%c5_183, %c0_184] : memref<42x32xf32, #tpu.memory_space<vmem>>, vector<32x32xf32>
    tpu.vector_store %arg7[%c5_183, %c0_184], %232 {strides = array<i32>} : memref<42x32xf32, #tpu.memory_space<vmem>>, vector<32x32xf32>,
    %c0_185 = arith.constant 0 : index
    %c0_186 = arith.constant 0 : index
    %234 = vector.load %arg7[%c0_185, %c0_186] : memref<42x32xf32, #tpu.memory_space<vmem>>, vector<32x32xf32>
    %cst_187 = arith.constant 0.00102838012 : f32
    %235 = vector.broadcast %cst_187 : f32 to vector<32x32xf32>
    %236 = arith.mulf %235, %234 : vector<32x32xf32>
    %c1_188 = arith.constant 1 : index
    %c0_189 = arith.constant 0 : index
    %237 = vector.load %arg7[%c1_188, %c0_189] : memref<42x32xf32, #tpu.memory_space<vmem>>, vector<32x32xf32>
    %cst_190 = arith.constant 0.00759875821 : f32
    %238 = vector.broadcast %cst_190 : f32 to vector<32x32xf32>
    %239 = arith.mulf %238, %237 : vector<32x32xf32>
    %240 = arith.addf %236, %239 : vector<32x32xf32>
    %c2_191 = arith.constant 2 : index
    %c0_192 = arith.constant 0 : index
    %241 = vector.load %arg7[%c2_191, %c0_192] : memref<42x32xf32, #tpu.memory_space<vmem>>, vector<32x32xf32>
    %cst_193 = arith.constant 0.0360007733 : f32
    %242 = vector.broadcast %cst_193 : f32 to vector<32x32xf32>
    %243 = arith.mulf %242, %241 : vector<32x32xf32>
    %244 = arith.addf %240, %243 : vector<32x32xf32>
    %c3_194 = arith.constant 3 : index
    %c0_195 = arith.constant 0 : index
    %245 = vector.load %arg7[%c3_194, %c0_195] : memref<42x32xf32, #tpu.memory_space<vmem>>, vector<32x32xf32>
    %cst_196 = arith.constant 0.109360687 : f32
    %246 = vector.broadcast %cst_196 : f32 to vector<32x32xf32>
    %247 = arith.mulf %246, %245 : vector<32x32xf32>
    %248 = arith.addf %244, %247 : vector<32x32xf32>
    %c4_197 = arith.constant 4 : index
    %c0_198 = arith.constant 0 : index
    %249 = vector.load %arg7[%c4_197, %c0_198] : memref<42x32xf32, #tpu.memory_space<vmem>>, vector<32x32xf32>
    %cst_199 = arith.constant 0.213005543 : f32
    %250 = vector.broadcast %cst_199 : f32 to vector<32x32xf32>
    %251 = arith.mulf %250, %249 : vector<32x32xf32>
    %252 = arith.addf %248, %251 : vector<32x32xf32>
    %c5_200 = arith.constant 5 : index
    %c0_201 = arith.constant 0 : index
    %253 = vector.load %arg7[%c5_200, %c0_201] : memref<42x32xf32, #tpu.memory_space<vmem>>, vector<32x32xf32>
    %cst_202 = arith.constant 0.266011715 : f32
    %254 = vector.broadcast %cst_202 : f32 to vector<32x32xf32>
    %255 = arith.mulf %254, %253 : vector<32x32xf32>
    %256 = arith.addf %252, %255 : vector<32x32xf32>
    %c6_203 = arith.constant 6 : index
    %c0_204 = arith.constant 0 : index
    %257 = vector.load %arg7[%c6_203, %c0_204] : memref<42x32xf32, #tpu.memory_space<vmem>>, vector<32x32xf32>
    %cst_205 = arith.constant 0.213005543 : f32
    %258 = vector.broadcast %cst_205 : f32 to vector<32x32xf32>
    %259 = arith.mulf %258, %257 : vector<32x32xf32>
    %260 = arith.addf %256, %259 : vector<32x32xf32>
    %c7_206 = arith.constant 7 : index
    %c0_207 = arith.constant 0 : index
    %261 = vector.load %arg7[%c7_206, %c0_207] : memref<42x32xf32, #tpu.memory_space<vmem>>, vector<32x32xf32>
    %cst_208 = arith.constant 0.109360687 : f32
    %262 = vector.broadcast %cst_208 : f32 to vector<32x32xf32>
    %263 = arith.mulf %262, %261 : vector<32x32xf32>
    %264 = arith.addf %260, %263 : vector<32x32xf32>
    %c8_209 = arith.constant 8 : index
    %c0_210 = arith.constant 0 : index
    %265 = vector.load %arg7[%c8_209, %c0_210] : memref<42x32xf32, #tpu.memory_space<vmem>>, vector<32x32xf32>
    %cst_211 = arith.constant 0.0360007733 : f32
    %266 = vector.broadcast %cst_211 : f32 to vector<32x32xf32>
    %267 = arith.mulf %266, %265 : vector<32x32xf32>
    %268 = arith.addf %264, %267 : vector<32x32xf32>
    %c9_212 = arith.constant 9 : index
    %c0_213 = arith.constant 0 : index
    %269 = vector.load %arg7[%c9_212, %c0_213] : memref<42x32xf32, #tpu.memory_space<vmem>>, vector<32x32xf32>
    %cst_214 = arith.constant 0.00759875821 : f32
    %270 = vector.broadcast %cst_214 : f32 to vector<32x32xf32>
    %271 = arith.mulf %270, %269 : vector<32x32xf32>
    %272 = arith.addf %268, %271 : vector<32x32xf32>
    %c10_215 = arith.constant 10 : index
    %c0_216 = arith.constant 0 : index
    %273 = vector.load %arg7[%c10_215, %c0_216] : memref<42x32xf32, #tpu.memory_space<vmem>>, vector<32x32xf32>
    %cst_217 = arith.constant 0.00102838012 : f32
    %274 = vector.broadcast %cst_217 : f32 to vector<32x32xf32>
    %275 = arith.mulf %274, %273 : vector<32x32xf32>
    %276 = arith.addf %272, %275 : vector<32x32xf32>
    %277 = arith.mulf %9, %9 : vector<32x32xf32>
    %c0_218 = arith.constant 0 : index
    %c5_219 = arith.constant 5 : index
    %278 = vector.load %arg6[%c0_218, %c5_219] : memref<32x42xf32, #tpu.memory_space<vmem>>, vector<32x32xf32>
    tpu.vector_store %arg6[%c0_218, %c5_219], %277 {strides = array<i32>} : memref<32x42xf32, #tpu.memory_space<vmem>>, vector<32x32xf32>,
    %c0_220 = arith.constant 0 : index
    %c0_221 = arith.constant 0 : index
    %279 = vector.load %arg6[%c0_220, %c0_221] : memref<32x42xf32, #tpu.memory_space<vmem>>, vector<32x32xf32>
    %cst_222 = arith.constant 0.00102838012 : f32
    %280 = vector.broadcast %cst_222 : f32 to vector<32x32xf32>
    %281 = arith.mulf %280, %279 : vector<32x32xf32>
    %c0_223 = arith.constant 0 : index
    %c1_224 = arith.constant 1 : index
    %282 = vector.load %arg6[%c0_223, %c1_224] : memref<32x42xf32, #tpu.memory_space<vmem>>, vector<32x32xf32>
    %cst_225 = arith.constant 0.00759875821 : f32
    %283 = vector.broadcast %cst_225 : f32 to vector<32x32xf32>
    %284 = arith.mulf %283, %282 : vector<32x32xf32>
    %285 = arith.addf %281, %284 : vector<32x32xf32>
    %c0_226 = arith.constant 0 : index
    %c2_227 = arith.constant 2 : index
    %286 = vector.load %arg6[%c0_226, %c2_227] : memref<32x42xf32, #tpu.memory_space<vmem>>, vector<32x32xf32>
    %cst_228 = arith.constant 0.0360007733 : f32
    %287 = vector.broadcast %cst_228 : f32 to vector<32x32xf32>
    %288 = arith.mulf %287, %286 : vector<32x32xf32>
    %289 = arith.addf %285, %288 : vector<32x32xf32>
    %c0_229 = arith.constant 0 : index
    %c3_230 = arith.constant 3 : index
    %290 = vector.load %arg6[%c0_229, %c3_230] : memref<32x42xf32, #tpu.memory_space<vmem>>, vector<32x32xf32>
    %cst_231 = arith.constant 0.109360687 : f32
    %291 = vector.broadcast %cst_231 : f32 to vector<32x32xf32>
    %292 = arith.mulf %291, %290 : vector<32x32xf32>
    %293 = arith.addf %289, %292 : vector<32x32xf32>
    %c0_232 = arith.constant 0 : index
    %c4_233 = arith.constant 4 : index
    %294 = vector.load %arg6[%c0_232, %c4_233] : memref<32x42xf32, #tpu.memory_space<vmem>>, vector<32x32xf32>
    %cst_234 = arith.constant 0.213005543 : f32
    %295 = vector.broadcast %cst_234 : f32 to vector<32x32xf32>
    %296 = arith.mulf %295, %294 : vector<32x32xf32>
    %297 = arith.addf %293, %296 : vector<32x32xf32>
    %c0_235 = arith.constant 0 : index
    %c5_236 = arith.constant 5 : index
    %298 = vector.load %arg6[%c0_235, %c5_236] : memref<32x42xf32, #tpu.memory_space<vmem>>, vector<32x32xf32>
    %cst_237 = arith.constant 0.266011715 : f32
    %299 = vector.broadcast %cst_237 : f32 to vector<32x32xf32>
    %300 = arith.mulf %299, %298 : vector<32x32xf32>
    %301 = arith.addf %297, %300 : vector<32x32xf32>
    %c0_238 = arith.constant 0 : index
    %c6_239 = arith.constant 6 : index
    %302 = vector.load %arg6[%c0_238, %c6_239] : memref<32x42xf32, #tpu.memory_space<vmem>>, vector<32x32xf32>
    %cst_240 = arith.constant 0.213005543 : f32
    %303 = vector.broadcast %cst_240 : f32 to vector<32x32xf32>
    %304 = arith.mulf %303, %302 : vector<32x32xf32>
    %305 = arith.addf %301, %304 : vector<32x32xf32>
    %c0_241 = arith.constant 0 : index
    %c7_242 = arith.constant 7 : index
    %306 = vector.load %arg6[%c0_241, %c7_242] : memref<32x42xf32, #tpu.memory_space<vmem>>, vector<32x32xf32>
    %cst_243 = arith.constant 0.109360687 : f32
    %307 = vector.broadcast %cst_243 : f32 to vector<32x32xf32>
    %308 = arith.mulf %307, %306 : vector<32x32xf32>
    %309 = arith.addf %305, %308 : vector<32x32xf32>
    %c0_244 = arith.constant 0 : index
    %c8_245 = arith.constant 8 : index
    %310 = vector.load %arg6[%c0_244, %c8_245] : memref<32x42xf32, #tpu.memory_space<vmem>>, vector<32x32xf32>
    %cst_246 = arith.constant 0.0360007733 : f32
    %311 = vector.broadcast %cst_246 : f32 to vector<32x32xf32>
    %312 = arith.mulf %311, %310 : vector<32x32xf32>
    %313 = arith.addf %309, %312 : vector<32x32xf32>
    %c0_247 = arith.constant 0 : index
    %c9_248 = arith.constant 9 : index
    %314 = vector.load %arg6[%c0_247, %c9_248] : memref<32x42xf32, #tpu.memory_space<vmem>>, vector<32x32xf32>
    %cst_249 = arith.constant 0.00759875821 : f32
    %315 = vector.broadcast %cst_249 : f32 to vector<32x32xf32>
    %316 = arith.mulf %315, %314 : vector<32x32xf32>
    %317 = arith.addf %313, %316 : vector<32x32xf32>
    %c0_250 = arith.constant 0 : index
    %c10_251 = arith.constant 10 : index
    %318 = vector.load %arg6[%c0_250, %c10_251] : memref<32x42xf32, #tpu.memory_space<vmem>>, vector<32x32xf32>
    %cst_252 = arith.constant 0.00102838012 : f32
    %319 = vector.broadcast %cst_252 : f32 to vector<32x32xf32>
    %320 = arith.mulf %319, %318 : vector<32x32xf32>
    %321 = arith.addf %317, %320 : vector<32x32xf32>
    %c5_253 = arith.constant 5 : index
    %c0_254 = arith.constant 0 : index
    %322 = vector.load %arg7[%c5_253, %c0_254] : memref<42x32xf32, #tpu.memory_space<vmem>>, vector<32x32xf32>
    tpu.vector_store %arg7[%c5_253, %c0_254], %321 {strides = array<i32>} : memref<42x32xf32, #tpu.memory_space<vmem>>, vector<32x32xf32>,
    %c0_255 = arith.constant 0 : index
    %c0_256 = arith.constant 0 : index
    %323 = vector.load %arg7[%c0_255, %c0_256] : memref<42x32xf32, #tpu.memory_space<vmem>>, vector<32x32xf32>
    %cst_257 = arith.constant 0.00102838012 : f32
    %324 = vector.broadcast %cst_257 : f32 to vector<32x32xf32>
    %325 = arith.mulf %324, %323 : vector<32x32xf32>
    %c1_258 = arith.constant 1 : index
    %c0_259 = arith.constant 0 : index
    %326 = vector.load %arg7[%c1_258, %c0_259] : memref<42x32xf32, #tpu.memory_space<vmem>>, vector<32x32xf32>
    %cst_260 = arith.constant 0.00759875821 : f32
    %327 = vector.broadcast %cst_260 : f32 to vector<32x32xf32>
    %328 = arith.mulf %327, %326 : vector<32x32xf32>
    %329 = arith.addf %325, %328 : vector<32x32xf32>
    %c2_261 = arith.constant 2 : index
    %c0_262 = arith.constant 0 : index
    %330 = vector.load %arg7[%c2_261, %c0_262] : memref<42x32xf32, #tpu.memory_space<vmem>>, vector<32x32xf32>
    %cst_263 = arith.constant 0.0360007733 : f32
    %331 = vector.broadcast %cst_263 : f32 to vector<32x32xf32>
    %332 = arith.mulf %331, %330 : vector<32x32xf32>
    %333 = arith.addf %329, %332 : vector<32x32xf32>
    %c3_264 = arith.constant 3 : index
    %c0_265 = arith.constant 0 : index
    %334 = vector.load %arg7[%c3_264, %c0_265] : memref<42x32xf32, #tpu.memory_space<vmem>>, vector<32x32xf32>
    %cst_266 = arith.constant 0.109360687 : f32
    %335 = vector.broadcast %cst_266 : f32 to vector<32x32xf32>
    %336 = arith.mulf %335, %334 : vector<32x32xf32>
    %337 = arith.addf %333, %336 : vector<32x32xf32>
    %c4_267 = arith.constant 4 : index
    %c0_268 = arith.constant 0 : index
    %338 = vector.load %arg7[%c4_267, %c0_268] : memref<42x32xf32, #tpu.memory_space<vmem>>, vector<32x32xf32>
    %cst_269 = arith.constant 0.213005543 : f32
    %339 = vector.broadcast %cst_269 : f32 to vector<32x32xf32>
    %340 = arith.mulf %339, %338 : vector<32x32xf32>
    %341 = arith.addf %337, %340 : vector<32x32xf32>
    %c5_270 = arith.constant 5 : index
    %c0_271 = arith.constant 0 : index
    %342 = vector.load %arg7[%c5_270, %c0_271] : memref<42x32xf32, #tpu.memory_space<vmem>>, vector<32x32xf32>
    %cst_272 = arith.constant 0.266011715 : f32
    %343 = vector.broadcast %cst_272 : f32 to vector<32x32xf32>
    %344 = arith.mulf %343, %342 : vector<32x32xf32>
    %345 = arith.addf %341, %344 : vector<32x32xf32>
    %c6_273 = arith.constant 6 : index
    %c0_274 = arith.constant 0 : index
    %346 = vector.load %arg7[%c6_273, %c0_274] : memref<42x32xf32, #tpu.memory_space<vmem>>, vector<32x32xf32>
    %cst_275 = arith.constant 0.213005543 : f32
    %347 = vector.broadcast %cst_275 : f32 to vector<32x32xf32>
    %348 = arith.mulf %347, %346 : vector<32x32xf32>
    %349 = arith.addf %345, %348 : vector<32x32xf32>
    %c7_276 = arith.constant 7 : index
    %c0_277 = arith.constant 0 : index
    %350 = vector.load %arg7[%c7_276, %c0_277] : memref<42x32xf32, #tpu.memory_space<vmem>>, vector<32x32xf32>
    %cst_278 = arith.constant 0.109360687 : f32
    %351 = vector.broadcast %cst_278 : f32 to vector<32x32xf32>
    %352 = arith.mulf %351, %350 : vector<32x32xf32>
    %353 = arith.addf %349, %352 : vector<32x32xf32>
    %c8_279 = arith.constant 8 : index
    %c0_280 = arith.constant 0 : index
    %354 = vector.load %arg7[%c8_279, %c0_280] : memref<42x32xf32, #tpu.memory_space<vmem>>, vector<32x32xf32>
    %cst_281 = arith.constant 0.0360007733 : f32
    %355 = vector.broadcast %cst_281 : f32 to vector<32x32xf32>
    %356 = arith.mulf %355, %354 : vector<32x32xf32>
    %357 = arith.addf %353, %356 : vector<32x32xf32>
    %c9_282 = arith.constant 9 : index
    %c0_283 = arith.constant 0 : index
    %358 = vector.load %arg7[%c9_282, %c0_283] : memref<42x32xf32, #tpu.memory_space<vmem>>, vector<32x32xf32>
    %cst_284 = arith.constant 0.00759875821 : f32
    %359 = vector.broadcast %cst_284 : f32 to vector<32x32xf32>
    %360 = arith.mulf %359, %358 : vector<32x32xf32>
    %361 = arith.addf %357, %360 : vector<32x32xf32>
    %c10_285 = arith.constant 10 : index
    %c0_286 = arith.constant 0 : index
    %362 = vector.load %arg7[%c10_285, %c0_286] : memref<42x32xf32, #tpu.memory_space<vmem>>, vector<32x32xf32>
    %cst_287 = arith.constant 0.00102838012 : f32
    %363 = vector.broadcast %cst_287 : f32 to vector<32x32xf32>
    %364 = arith.mulf %363, %362 : vector<32x32xf32>
    %365 = arith.addf %361, %364 : vector<32x32xf32>
    %366 = arith.mulf %7, %9 : vector<32x32xf32>
    %c0_288 = arith.constant 0 : index
    %c5_289 = arith.constant 5 : index
    %367 = vector.load %arg6[%c0_288, %c5_289] : memref<32x42xf32, #tpu.memory_space<vmem>>, vector<32x32xf32>
    tpu.vector_store %arg6[%c0_288, %c5_289], %366 {strides = array<i32>} : memref<32x42xf32, #tpu.memory_space<vmem>>, vector<32x32xf32>,
    %c0_290 = arith.constant 0 : index
    %c0_291 = arith.constant 0 : index
    %368 = vector.load %arg6[%c0_290, %c0_291] : memref<32x42xf32, #tpu.memory_space<vmem>>, vector<32x32xf32>
    %cst_292 = arith.constant 0.00102838012 : f32
    %369 = vector.broadcast %cst_292 : f32 to vector<32x32xf32>
    %370 = arith.mulf %369, %368 : vector<32x32xf32>
    %c0_293 = arith.constant 0 : index
    %c1_294 = arith.constant 1 : index
    %371 = vector.load %arg6[%c0_293, %c1_294] : memref<32x42xf32, #tpu.memory_space<vmem>>, vector<32x32xf32>
    %cst_295 = arith.constant 0.00759875821 : f32
    %372 = vector.broadcast %cst_295 : f32 to vector<32x32xf32>
    %373 = arith.mulf %372, %371 : vector<32x32xf32>
    %374 = arith.addf %370, %373 : vector<32x32xf32>
    %c0_296 = arith.constant 0 : index
    %c2_297 = arith.constant 2 : index
    %375 = vector.load %arg6[%c0_296, %c2_297] : memref<32x42xf32, #tpu.memory_space<vmem>>, vector<32x32xf32>
    %cst_298 = arith.constant 0.0360007733 : f32
    %376 = vector.broadcast %cst_298 : f32 to vector<32x32xf32>
    %377 = arith.mulf %376, %375 : vector<32x32xf32>
    %378 = arith.addf %374, %377 : vector<32x32xf32>
    %c0_299 = arith.constant 0 : index
    %c3_300 = arith.constant 3 : index
    %379 = vector.load %arg6[%c0_299, %c3_300] : memref<32x42xf32, #tpu.memory_space<vmem>>, vector<32x32xf32>
    %cst_301 = arith.constant 0.109360687 : f32
    %380 = vector.broadcast %cst_301 : f32 to vector<32x32xf32>
    %381 = arith.mulf %380, %379 : vector<32x32xf32>
    %382 = arith.addf %378, %381 : vector<32x32xf32>
    %c0_302 = arith.constant 0 : index
    %c4_303 = arith.constant 4 : index
    %383 = vector.load %arg6[%c0_302, %c4_303] : memref<32x42xf32, #tpu.memory_space<vmem>>, vector<32x32xf32>
    %cst_304 = arith.constant 0.213005543 : f32
    %384 = vector.broadcast %cst_304 : f32 to vector<32x32xf32>
    %385 = arith.mulf %384, %383 : vector<32x32xf32>
    %386 = arith.addf %382, %385 : vector<32x32xf32>
    %c0_305 = arith.constant 0 : index
    %c5_306 = arith.constant 5 : index
    %387 = vector.load %arg6[%c0_305, %c5_306] : memref<32x42xf32, #tpu.memory_space<vmem>>, vector<32x32xf32>
    %cst_307 = arith.constant 0.266011715 : f32
    %388 = vector.broadcast %cst_307 : f32 to vector<32x32xf32>
    %389 = arith.mulf %388, %387 : vector<32x32xf32>
    %390 = arith.addf %386, %389 : vector<32x32xf32>
    %c0_308 = arith.constant 0 : index
    %c6_309 = arith.constant 6 : index
    %391 = vector.load %arg6[%c0_308, %c6_309] : memref<32x42xf32, #tpu.memory_space<vmem>>, vector<32x32xf32>
    %cst_310 = arith.constant 0.213005543 : f32
    %392 = vector.broadcast %cst_310 : f32 to vector<32x32xf32>
    %393 = arith.mulf %392, %391 : vector<32x32xf32>
    %394 = arith.addf %390, %393 : vector<32x32xf32>
    %c0_311 = arith.constant 0 : index
    %c7_312 = arith.constant 7 : index
    %395 = vector.load %arg6[%c0_311, %c7_312] : memref<32x42xf32, #tpu.memory_space<vmem>>, vector<32x32xf32>
    %cst_313 = arith.constant 0.109360687 : f32
    %396 = vector.broadcast %cst_313 : f32 to vector<32x32xf32>
    %397 = arith.mulf %396, %395 : vector<32x32xf32>
    %398 = arith.addf %394, %397 : vector<32x32xf32>
    %c0_314 = arith.constant 0 : index
    %c8_315 = arith.constant 8 : index
    %399 = vector.load %arg6[%c0_314, %c8_315] : memref<32x42xf32, #tpu.memory_space<vmem>>, vector<32x32xf32>
    %cst_316 = arith.constant 0.0360007733 : f32
    %400 = vector.broadcast %cst_316 : f32 to vector<32x32xf32>
    %401 = arith.mulf %400, %399 : vector<32x32xf32>
    %402 = arith.addf %398, %401 : vector<32x32xf32>
    %c0_317 = arith.constant 0 : index
    %c9_318 = arith.constant 9 : index
    %403 = vector.load %arg6[%c0_317, %c9_318] : memref<32x42xf32, #tpu.memory_space<vmem>>, vector<32x32xf32>
    %cst_319 = arith.constant 0.00759875821 : f32
    %404 = vector.broadcast %cst_319 : f32 to vector<32x32xf32>
    %405 = arith.mulf %404, %403 : vector<32x32xf32>
    %406 = arith.addf %402, %405 : vector<32x32xf32>
    %c0_320 = arith.constant 0 : index
    %c10_321 = arith.constant 10 : index
    %407 = vector.load %arg6[%c0_320, %c10_321] : memref<32x42xf32, #tpu.memory_space<vmem>>, vector<32x32xf32>
    %cst_322 = arith.constant 0.00102838012 : f32
    %408 = vector.broadcast %cst_322 : f32 to vector<32x32xf32>
    %409 = arith.mulf %408, %407 : vector<32x32xf32>
    %410 = arith.addf %406, %409 : vector<32x32xf32>
    %c5_323 = arith.constant 5 : index
    %c0_324 = arith.constant 0 : index
    %411 = vector.load %arg7[%c5_323, %c0_324] : memref<42x32xf32, #tpu.memory_space<vmem>>, vector<32x32xf32>
    tpu.vector_store %arg7[%c5_323, %c0_324], %410 {strides = array<i32>} : memref<42x32xf32, #tpu.memory_space<vmem>>, vector<32x32xf32>,
    %c0_325 = arith.constant 0 : index
    %c0_326 = arith.constant 0 : index
    %412 = vector.load %arg7[%c0_325, %c0_326] : memref<42x32xf32, #tpu.memory_space<vmem>>, vector<32x32xf32>
    %cst_327 = arith.constant 0.00102838012 : f32
    %413 = vector.broadcast %cst_327 : f32 to vector<32x32xf32>
    %414 = arith.mulf %413, %412 : vector<32x32xf32>
    %c1_328 = arith.constant 1 : index
    %c0_329 = arith.constant 0 : index
    %415 = vector.load %arg7[%c1_328, %c0_329] : memref<42x32xf32, #tpu.memory_space<vmem>>, vector<32x32xf32>
    %cst_330 = arith.constant 0.00759875821 : f32
    %416 = vector.broadcast %cst_330 : f32 to vector<32x32xf32>
    %417 = arith.mulf %416, %415 : vector<32x32xf32>
    %418 = arith.addf %414, %417 : vector<32x32xf32>
    %c2_331 = arith.constant 2 : index
    %c0_332 = arith.constant 0 : index
    %419 = vector.load %arg7[%c2_331, %c0_332] : memref<42x32xf32, #tpu.memory_space<vmem>>, vector<32x32xf32>
    %cst_333 = arith.constant 0.0360007733 : f32
    %420 = vector.broadcast %cst_333 : f32 to vector<32x32xf32>
    %421 = arith.mulf %420, %419 : vector<32x32xf32>
    %422 = arith.addf %418, %421 : vector<32x32xf32>
    %c3_334 = arith.constant 3 : index
    %c0_335 = arith.constant 0 : index
    %423 = vector.load %arg7[%c3_334, %c0_335] : memref<42x32xf32, #tpu.memory_space<vmem>>, vector<32x32xf32>
    %cst_336 = arith.constant 0.109360687 : f32
    %424 = vector.broadcast %cst_336 : f32 to vector<32x32xf32>
    %425 = arith.mulf %424, %423 : vector<32x32xf32>
    %426 = arith.addf %422, %425 : vector<32x32xf32>
    %c4_337 = arith.constant 4 : index
    %c0_338 = arith.constant 0 : index
    %427 = vector.load %arg7[%c4_337, %c0_338] : memref<42x32xf32, #tpu.memory_space<vmem>>, vector<32x32xf32>
    %cst_339 = arith.constant 0.213005543 : f32
    %428 = vector.broadcast %cst_339 : f32 to vector<32x32xf32>
    %429 = arith.mulf %428, %427 : vector<32x32xf32>
    %430 = arith.addf %426, %429 : vector<32x32xf32>
    %c5_340 = arith.constant 5 : index
    %c0_341 = arith.constant 0 : index
    %431 = vector.load %arg7[%c5_340, %c0_341] : memref<42x32xf32, #tpu.memory_space<vmem>>, vector<32x32xf32>
    %cst_342 = arith.constant 0.266011715 : f32
    %432 = vector.broadcast %cst_342 : f32 to vector<32x32xf32>
    %433 = arith.mulf %432, %431 : vector<32x32xf32>
    %434 = arith.addf %430, %433 : vector<32x32xf32>
    %c6_343 = arith.constant 6 : index
    %c0_344 = arith.constant 0 : index
    %435 = vector.load %arg7[%c6_343, %c0_344] : memref<42x32xf32, #tpu.memory_space<vmem>>, vector<32x32xf32>
    %cst_345 = arith.constant 0.213005543 : f32
    %436 = vector.broadcast %cst_345 : f32 to vector<32x32xf32>
    %437 = arith.mulf %436, %435 : vector<32x32xf32>
    %438 = arith.addf %434, %437 : vector<32x32xf32>
    %c7_346 = arith.constant 7 : index
    %c0_347 = arith.constant 0 : index
    %439 = vector.load %arg7[%c7_346, %c0_347] : memref<42x32xf32, #tpu.memory_space<vmem>>, vector<32x32xf32>
    %cst_348 = arith.constant 0.109360687 : f32
    %440 = vector.broadcast %cst_348 : f32 to vector<32x32xf32>
    %441 = arith.mulf %440, %439 : vector<32x32xf32>
    %442 = arith.addf %438, %441 : vector<32x32xf32>
    %c8_349 = arith.constant 8 : index
    %c0_350 = arith.constant 0 : index
    %443 = vector.load %arg7[%c8_349, %c0_350] : memref<42x32xf32, #tpu.memory_space<vmem>>, vector<32x32xf32>
    %cst_351 = arith.constant 0.0360007733 : f32
    %444 = vector.broadcast %cst_351 : f32 to vector<32x32xf32>
    %445 = arith.mulf %444, %443 : vector<32x32xf32>
    %446 = arith.addf %442, %445 : vector<32x32xf32>
    %c9_352 = arith.constant 9 : index
    %c0_353 = arith.constant 0 : index
    %447 = vector.load %arg7[%c9_352, %c0_353] : memref<42x32xf32, #tpu.memory_space<vmem>>, vector<32x32xf32>
    %cst_354 = arith.constant 0.00759875821 : f32
    %448 = vector.broadcast %cst_354 : f32 to vector<32x32xf32>
    %449 = arith.mulf %448, %447 : vector<32x32xf32>
    %450 = arith.addf %446, %449 : vector<32x32xf32>
    %c10_355 = arith.constant 10 : index
    %c0_356 = arith.constant 0 : index
    %451 = vector.load %arg7[%c10_355, %c0_356] : memref<42x32xf32, #tpu.memory_space<vmem>>, vector<32x32xf32>
    %cst_357 = arith.constant 0.00102838012 : f32
    %452 = vector.broadcast %cst_357 : f32 to vector<32x32xf32>
    %453 = arith.mulf %452, %451 : vector<32x32xf32>
    %454 = arith.addf %450, %453 : vector<32x32xf32>
    %455 = arith.mulf %99, %99 : vector<32x32xf32>
    %456 = arith.mulf %187, %187 : vector<32x32xf32>
    %457 = arith.mulf %99, %187 : vector<32x32xf32>
    %458 = arith.subf %276, %455 : vector<32x32xf32>
    %459 = arith.subf %365, %456 : vector<32x32xf32>
    %460 = arith.subf %454, %457 : vector<32x32xf32>
    %cst_358 = arith.constant 2.000000e+00 : f32
    %461 = vector.broadcast %cst_358 : f32 to vector<32x32xf32>
    %462 = arith.mulf %461, %457 : vector<32x32xf32>
    %cst_359 = arith.constant 9.99999974E-5 : f32
    %463 = vector.broadcast %cst_359 : f32 to vector<32x32xf32>
    %464 = arith.addf %462, %463 : vector<32x32xf32>
    %cst_360 = arith.constant 2.000000e+00 : f32
    %465 = vector.broadcast %cst_360 : f32 to vector<32x32xf32>
    %466 = arith.mulf %465, %460 : vector<32x32xf32>
    %cst_361 = arith.constant 8.99999984E-4 : f32
    %467 = vector.broadcast %cst_361 : f32 to vector<32x32xf32>
    %468 = arith.addf %466, %467 : vector<32x32xf32>
    %469 = arith.mulf %464, %468 : vector<32x32xf32>
    %470 = arith.addf %455, %456 : vector<32x32xf32>
    %cst_362 = arith.constant 9.99999974E-5 : f32
    %471 = vector.broadcast %cst_362 : f32 to vector<32x32xf32>
    %472 = arith.addf %470, %471 : vector<32x32xf32>
    %473 = arith.addf %458, %459 : vector<32x32xf32>
    %cst_363 = arith.constant 8.99999984E-4 : f32
    %474 = vector.broadcast %cst_363 : f32 to vector<32x32xf32>
    %475 = arith.addf %473, %474 : vector<32x32xf32>
    %476 = arith.mulf %472, %475 : vector<32x32xf32>
    %477 = tpu.reciprocal %476 {approx = true} : vector<32x32xf32> -> vector<32x32xf32>
    %478 = arith.mulf %469, %477 : vector<32x32xf32>
    %479 = vector.shape_cast %478 : vector<32x32xf32> to vector<1x32x32xf32>
    %cst_364 = arith.constant dense<0.000000e+00> : vector<1xf32>
    %480 = vector.multi_reduction <add>, %479, %cst_364 [1, 2] : vector<1x32x32xf32> to vector<1xf32>
    %481 = vector.shape_cast %480 : vector<1xf32> to vector<1x1x1xf32>
    %482 = vector.extract %481[0, 0, 0] : f32 from vector<1x1x1xf32>
    %483 = arith.subf %11, %9 : vector<32x32xf32>
    %484 = math.absf %483 : vector<32x32xf32>
    %485 = vector.shape_cast %484 : vector<32x32xf32> to vector<1x32x32xf32>
    %cst_365 = arith.constant dense<0.000000e+00> : vector<1xf32>
    %486 = vector.multi_reduction <add>, %485, %cst_365 [1, 2] : vector<1x32x32xf32> to vector<1xf32>
    %487 = vector.shape_cast %486 : vector<1xf32> to vector<1x1x1xf32>
    %488 = vector.extract %487[0, 0, 0] : f32 from vector<1x1x1xf32>
    %489 = vector.broadcast %482 : f32 to vector<1x8x128xf32>
    %c0_366 = arith.constant 0 : index
    %c0_367 = arith.constant 0 : index
    %c0_368 = arith.constant 0 : index
    %490 = vector.load %arg4[%c0_366, %c0_367, %c0_368] : memref<1x8x128xf32, #tpu.memory_space<vmem>>, vector<1x8x128xf32>
    tpu.vector_store %arg4[%c0_366, %c0_367, %c0_368], %489 {strides = array<i32>} : memref<1x8x128xf32, #tpu.memory_space<vmem>>, vector<1x8x128xf32>,
    %491 = vector.broadcast %488 : f32 to vector<1x8x128xf32>
    %c0_369 = arith.constant 0 : index
    %c0_370 = arith.constant 0 : index
    %c0_371 = arith.constant 0 : index
    %492 = vector.load %arg5[%c0_369, %c0_370, %c0_371] : memref<1x8x128xf32, #tpu.memory_space<vmem>>, vector<1x8x128xf32>
    tpu.vector_store %arg5[%c0_369, %c0_370, %c0_371], %491 {strides = array<i32>} : memref<1x8x128xf32, #tpu.memory_space<vmem>>, vector<1x8x128xf32>,
    return
  }
  func.func @transform_0(%arg0: i32) -> (i32, i32, i32, i32, i32) {
    %c0_i32 = arith.constant 0 : i32
    %c0_i32_0 = arith.constant 0 : i32
    %c0_i32_1 = arith.constant 0 : i32
    %c0_i32_2 = arith.constant 0 : i32
    %c0_i32_3 = arith.constant 0 : i32
    return %arg0, %c0_i32, %c0_i32_0, %c0_i32_1, %c0_i32_2 : i32, i32, i32, i32, i32
  }
  func.func @transform_1(%arg0: i32) -> (i32, i32, i32, i32) {
    %c0_i32 = arith.constant 0 : i32
    %c0_i32_0 = arith.constant 0 : i32
    %c0_i32_1 = arith.constant 0 : i32
    %c0_i32_2 = arith.constant 0 : i32
    return %arg0, %c0_i32, %c0_i32_0, %c0_i32_1 : i32, i32, i32, i32
  }
  func.func @transform_2(%arg0: i32) -> (i32, i32, i32, i32) {
    %c0_i32 = arith.constant 0 : i32
    %c0_i32_0 = arith.constant 0 : i32
    %c0_i32_1 = arith.constant 0 : i32
    %c0_i32_2 = arith.constant 0 : i32
    return %arg0, %c0_i32, %c0_i32_0, %c0_i32_1 : i32, i32, i32, i32
  }
  func.func @transform_3(%arg0: i32) -> (i32, i32, i32) {
    %c0_i32 = arith.constant 0 : i32
    %c0_i32_0 = arith.constant 0 : i32
    %c0_i32_1 = arith.constant 0 : i32
    return %arg0, %c0_i32, %c0_i32_0 : i32, i32, i32
  }
  func.func @transform_4(%arg0: i32) -> (i32, i32, i32) {
    %c0_i32 = arith.constant 0 : i32
    %c0_i32_0 = arith.constant 0 : i32
    %c0_i32_1 = arith.constant 0 : i32
    return %arg0, %c0_i32, %c0_i32_0 : i32, i32, i32
  }
}

</mosaic_0001>

<llo_original>
// kernel: tpu_custom_call.1
$region0: #{tpu_custom_call.1}
  #allocation0 [shape = 'u32[]', space=smem, size = 0x4, offset = 0x4, fixed_abs, tag = 'smem constant byte address 0x4 - core index']
  #allocation1 [shape = 'u32[144,128]{1,0:T(1,128)}', space=vmem, size = 0x12000, scoped, tag = 'internal scratch']
  #allocation2 [shape = 'f32[32,42]{1,0:T(8,128)}', space=vmem, size = 0x4000, scoped, tag = 'scratch operand']
  #allocation3 [shape = 'f32[42,32]{1,0:T(8,128)}', space=vmem, size = 0x6000, scoped, tag = 'scratch operand']
  %s0 = inlined_call_operand.hbm [shape: f32[2,3,1,32,32], index: 0, kind: input, shape index: {}]
  %s1 = inlined_call_operand.hbm [shape: f32[2,1,32,32], index: 1, kind: input, shape index: {}]
  %s2 = inlined_call_operand.hbm [shape: f32[2,1,32,32], index: 2, kind: input, shape index: {}]
  %s3 = inlined_call_operand.hbm [shape: f32[2,8,128], index: 3, kind: output, shape index: {0}]
  %s4 = inlined_call_operand.hbm [shape: f32[2,8,128], index: 4, kind: output, shape index: {1}]
  %5 = xla_tuple %s3, %s4
  %s6 = sld [smem:[#allocation0]]
  $region65: #{tpu_custom_call.1} parent=0
    _
  %s8 = ssub.s32 1, %s6
  %s9 = scalar_select 0, %s8, %s6
  $region1: #{tpu_custom_call.1} parent=0
    #allocation4 [shape = 'u8[32768]{0}', space=vmem, size = 0x8000, scoped, tag = 'input window, operand 0']
    #allocation5 [shape = 's32[2]{0}', space=sflag, size = 0x8, scoped, tag = 'scoped memory for tpu_custom_call.1']
    #allocation6 [shape = 's32[2]{0}', space=sflag, size = 0x8, scoped, tag = 'scoped memory for tpu_custom_call.1']
    #allocation7 [shape = 'u8[32768]{0}', space=vmem, size = 0x8000, scoped, tag = 'input window, operand 1']
    #allocation8 [shape = 's32[2]{0}', space=sflag, size = 0x8, scoped, tag = 'scoped memory for tpu_custom_call.1']
    #allocation9 [shape = 'u8[32768]{0}', space=vmem, size = 0x8000, scoped, tag = 'input window, operand 2']
    #allocation10 [shape = 'u8[8192]{0}', space=vmem, size = 0x2000, scoped, tag = 'output window, operand 0']
    #allocation11 [shape = 'u8[8192]{0}', space=vmem, size = 0x2000, scoped, tag = 'output window, operand 1']
    #allocation12 [shape = 's32[2]{0}', space=sflag, size = 0x8, scoped, tag = 'scoped memory for tpu_custom_call.1']
    %10 = vsyncpa [#allocation5], 0
    %s11 = scalar_lea.sflag [#allocation5], 1
    %12 = vsyncpa %s11, 0
    %13 = vsyncpa [#allocation8], 0
    %s14 = scalar_lea.sflag [#allocation8], 1
    %15 = vsyncpa %s14, 0
    %16 = vsyncpa [#allocation6], 0
    %s17 = scalar_lea.sflag [#allocation6], 1
    %18 = vsyncpa %s17, 0
    %19 = vsyncpa [#allocation12], 0
    %s20 = scalar_lea.sflag [#allocation12], 1
    %21 = vsyncpa %s20, 0
    loop: start=0, step=1, limit=4
    $region2: #{tpu_custom_call.1} parent=1 // loop_pre_header
      _
    $region3: #{tpu_custom_call.1} parent=1 // loop_header
      %s23 = sphi 0, %s27
      %p24 = scmp.ge.s32.totalorder %s23, 4
      %s33 = sphi 0, %s35
      %s36 = sphi 0, %s33
      %s37 = sphi 0, %s36
      %s53 = sphi 0, %s37
      %s59 = sphi 0, %s61
      %s62 = sphi 0, %s59
      %s63 = sphi 0, %s62
      %s79 = sphi 0, %s63
      %s85 = sphi 0, %s87
      %s88 = sphi 0, %s85
      %s89 = sphi 0, %s88
      %s105 = sphi 0, %s89
      %s111 = sphi 0, %s113
      %s114 = sphi 0, %s111
      %s115 = sphi 0, %s114
      %s131 = sphi 0, %s115
      %s137 = sphi 0, %s139
      %s140 = sphi 0, %s137
      %s141 = sphi 0, %s140
      %s157 = sphi 0, %s141
    $region4: #{tpu_custom_call.1} parent=1 // loop_header_branch
      %26 = sbr.rel (%p24) target = $region8
    $region5: #{tpu_custom_call.1} parent=1 // loop_body
      %s28 = ssub.s32 %s23, 1
      %s29 = ssub.s32 %s23, 2
      %s30 = sadd.s32 %s23, 1
      %s31 = ssub.s32 %s23, %s30
      %p32 = scmp.eq.s32.totalorder %s31, 0
      %s34 = sadd.s32 %s33, 1
      %s35 = scalar_select %p32, %s33, %s34
      %p38 = pneg %p32
      %p39 = scmp.eq.s32.totalorder %s23, 1
      %p40 = por %p38, %p39
      %p41 = scmp.ne.s32.totalorder %s33, %s36
      %p42 = scmp.eq.s32.totalorder %s23, 0
      %p43 = por %p41, %p42
      %p44 = scmp.ne.s32.totalorder %s33, %s36
      %p45 = scmp.eq.s32.totalorder %s28, 1
      %p46 = por %p44, %p45
      %p47 = scmp.ne.s32.totalorder %s36, %s37
      %p48 = scmp.eq.s32.totalorder %s28, 0
      %p49 = por %p47, %p48
      %p50 = scmp.ne.s32.totalorder %s36, %s37
      %p51 = scmp.eq.s32.totalorder %s29, 1
      %p52 = por %p50, %p51
      %p54 = scmp.ne.s32.totalorder %s37, %s53
      %p55 = scmp.eq.s32.totalorder %s29, 0
      %p56 = por %p54, %p55
      %s57 = ssub.s32 %s23, %s30
      %p58 = scmp.eq.s32.totalorder %s57, 0
      %s60 = sadd.s32 %s59, 1
      %s61 = scalar_select %p58, %s59, %s60
      %p64 = pneg %p58
      %p65 = scmp.eq.s32.totalorder %s23, 1
      %p66 = por %p64, %p65
      %p67 = scmp.ne.s32.totalorder %s59, %s62
      %p68 = scmp.eq.s32.totalorder %s23, 0
      %p69 = por %p67, %p68
      %p70 = scmp.ne.s32.totalorder %s59, %s62
      %p71 = scmp.eq.s32.totalorder %s28, 1
      %p72 = por %p70, %p71
      %p73 = scmp.ne.s32.totalorder %s62, %s63
      %p74 = scmp.eq.s32.totalorder %s28, 0
      %p75 = por %p73, %p74
      %p76 = scmp.ne.s32.totalorder %s62, %s63
      %p77 = scmp.eq.s32.totalorder %s29, 1
      %p78 = por %p76, %p77
      %p80 = scmp.ne.s32.totalorder %s63, %s79
      %p81 = scmp.eq.s32.totalorder %s29, 0
      %p82 = por %p80, %p81
      %s83 = ssub.s32 %s23, %s30
      %p84 = scmp.eq.s32.totalorder %s83, 0
      %s86 = sadd.s32 %s85, 1
      %s87 = scalar_select %p84, %s85, %s86
      %p90 = pneg %p84
      %p91 = scmp.eq.s32.totalorder %s23, 1
      %p92 = por %p90, %p91
      %p93 = scmp.ne.s32.totalorder %s85, %s88
      %p94 = scmp.eq.s32.totalorder %s23, 0
      %p95 = por %p93, %p94
      %p96 = scmp.ne.s32.totalorder %s85, %s88
      %p97 = scmp.eq.s32.totalorder %s28, 1
      %p98 = por %p96, %p97
      %p99 = scmp.ne.s32.totalorder %s88, %s89
      %p100 = scmp.eq.s32.totalorder %s28, 0
      %p101 = por %p99, %p100
      %p102 = scmp.ne.s32.totalorder %s88, %s89
      %p103 = scmp.eq.s32.totalorder %s29, 1
      %p104 = por %p102, %p103
      %p106 = scmp.ne.s32.totalorder %s89, %s105
      %p107 = scmp.eq.s32.totalorder %s29, 0
      %p108 = por %p106, %p107
      %s109 = ssub.s32 %s23, %s30
      %p110 = scmp.eq.s32.totalorder %s109, 0
      %s112 = sadd.s32 %s111, 1
      %s113 = scalar_select %p110, %s111, %s112
      %p116 = pneg %p110
      %p117 = scmp.eq.s32.totalorder %s23, 1
      %p118 = por %p116, %p117
      %p119 = scmp.ne.s32.totalorder %s111, %s114
      %p120 = scmp.eq.s32.totalorder %s23, 0
      %p121 = por %p119, %p120
      %p122 = scmp.ne.s32.totalorder %s111, %s114
      %p123 = scmp.eq.s32.totalorder %s28, 1
      %p124 = por %p122, %p123
      %p125 = scmp.ne.s32.totalorder %s114, %s115
      %p126 = scmp.eq.s32.totalorder %s28, 0
      %p127 = por %p125, %p126
      %p128 = scmp.ne.s32.totalorder %s114, %s115
      %p129 = scmp.eq.s32.totalorder %s29, 1
      %p130 = por %p128, %p129
      %p132 = scmp.ne.s32.totalorder %s115, %s131
      %p133 = scmp.eq.s32.totalorder %s29, 0
      %p134 = por %p132, %p133
      %s135 = ssub.s32 %s23, %s30
      %p136 = scmp.eq.s32.totalorder %s135, 0
      %s138 = sadd.s32 %s137, 1
      %s139 = scalar_select %p136, %s137, %s138
      %p142 = pneg %p136
      %p143 = scmp.eq.s32.totalorder %s23, 1
      %p144 = por %p142, %p143
      %p145 = scmp.ne.s32.totalorder %s137, %s140
      %p146 = scmp.eq.s32.totalorder %s23, 0
      %p147 = por %p145, %p146
      %p148 = scmp.ne.s32.totalorder %s137, %s140
      %p149 = scmp.eq.s32.totalorder %s28, 1
      %p150 = por %p148, %p149
      %p151 = scmp.ne.s32.totalorder %s140, %s141
      %p152 = scmp.eq.s32.totalorder %s28, 0
      %p153 = por %p151, %p152
      %p154 = scmp.ne.s32.totalorder %s140, %s141
      %p155 = scmp.eq.s32.totalorder %s29, 1
      %p156 = por %p154, %p155
      %p158 = scmp.ne.s32.totalorder %s141, %s157
      %p159 = scmp.eq.s32.totalorder %s29, 0
      %p160 = por %p158, %p159
      %p161 = scmp.le.s32.totalorder 1, %s23
      %p162 = scmp.lt.s32.totalorder %s23, 3
      %p163 = pnand %p161, %p162
      %p164 = pneg %p163
      // Predicated region
      $region9: #{tpu_custom_call.1} parent=5 // pred_check
        _
      $region10: #{tpu_custom_call.1} parent=5 // pred_check_branch
        %166 = sbr.rel (%p163) target = $region12
      $region11: #{tpu_custom_call.1} parent=5 // pred_region
        %s167 = ssub.s32 %s23, 1
      $region12: #{tpu_custom_call.1} parent=5 // pred_fallthru
        _
      %p168 = scmp.lt.s32.totalorder %s23, 2
      // Predicated region
      $region13: #{tpu_custom_call.1} parent=5 // pred_check
        %p169 = pneg %p168
      $region14: #{tpu_custom_call.1} parent=5 // pred_check_branch
        %171 = sbr.rel (%p169) target = $region16
      $region15: #{tpu_custom_call.1} parent=5 // pred_region
        // Predicated region
        $region17: #{tpu_custom_call.1} parent=15 // pred_check
          %p172 = pneg %p43
        $region18: #{tpu_custom_call.1} parent=15 // pred_check_branch
          %174 = sbr.rel (%p172) target = $region20
        $region19: #{tpu_custom_call.1} parent=15 // pred_region
          %s175 = sand.u32 %s33, 1
          %s176 = scalar_lea.sflag [#allocation5], %s175
          %s177 = sand.u32 %s33, 1
          %s178 = smul.addr %s177, 32
          %s179 = scalar_lea.vmem [#allocation4], %s178
          %s181 = ssub.s32 512, 512
          %182 = vsyncadd %s176, %s181
          %s183 = smul.addr %s23, 12
          %s184 = smul.addr %s183, 128
          %s185 = scalar_lea.hbm %s0, %s184
          %s186 = sshll.u32 %s179, 4
          %s187 = int_to_ptr.vmem [resolvable:$true] %s186
          %192 = dma.hbm_to_vmem [thread:$0]  %s185, 512, %s187, %s176, 128, 128, 8
        $region20: #{tpu_custom_call.1} parent=15 // pred_fallthru
          _
        // Predicated region
        $region21: #{tpu_custom_call.1} parent=15 // pred_check
          %p193 = pneg %p69
        $region22: #{tpu_custom_call.1} parent=15 // pred_check_branch
          %195 = sbr.rel (%p193) target = $region24
        $region23: #{tpu_custom_call.1} parent=15 // pred_region
          %s196 = sand.u32 %s23, 1
          %s197 = scalar_lea.sflag [#allocation8], %s196
          %s198 = sand.u32 %s59, 1
          %s199 = smul.addr %s198, 32
          %s200 = scalar_lea.vmem [#allocation7], %s199
          %s202 = ssub.s32 512, 512
          %203 = vsyncadd %s197, %s202
          %s204 = smul.addr %s23, 4
          %s205 = smul.addr %s204, 128
          %s206 = scalar_lea.hbm %s1, %s205
          %s207 = sshll.u32 %s200, 4
          %s208 = int_to_ptr.vmem [resolvable:$true] %s207
          %213 = dma.hbm_to_vmem [thread:$0]  %s206, 512, %s208, %s197, 128, 128, 8
        $region24: #{tpu_custom_call.1} parent=15 // pred_fallthru
          _
        // Predicated region
        $region25: #{tpu_custom_call.1} parent=15 // pred_check
          %p214 = pneg %p95
        $region26: #{tpu_custom_call.1} parent=15 // pred_check_branch
          %216 = sbr.rel (%p214) target = $region28
        $region27: #{tpu_custom_call.1} parent=15 // pred_region
          %s217 = sand.u32 %s23, 1
          %s218 = scalar_lea.sflag [#allocation8], %s217
          %s219 = sand.u32 %s85, 1
          %s220 = smul.addr %s219, 32
          %s221 = scalar_lea.vmem [#allocation9], %s220
          %s223 = ssub.s32 512, 512
          %224 = vsyncadd %s218, %s223
          %s225 = smul.addr %s23, 4
          %s226 = smul.addr %s225, 128
          %s227 = scalar_lea.hbm %s2, %s226
          %s228 = sshll.u32 %s221, 4
          %s229 = int_to_ptr.vmem [resolvable:$true] %s228
          %234 = dma.hbm_to_vmem [thread:$0]  %s227, 512, %s229, %s218, 128, 128, 8
        $region28: #{tpu_custom_call.1} parent=15 // pred_fallthru
          _
      $region16: #{tpu_custom_call.1} parent=5 // pred_fallthru
        _
      %p235 = scmp.le.s32.totalorder 1, %s23
      %p236 = scmp.lt.s32.totalorder %s23, 3
      %p237 = pnand %p235, %p236
      %p238 = pneg %p237
      // Predicated region
      $region29: #{tpu_custom_call.1} parent=5 // pred_check
        _
      $region30: #{tpu_custom_call.1} parent=5 // pred_check_branch
        %240 = sbr.rel (%p237) target = $region32
      $region31: #{tpu_custom_call.1} parent=5 // pred_region
        %s241 = ssub.s32 %s23, 1
        %s242 = sand.u32 %s36, 1
        %s243 = scalar_lea.sflag [#allocation5], %s242
        %s244 = sand.u32 %s36, 1
        %s245 = smul.addr %s244, 32
        %s246 = scalar_lea.vmem [#allocation4], %s245
        // Predicated region
        $region33: #{tpu_custom_call.1} parent=31 // pred_check
          %p247 = pneg %p49
        $region34: #{tpu_custom_call.1} parent=31 // pred_check_branch
          %249 = sbr.rel (%p247) target = $region36
        $region35: #{tpu_custom_call.1} parent=31 // pred_region
          %250 = dma.done %s243, 512
        $region36: #{tpu_custom_call.1} parent=31 // pred_fallthru
          _
        %s251 = sand.u32 %s28, 1
        %s252 = scalar_lea.sflag [#allocation8], %s251
        %s253 = sand.u32 %s62, 1
        %s254 = smul.addr %s253, 32
        %s255 = scalar_lea.vmem [#allocation7], %s254
        // Predicated region
        $region37: #{tpu_custom_call.1} parent=31 // pred_check
          %p256 = pneg %p75
        $region38: #{tpu_custom_call.1} parent=31 // pred_check_branch
          %258 = sbr.rel (%p256) target = $region40
        $region39: #{tpu_custom_call.1} parent=31 // pred_region
          %259 = dma.done %s252, 512
        $region40: #{tpu_custom_call.1} parent=31 // pred_fallthru
          _
        %s260 = sand.u32 %s28, 1
        %s261 = scalar_lea.sflag [#allocation8], %s260
        %s262 = sand.u32 %s88, 1
        %s263 = smul.addr %s262, 32
        %s264 = scalar_lea.vmem [#allocation9], %s263
        // Predicated region
        $region41: #{tpu_custom_call.1} parent=31 // pred_check
          %p265 = pneg %p101
        $region42: #{tpu_custom_call.1} parent=31 // pred_check_branch
          %267 = sbr.rel (%p265) target = $region44
        $region43: #{tpu_custom_call.1} parent=31 // pred_region
          %268 = dma.done %s261, 512
        $region44: #{tpu_custom_call.1} parent=31 // pred_fallthru
          _
        %s269 = sand.u32 %s36, 1
        %s270 = scalar_lea.sflag [#allocation5], %s269
        %s271 = sand.u32 %s36, 1
        %s272 = smul.addr %s271, 32
        %s273 = scalar_lea.vmem [#allocation4], %s272
        %p274 = pneg %p49
        %p275 = pneg %p46
        %s276 = sand.u32 %s28, 1
        %s277 = scalar_lea.sflag [#allocation8], %s276
        %s278 = sand.u32 %s62, 1
        %s279 = smul.addr %s278, 32
        %s280 = scalar_lea.vmem [#allocation7], %s279
        %p281 = pneg %p75
        %p282 = pneg %p72
        %s283 = sand.u32 %s28, 1
        %s284 = scalar_lea.sflag [#allocation8], %s283
        %s285 = sand.u32 %s88, 1
        %s286 = smul.addr %s285, 32
        %s287 = scalar_lea.vmem [#allocation9], %s286
        %p288 = pneg %p101
        %p289 = pneg %p98
        %p290 = pneg %p127
        %p291 = pneg %p124
        %s292 = sand.u32 %s114, 1
        %s293 = scalar_lea.sflag [#allocation6], %s292
        %s294 = sand.u32 %s114, 1
        %s295 = smul.addr %s294, 8
        %s296 = scalar_lea.vmem [#allocation10], %s295
        %p297 = pneg %p153
        %p298 = pneg %p150
        %s299 = sand.u32 %s140, 1
        %s300 = scalar_lea.sflag [#allocation12], %s299
        %s301 = sand.u32 %s140, 1
        %s302 = smul.addr %s301, 8
        %s303 = scalar_lea.vmem [#allocation11], %s302
        %vm304 = vcmask 343040
        %305 = vst.msk [vmem:[#allocation2] sm:$0xff] %vm304, 0.0
        %306 = vst.msk [vmem:[#allocation2 + $0x8] sm:$0xff] %vm304, 0.0
        %307 = vst.msk [vmem:[#allocation2 + $0x10] sm:$0xff] %vm304, 0.0
        %308 = vst.msk [vmem:[#allocation2 + $0x18] sm:$0xff] %vm304, 0.0
        %vm309 = vcmask 261120
        %310 = vst.msk [vmem:[#allocation3] sm:$0xff] %vm309, 0.0
        %311 = vst.msk [vmem:[#allocation3 + $0x8] sm:$0xff] %vm309, 0.0
        %312 = vst.msk [vmem:[#allocation3 + $0x10] sm:$0xff] %vm309, 0.0
        %313 = vst.msk [vmem:[#allocation3 + $0x18] sm:$0xff] %vm309, 0.0
        %314 = vst.msk [vmem:[#allocation3 + $0x20] sm:$0xff] %vm309, 0.0
        %vm315 = vcmask 254976
        %316 = vst.msk [vmem:[#allocation3 + $0x28] sm:$0x3] %vm315, 0.0
        %v317 = vld [vmem:[%s246] sm:$0xff]
        %v318 = vld [vmem:[%s246 + $0x8] sm:$0xff]
        %v319 = vld [vmem:[%s246 + $0x10] sm:$0xff]
        %v320 = vld [vmem:[%s246 + $0x18] sm:$0xff]
        %v321 = vmul.f32 %v317, 255.0
        %v322 = vmul.f32 %v318, 255.0
        %v323 = vmul.f32 %v319, 255.0
        %v324 = vmul.f32 %v320, 255.0
        %v325 = vld [vmem:[%s255] sm:$0xff]
        %v326 = vld [vmem:[%s255 + $0x8] sm:$0xff]
        %v327 = vld [vmem:[%s255 + $0x10] sm:$0xff]
        %v328 = vld [vmem:[%s255 + $0x18] sm:$0xff]
        %v329 = vld [vmem:[%s264] sm:$0xff]
        %v330 = vld [vmem:[%s264 + $0x8] sm:$0xff]
        %v331 = vld [vmem:[%s264 + $0x10] sm:$0xff]
        %v332 = vld [vmem:[%s264 + $0x18] sm:$0xff]
        %337 = vrot.lane.b32.xlu0 %v321, 5
        %v338 = vpop.permute.xlu0 %337
        %339 = vrot.lane.b32.xlu0 %v322, 5
        %v340 = vpop.permute.xlu0 %339
        %341 = vrot.lane.b32.xlu0 %v323, 5
        %v342 = vpop.permute.xlu0 %341
        %343 = vrot.lane.b32.xlu0 %v324, 5
        %v344 = vpop.permute.xlu0 %343
        %vm349 = vcmask 302120
        %350 = vst.msk [vmem:[#allocation2] sm:$0xff] %vm349, %v338
        %351 = vst.msk [vmem:[#allocation2 + $0x8] sm:$0xff] %vm349, %v340
        %352 = vst.msk [vmem:[#allocation2 + $0x10] sm:$0xff] %vm349, %v342
        %353 = vst.msk [vmem:[#allocation2 + $0x18] sm:$0xff] %vm349, %v344
        %v354 = vld [vmem:[#allocation2] sm:$0xff]
        %v355 = vld [vmem:[#allocation2 + $0x8] sm:$0xff]
        %v356 = vld [vmem:[#allocation2 + $0x10] sm:$0xff]
        %v357 = vld [vmem:[#allocation2 + $0x18] sm:$0xff]
        %v358 = vmul.f32 %v354, 0.0010283801
        %v359 = vmul.f32 %v355, 0.0010283801
        %v360 = vmul.f32 %v356, 0.0010283801
        %v361 = vmul.f32 %v357, 0.0010283801
        %v362 = vmul.f32 %v354, 0.007598758
        %v363 = vmul.f32 %v355, 0.007598758
        %v364 = vmul.f32 %v356, 0.007598758
        %v365 = vmul.f32 %v357, 0.007598758
        %370 = vrot.lane.b32.xlu0 %v362, 127
        %v371 = vpop.permute.xlu0 %370
        %372 = vrot.lane.b32.xlu0 %v363, 127
        %v373 = vpop.permute.xlu0 %372
        %374 = vrot.lane.b32.xlu0 %v364, 127
        %v375 = vpop.permute.xlu0 %374
        %376 = vrot.lane.b32.xlu0 %v365, 127
        %v377 = vpop.permute.xlu0 %376
        %v382 = vadd.f32 %v358, %v371
        %v383 = vadd.f32 %v359, %v373
        %v384 = vadd.f32 %v360, %v375
        %v385 = vadd.f32 %v361, %v377
        %v386 = vmul.f32 %v354, 0.036000773
        %v387 = vmul.f32 %v355, 0.036000773
        %v388 = vmul.f32 %v356, 0.036000773
        %v389 = vmul.f32 %v357, 0.036000773
        %394 = vrot.lane.b32.xlu0 %v386, 126
        %v395 = vpop.permute.xlu0 %394
        %396 = vrot.lane.b32.xlu0 %v387, 126
        %v397 = vpop.permute.xlu0 %396
        %398 = vrot.lane.b32.xlu0 %v388, 126
        %v399 = vpop.permute.xlu0 %398
        %400 = vrot.lane.b32.xlu0 %v389, 126
        %v401 = vpop.permute.xlu0 %400
        %v406 = vadd.f32 %v382, %v395
        %v407 = vadd.f32 %v383, %v397
        %v408 = vadd.f32 %v384, %v399
        %v409 = vadd.f32 %v385, %v401
        %v410 = vmul.f32 %v354, 0.10936069
        %v411 = vmul.f32 %v355, 0.10936069
        %v412 = vmul.f32 %v356, 0.10936069
        %v413 = vmul.f32 %v357, 0.10936069
        %418 = vrot.lane.b32.xlu0 %v410, 125
        %v419 = vpop.permute.xlu0 %418
        %420 = vrot.lane.b32.xlu0 %v411, 125
        %v421 = vpop.permute.xlu0 %420
        %422 = vrot.lane.b32.xlu0 %v412, 125
        %v423 = vpop.permute.xlu0 %422
        %424 = vrot.lane.b32.xlu0 %v413, 125
        %v425 = vpop.permute.xlu0 %424
        %v430 = vadd.f32 %v406, %v419
        %v431 = vadd.f32 %v407, %v421
        %v432 = vadd.f32 %v408, %v423
        %v433 = vadd.f32 %v409, %v425
        %v434 = vmul.f32 %v354, 0.21300554
        %v435 = vmul.f32 %v355, 0.21300554
        %v436 = vmul.f32 %v356, 0.21300554
        %v437 = vmul.f32 %v357, 0.21300554
        %442 = vrot.lane.b32.xlu0 %v434, 124
        %v443 = vpop.permute.xlu0 %442
        %444 = vrot.lane.b32.xlu0 %v435, 124
        %v445 = vpop.permute.xlu0 %444
        %446 = vrot.lane.b32.xlu0 %v436, 124
        %v447 = vpop.permute.xlu0 %446
        %448 = vrot.lane.b32.xlu0 %v437, 124
        %v449 = vpop.permute.xlu0 %448
        %v454 = vadd.f32 %v430, %v443
        %v455 = vadd.f32 %v431, %v445
        %v456 = vadd.f32 %v432, %v447
        %v457 = vadd.f32 %v433, %v449
        %v458 = vmul.f32 %v354, 0.26601171
        %v459 = vmul.f32 %v355, 0.26601171
        %v460 = vmul.f32 %v356, 0.26601171
        %v461 = vmul.f32 %v357, 0.26601171
        %466 = vrot.lane.b32.xlu0 %v458, 123
        %v467 = vpop.permute.xlu0 %466
        %468 = vrot.lane.b32.xlu0 %v459, 123
        %v469 = vpop.permute.xlu0 %468
        %470 = vrot.lane.b32.xlu0 %v460, 123
        %v471 = vpop.permute.xlu0 %470
        %472 = vrot.lane.b32.xlu0 %v461, 123
        %v473 = vpop.permute.xlu0 %472
        %v478 = vadd.f32 %v454, %v467
        %v479 = vadd.f32 %v455, %v469
        %v480 = vadd.f32 %v456, %v471
        %v481 = vadd.f32 %v457, %v473
        %482 = vrot.lane.b32.xlu0 %v434, 122
        %v483 = vpop.permute.xlu0 %482
        %484 = vrot.lane.b32.xlu0 %v435, 122
        %v485 = vpop.permute.xlu0 %484
        %486 = vrot.lane.b32.xlu0 %v436, 122
        %v487 = vpop.permute.xlu0 %486
        %488 = vrot.lane.b32.xlu0 %v437, 122
        %v489 = vpop.permute.xlu0 %488
        %v494 = vadd.f32 %v478, %v483
        %v495 = vadd.f32 %v479, %v485
        %v496 = vadd.f32 %v480, %v487
        %v497 = vadd.f32 %v481, %v489
        %498 = vrot.lane.b32.xlu0 %v410, 121
        %v499 = vpop.permute.xlu0 %498
        %500 = vrot.lane.b32.xlu0 %v411, 121
        %v501 = vpop.permute.xlu0 %500
        %502 = vrot.lane.b32.xlu0 %v412, 121
        %v503 = vpop.permute.xlu0 %502
        %504 = vrot.lane.b32.xlu0 %v413, 121
        %v505 = vpop.permute.xlu0 %504
        %v510 = vadd.f32 %v494, %v499
        %v511 = vadd.f32 %v495, %v501
        %v512 = vadd.f32 %v496, %v503
        %v513 = vadd.f32 %v497, %v505
        %514 = vrot.lane.b32.xlu0 %v386, 120
        %v515 = vpop.permute.xlu0 %514
        %516 = vrot.lane.b32.xlu0 %v387, 120
        %v517 = vpop.permute.xlu0 %516
        %518 = vrot.lane.b32.xlu0 %v388, 120
        %v519 = vpop.permute.xlu0 %518
        %520 = vrot.lane.b32.xlu0 %v389, 120
        %v521 = vpop.permute.xlu0 %520
        %v526 = vadd.f32 %v510, %v515
        %v527 = vadd.f32 %v511, %v517
        %v528 = vadd.f32 %v512, %v519
        %v529 = vadd.f32 %v513, %v521
        %530 = vrot.lane.b32.xlu0 %v362, 119
        %v531 = vpop.permute.xlu0 %530
        %532 = vrot.lane.b32.xlu0 %v363, 119
        %v533 = vpop.permute.xlu0 %532
        %534 = vrot.lane.b32.xlu0 %v364, 119
        %v535 = vpop.permute.xlu0 %534
        %536 = vrot.lane.b32.xlu0 %v365, 119
        %v537 = vpop.permute.xlu0 %536
        %v542 = vadd.f32 %v526, %v531
        %v543 = vadd.f32 %v527, %v533
        %v544 = vadd.f32 %v528, %v535
        %v545 = vadd.f32 %v529, %v537
        %550 = vrot.lane.b32.xlu0 %v358, 118
        %v551 = vpop.permute.xlu0 %550
        %552 = vrot.lane.b32.xlu0 %v359, 118
        %v553 = vpop.permute.xlu0 %552
        %554 = vrot.lane.b32.xlu0 %v360, 118
        %v555 = vpop.permute.xlu0 %554
        %556 = vrot.lane.b32.xlu0 %v361, 118
        %v557 = vpop.permute.xlu0 %556
        %v562 = vadd.f32 %v542, %v551
        %v563 = vadd.f32 %v543, %v553
        %v564 = vadd.f32 %v544, %v555
        %v565 = vadd.f32 %v545, %v557
        %566 = vst.msk [vmem:[#allocation3 + $0x5] sm:$0xff] %vm309, %v562
        %567 = vst.msk [vmem:[#allocation3 + $0xd] sm:$0xff] %vm309, %v563
        %568 = vst.msk [vmem:[#allocation3 + $0x15] sm:$0xff] %vm309, %v564
        %569 = vst.msk [vmem:[#allocation3 + $0x1d] sm:$0xff] %vm309, %v565
        %v570 = vld [vmem:[#allocation3] sm:$0xff]
        %v571 = vld [vmem:[#allocation3 + $0x8] sm:$0xff]
        %v572 = vld [vmem:[#allocation3 + $0x10] sm:$0xff]
        %v573 = vld [vmem:[#allocation3 + $0x18] sm:$0xff]
        %v574 = vmul.f32 %v570, 0.0010283801
        %v575 = vmul.f32 %v571, 0.0010283801
        %v576 = vmul.f32 %v572, 0.0010283801
        %v577 = vmul.f32 %v573, 0.0010283801
        %v578 = vld [vmem:[#allocation3 + $0x1] sm:$0xff]
        %v579 = vld [vmem:[#allocation3 + $0x9] sm:$0xff]
        %v580 = vld [vmem:[#allocation3 + $0x11] sm:$0xff]
        %v581 = vld [vmem:[#allocation3 + $0x19] sm:$0xff]
        %v582 = vmul.f32 %v578, 0.007598758
        %v583 = vmul.f32 %v579, 0.007598758
        %v584 = vmul.f32 %v580, 0.007598758
        %v585 = vmul.f32 %v581, 0.007598758
        %v586 = vadd.f32 %v574, %v582
        %v587 = vadd.f32 %v575, %v583
        %v588 = vadd.f32 %v576, %v584
        %v589 = vadd.f32 %v577, %v585
        %v590 = vld [vmem:[#allocation3 + $0x2] sm:$0xff]
        %v591 = vld [vmem:[#allocation3 + $0xa] sm:$0xff]
        %v592 = vld [vmem:[#allocation3 + $0x12] sm:$0xff]
        %v593 = vld [vmem:[#allocation3 + $0x1a] sm:$0xff]
        %v594 = vmul.f32 %v590, 0.036000773
        %v595 = vmul.f32 %v591, 0.036000773
        %v596 = vmul.f32 %v592, 0.036000773
        %v597 = vmul.f32 %v593, 0.036000773
        %v598 = vadd.f32 %v586, %v594
        %v599 = vadd.f32 %v587, %v595
        %v600 = vadd.f32 %v588, %v596
        %v601 = vadd.f32 %v589, %v597
        %v602 = vld [vmem:[#allocation3 + $0x3] sm:$0xff]
        %v603 = vld [vmem:[#allocation3 + $0xb] sm:$0xff]
        %v604 = vld [vmem:[#allocation3 + $0x13] sm:$0xff]
        %v605 = vld [vmem:[#allocation3 + $0x1b] sm:$0xff]
        %v606 = vmul.f32 %v602, 0.10936069
        %v607 = vmul.f32 %v603, 0.10936069
        %v608 = vmul.f32 %v604, 0.10936069
        %v609 = vmul.f32 %v605, 0.10936069
        %v610 = vadd.f32 %v598, %v606
        %v611 = vadd.f32 %v599, %v607
        %v612 = vadd.f32 %v600, %v608
        %v613 = vadd.f32 %v601, %v609
        %v614 = vld [vmem:[#allocation3 + $0x4] sm:$0xff]
        %v615 = vld [vmem:[#allocation3 + $0xc] sm:$0xff]
        %v616 = vld [vmem:[#allocation3 + $0x14] sm:$0xff]
        %v617 = vld [vmem:[#allocation3 + $0x1c] sm:$0xff]
        %v618 = vmul.f32 %v614, 0.21300554
        %v619 = vmul.f32 %v615, 0.21300554
        %v620 = vmul.f32 %v616, 0.21300554
        %v621 = vmul.f32 %v617, 0.21300554
        %v622 = vadd.f32 %v610, %v618
        %v623 = vadd.f32 %v611, %v619
        %v624 = vadd.f32 %v612, %v620
        %v625 = vadd.f32 %v613, %v621
        %v626 = vld [vmem:[#allocation3 + $0x5] sm:$0xff]
        %v627 = vld [vmem:[#allocation3 + $0xd] sm:$0xff]
        %v628 = vld [vmem:[#allocation3 + $0x15] sm:$0xff]
        %v629 = vld [vmem:[#allocation3 + $0x1d] sm:$0xff]
        %v630 = vmul.f32 %v626, 0.26601171
        %v631 = vmul.f32 %v627, 0.26601171
        %v632 = vmul.f32 %v628, 0.26601171
        %v633 = vmul.f32 %v629, 0.26601171
        %v634 = vadd.f32 %v622, %v630
        %v635 = vadd.f32 %v623, %v631
        %v636 = vadd.f32 %v624, %v632
        %v637 = vadd.f32 %v625, %v633
        %v638 = vld [vmem:[#allocation3 + $0x6] sm:$0xff]
        %v639 = vld [vmem:[#allocation3 + $0xe] sm:$0xff]
        %v640 = vld [vmem:[#allocation3 + $0x16] sm:$0xff]
        %v641 = vld [vmem:[#allocation3 + $0x1e] sm:$0xff]
        %v642 = vmul.f32 %v638, 0.21300554
        %v643 = vmul.f32 %v639, 0.21300554
        %v644 = vmul.f32 %v640, 0.21300554
        %v645 = vmul.f32 %v641, 0.21300554
        %v646 = vadd.f32 %v634, %v642
        %v647 = vadd.f32 %v635, %v643
        %v648 = vadd.f32 %v636, %v644
        %v649 = vadd.f32 %v637, %v645
        %v650 = vld [vmem:[#allocation3 + $0x7] sm:$0xff]
        %v651 = vld [vmem:[#allocation3 + $0xf] sm:$0xff]
        %v652 = vld [vmem:[#allocation3 + $0x17] sm:$0xff]
        %v653 = vld [vmem:[#allocation3 + $0x1f] sm:$0xff]
        %v654 = vmul.f32 %v650, 0.10936069
        %v655 = vmul.f32 %v651, 0.10936069
        %v656 = vmul.f32 %v652, 0.10936069
        %v657 = vmul.f32 %v653, 0.10936069
        %v658 = vadd.f32 %v646, %v654
        %v659 = vadd.f32 %v647, %v655
        %v660 = vadd.f32 %v648, %v656
        %v661 = vadd.f32 %v649, %v657
        %v662 = vld [vmem:[#allocation3 + $0x20] sm:$0xff]
        %v663 = vmul.f32 %v571, 0.036000773
        %v664 = vmul.f32 %v572, 0.036000773
        %v665 = vmul.f32 %v573, 0.036000773
        %v666 = vmul.f32 %v662, 0.036000773
        %v667 = vadd.f32 %v658, %v663
        %v668 = vadd.f32 %v659, %v664
        %v669 = vadd.f32 %v660, %v665
        %v670 = vadd.f32 %v661, %v666
        %v671 = vld [vmem:[#allocation3 + $0x21] sm:$0xff]
        %v672 = vmul.f32 %v671, 0.007598758
        %v673 = vadd.f32 %v667, %v583
        %v674 = vadd.f32 %v668, %v584
        %v675 = vadd.f32 %v669, %v585
        %v676 = vadd.f32 %v670, %v672
        %v677 = vld [vmem:[#allocation3 + $0x22] sm:$0xff]
        %v678 = vmul.f32 %v591, 0.0010283801
        %v679 = vmul.f32 %v592, 0.0010283801
        %v680 = vmul.f32 %v593, 0.0010283801
        %v681 = vmul.f32 %v677, 0.0010283801
        %v682 = vadd.f32 %v673, %v678
        %v683 = vadd.f32 %v674, %v679
        %v684 = vadd.f32 %v675, %v680
        %v685 = vadd.f32 %v676, %v681
        %690 = vrot.lane.b32.xlu0 %v325, 5
        %v691 = vpop.permute.xlu0 %690
        %692 = vrot.lane.b32.xlu0 %v326, 5
        %v693 = vpop.permute.xlu0 %692
        %694 = vrot.lane.b32.xlu0 %v327, 5
        %v695 = vpop.permute.xlu0 %694
        %696 = vrot.lane.b32.xlu0 %v328, 5
        %v697 = vpop.permute.xlu0 %696
        %702 = vst.msk [vmem:[#allocation2] sm:$0xff] %vm349, %v691
        %703 = vst.msk [vmem:[#allocation2 + $0x8] sm:$0xff] %vm349, %v693
        %704 = vst.msk [vmem:[#allocation2 + $0x10] sm:$0xff] %vm349, %v695
        %705 = vst.msk [vmem:[#allocation2 + $0x18] sm:$0xff] %vm349, %v697
        %v706 = vld [vmem:[#allocation2] sm:$0xff]
        %v707 = vld [vmem:[#allocation2 + $0x8] sm:$0xff]
        %v708 = vld [vmem:[#allocation2 + $0x10] sm:$0xff]
        %v709 = vld [vmem:[#allocation2 + $0x18] sm:$0xff]
        %v710 = vmul.f32 %v706, 0.0010283801
        %v711 = vmul.f32 %v707, 0.0010283801
        %v712 = vmul.f32 %v708, 0.0010283801
        %v713 = vmul.f32 %v709, 0.0010283801
        %v714 = vmul.f32 %v706, 0.007598758
        %v715 = vmul.f32 %v707, 0.007598758
        %v716 = vmul.f32 %v708, 0.007598758
        %v717 = vmul.f32 %v709, 0.007598758
        %722 = vrot.lane.b32.xlu0 %v714, 127
        %v723 = vpop.permute.xlu0 %722
        %724 = vrot.lane.b32.xlu0 %v715, 127
        %v725 = vpop.permute.xlu0 %724
        %726 = vrot.lane.b32.xlu0 %v716, 127
        %v727 = vpop.permute.xlu0 %726
        %728 = vrot.lane.b32.xlu0 %v717, 127
        %v729 = vpop.permute.xlu0 %728
        %v734 = vadd.f32 %v710, %v723
        %v735 = vadd.f32 %v711, %v725
        %v736 = vadd.f32 %v712, %v727
        %v737 = vadd.f32 %v713, %v729
        %v738 = vmul.f32 %v706, 0.036000773
        %v739 = vmul.f32 %v707, 0.036000773
        %v740 = vmul.f32 %v708, 0.036000773
        %v741 = vmul.f32 %v709, 0.036000773
        %746 = vrot.lane.b32.xlu0 %v738, 126
        %v747 = vpop.permute.xlu0 %746
        %748 = vrot.lane.b32.xlu0 %v739, 126
        %v749 = vpop.permute.xlu0 %748
        %750 = vrot.lane.b32.xlu0 %v740, 126
        %v751 = vpop.permute.xlu0 %750
        %752 = vrot.lane.b32.xlu0 %v741, 126
        %v753 = vpop.permute.xlu0 %752
        %v758 = vadd.f32 %v734, %v747
        %v759 = vadd.f32 %v735, %v749
        %v760 = vadd.f32 %v736, %v751
        %v761 = vadd.f32 %v737, %v753
        %v762 = vmul.f32 %v706, 0.10936069
        %v763 = vmul.f32 %v707, 0.10936069
        %v764 = vmul.f32 %v708, 0.10936069
        %v765 = vmul.f32 %v709, 0.10936069
        %770 = vrot.lane.b32.xlu0 %v762, 125
        %v771 = vpop.permute.xlu0 %770
        %772 = vrot.lane.b32.xlu0 %v763, 125
        %v773 = vpop.permute.xlu0 %772
        %774 = vrot.lane.b32.xlu0 %v764, 125
        %v775 = vpop.permute.xlu0 %774
        %776 = vrot.lane.b32.xlu0 %v765, 125
        %v777 = vpop.permute.xlu0 %776
        %v782 = vadd.f32 %v758, %v771
        %v783 = vadd.f32 %v759, %v773
        %v784 = vadd.f32 %v760, %v775
        %v785 = vadd.f32 %v761, %v777
        %v786 = vmul.f32 %v706, 0.21300554
        %v787 = vmul.f32 %v707, 0.21300554
        %v788 = vmul.f32 %v708, 0.21300554
        %v789 = vmul.f32 %v709, 0.21300554
        %794 = vrot.lane.b32.xlu0 %v786, 124
        %v795 = vpop.permute.xlu0 %794
        %796 = vrot.lane.b32.xlu0 %v787, 124
        %v797 = vpop.permute.xlu0 %796
        %798 = vrot.lane.b32.xlu0 %v788, 124
        %v799 = vpop.permute.xlu0 %798
        %800 = vrot.lane.b32.xlu0 %v789, 124
        %v801 = vpop.permute.xlu0 %800
        %v806 = vadd.f32 %v782, %v795
        %v807 = vadd.f32 %v783, %v797
        %v808 = vadd.f32 %v784, %v799
        %v809 = vadd.f32 %v785, %v801
        %v810 = vmul.f32 %v706, 0.26601171
        %v811 = vmul.f32 %v707, 0.26601171
        %v812 = vmul.f32 %v708, 0.26601171
        %v813 = vmul.f32 %v709, 0.26601171
        %818 = vrot.lane.b32.xlu0 %v810, 123
        %v819 = vpop.permute.xlu0 %818
        %820 = vrot.lane.b32.xlu0 %v811, 123
        %v821 = vpop.permute.xlu0 %820
        %822 = vrot.lane.b32.xlu0 %v812, 123
        %v823 = vpop.permute.xlu0 %822
        %824 = vrot.lane.b32.xlu0 %v813, 123
        %v825 = vpop.permute.xlu0 %824
        %v830 = vadd.f32 %v806, %v819
        %v831 = vadd.f32 %v807, %v821
        %v832 = vadd.f32 %v808, %v823
        %v833 = vadd.f32 %v809, %v825
        %834 = vrot.lane.b32.xlu0 %v786, 122
        %v835 = vpop.permute.xlu0 %834
        %836 = vrot.lane.b32.xlu0 %v787, 122
        %v837 = vpop.permute.xlu0 %836
        %838 = vrot.lane.b32.xlu0 %v788, 122
        %v839 = vpop.permute.xlu0 %838
        %840 = vrot.lane.b32.xlu0 %v789, 122
        %v841 = vpop.permute.xlu0 %840
        %v846 = vadd.f32 %v830, %v835
        %v847 = vadd.f32 %v831, %v837
        %v848 = vadd.f32 %v832, %v839
        %v849 = vadd.f32 %v833, %v841
        %850 = vrot.lane.b32.xlu0 %v762, 121
        %v851 = vpop.permute.xlu0 %850
        %852 = vrot.lane.b32.xlu0 %v763, 121
        %v853 = vpop.permute.xlu0 %852
        %854 = vrot.lane.b32.xlu0 %v764, 121
        %v855 = vpop.permute.xlu0 %854
        %856 = vrot.lane.b32.xlu0 %v765, 121
        %v857 = vpop.permute.xlu0 %856
        %v862 = vadd.f32 %v846, %v851
        %v863 = vadd.f32 %v847, %v853
        %v864 = vadd.f32 %v848, %v855
        %v865 = vadd.f32 %v849, %v857
        %866 = vrot.lane.b32.xlu0 %v738, 120
        %v867 = vpop.permute.xlu0 %866
        %868 = vrot.lane.b32.xlu0 %v739, 120
        %v869 = vpop.permute.xlu0 %868
        %870 = vrot.lane.b32.xlu0 %v740, 120
        %v871 = vpop.permute.xlu0 %870
        %872 = vrot.lane.b32.xlu0 %v741, 120
        %v873 = vpop.permute.xlu0 %872
        %v878 = vadd.f32 %v862, %v867
        %v879 = vadd.f32 %v863, %v869
        %v880 = vadd.f32 %v864, %v871
        %v881 = vadd.f32 %v865, %v873
        %882 = vrot.lane.b32.xlu0 %v714, 119
        %v883 = vpop.permute.xlu0 %882
        %884 = vrot.lane.b32.xlu0 %v715, 119
        %v885 = vpop.permute.xlu0 %884
        %886 = vrot.lane.b32.xlu0 %v716, 119
        %v887 = vpop.permute.xlu0 %886
        %888 = vrot.lane.b32.xlu0 %v717, 119
        %v889 = vpop.permute.xlu0 %888
        %v894 = vadd.f32 %v878, %v883
        %v895 = vadd.f32 %v879, %v885
        %v896 = vadd.f32 %v880, %v887
        %v897 = vadd.f32 %v881, %v889
        %902 = vrot.lane.b32.xlu0 %v710, 118
        %v903 = vpop.permute.xlu0 %902
        %904 = vrot.lane.b32.xlu0 %v711, 118
        %v905 = vpop.permute.xlu0 %904
        %906 = vrot.lane.b32.xlu0 %v712, 118
        %v907 = vpop.permute.xlu0 %906
        %908 = vrot.lane.b32.xlu0 %v713, 118
        %v909 = vpop.permute.xlu0 %908
        %v914 = vadd.f32 %v894, %v903
        %v915 = vadd.f32 %v895, %v905
        %v916 = vadd.f32 %v896, %v907
        %v917 = vadd.f32 %v897, %v909
        %918 = vst.msk [vmem:[#allocation3 + $0x5] sm:$0xff] %vm309, %v914
        %919 = vst.msk [vmem:[#allocation3 + $0xd] sm:$0xff] %vm309, %v915
        %920 = vst.msk [vmem:[#allocation3 + $0x15] sm:$0xff] %vm309, %v916
        %921 = vst.msk [vmem:[#allocation3 + $0x1d] sm:$0xff] %vm309, %v917
        %v922 = vld [vmem:[#allocation3] sm:$0xff]
        %v923 = vld [vmem:[#allocation3 + $0x8] sm:$0xff]
        %v924 = vld [vmem:[#allocation3 + $0x10] sm:$0xff]
        %v925 = vld [vmem:[#allocation3 + $0x18] sm:$0xff]
        %v926 = vmul.f32 %v922, 0.0010283801
        %v927 = vmul.f32 %v923, 0.0010283801
        %v928 = vmul.f32 %v924, 0.0010283801
        %v929 = vmul.f32 %v925, 0.0010283801
        %v930 = vld [vmem:[#allocation3 + $0x1] sm:$0xff]
        %v931 = vld [vmem:[#allocation3 + $0x9] sm:$0xff]
        %v932 = vld [vmem:[#allocation3 + $0x11] sm:$0xff]
        %v933 = vld [vmem:[#allocation3 + $0x19] sm:$0xff]
        %v934 = vmul.f32 %v930, 0.007598758
        %v935 = vmul.f32 %v931, 0.007598758
        %v936 = vmul.f32 %v932, 0.007598758
        %v937 = vmul.f32 %v933, 0.007598758
        %v938 = vadd.f32 %v926, %v934
        %v939 = vadd.f32 %v927, %v935
        %v940 = vadd.f32 %v928, %v936
        %v941 = vadd.f32 %v929, %v937
        %v942 = vld [vmem:[#allocation3 + $0x2] sm:$0xff]
        %v943 = vld [vmem:[#allocation3 + $0xa] sm:$0xff]
        %v944 = vld [vmem:[#allocation3 + $0x12] sm:$0xff]
        %v945 = vld [vmem:[#allocation3 + $0x1a] sm:$0xff]
        %v946 = vmul.f32 %v942, 0.036000773
        %v947 = vmul.f32 %v943, 0.036000773
        %v948 = vmul.f32 %v944, 0.036000773
        %v949 = vmul.f32 %v945, 0.036000773
        %v950 = vadd.f32 %v938, %v946
        %v951 = vadd.f32 %v939, %v947
        %v952 = vadd.f32 %v940, %v948
        %v953 = vadd.f32 %v941, %v949
        %v954 = vld [vmem:[#allocation3 + $0x3] sm:$0xff]
        %v955 = vld [vmem:[#allocation3 + $0xb] sm:$0xff]
        %v956 = vld [vmem:[#allocation3 + $0x13] sm:$0xff]
        %v957 = vld [vmem:[#allocation3 + $0x1b] sm:$0xff]
        %v958 = vmul.f32 %v954, 0.10936069
        %v959 = vmul.f32 %v955, 0.10936069
        %v960 = vmul.f32 %v956, 0.10936069
        %v961 = vmul.f32 %v957, 0.10936069
        %v962 = vadd.f32 %v950, %v958
        %v963 = vadd.f32 %v951, %v959
        %v964 = vadd.f32 %v952, %v960
        %v965 = vadd.f32 %v953, %v961
        %v966 = vld [vmem:[#allocation3 + $0x4] sm:$0xff]
        %v967 = vld [vmem:[#allocation3 + $0xc] sm:$0xff]
        %v968 = vld [vmem:[#allocation3 + $0x14] sm:$0xff]
        %v969 = vld [vmem:[#allocation3 + $0x1c] sm:$0xff]
        %v970 = vmul.f32 %v966, 0.21300554
        %v971 = vmul.f32 %v967, 0.21300554
        %v972 = vmul.f32 %v968, 0.21300554
        %v973 = vmul.f32 %v969, 0.21300554
        %v974 = vadd.f32 %v962, %v970
        %v975 = vadd.f32 %v963, %v971
        %v976 = vadd.f32 %v964, %v972
        %v977 = vadd.f32 %v965, %v973
        %v978 = vld [vmem:[#allocation3 + $0x5] sm:$0xff]
        %v979 = vld [vmem:[#allocation3 + $0xd] sm:$0xff]
        %v980 = vld [vmem:[#allocation3 + $0x15] sm:$0xff]
        %v981 = vld [vmem:[#allocation3 + $0x1d] sm:$0xff]
        %v982 = vmul.f32 %v978, 0.26601171
        %v983 = vmul.f32 %v979, 0.26601171
        %v984 = vmul.f32 %v980, 0.26601171
        %v985 = vmul.f32 %v981, 0.26601171
        %v986 = vadd.f32 %v974, %v982
        %v987 = vadd.f32 %v975, %v983
        %v988 = vadd.f32 %v976, %v984
        %v989 = vadd.f32 %v977, %v985
        %v990 = vld [vmem:[#allocation3 + $0x6] sm:$0xff]
        %v991 = vld [vmem:[#allocation3 + $0xe] sm:$0xff]
        %v992 = vld [vmem:[#allocation3 + $0x16] sm:$0xff]
        %v993 = vld [vmem:[#allocation3 + $0x1e] sm:$0xff]
        %v994 = vmul.f32 %v990, 0.21300554
        %v995 = vmul.f32 %v991, 0.21300554
        %v996 = vmul.f32 %v992, 0.21300554
        %v997 = vmul.f32 %v993, 0.21300554
        %v998 = vadd.f32 %v986, %v994
        %v999 = vadd.f32 %v987, %v995
        %v1000 = vadd.f32 %v988, %v996
        %v1001 = vadd.f32 %v989, %v997
        %v1002 = vld [vmem:[#allocation3 + $0x7] sm:$0xff]
        %v1003 = vld [vmem:[#allocation3 + $0xf] sm:$0xff]
        %v1004 = vld [vmem:[#allocation3 + $0x17] sm:$0xff]
        %v1005 = vld [vmem:[#allocation3 + $0x1f] sm:$0xff]
        %v1006 = vmul.f32 %v1002, 0.10936069
        %v1007 = vmul.f32 %v1003, 0.10936069
        %v1008 = vmul.f32 %v1004, 0.10936069
        %v1009 = vmul.f32 %v1005, 0.10936069
        %v1010 = vadd.f32 %v998, %v1006
        %v1011 = vadd.f32 %v999, %v1007
        %v1012 = vadd.f32 %v1000, %v1008
        %v1013 = vadd.f32 %v1001, %v1009
        %v1014 = vld [vmem:[#allocation3 + $0x20] sm:$0xff]
        %v1015 = vmul.f32 %v923, 0.036000773
        %v1016 = vmul.f32 %v924, 0.036000773
        %v1017 = vmul.f32 %v925, 0.036000773
        %v1018 = vmul.f32 %v1014, 0.036000773
        %v1019 = vadd.f32 %v1010, %v1015
        %v1020 = vadd.f32 %v1011, %v1016
        %v1021 = vadd.f32 %v1012, %v1017
        %v1022 = vadd.f32 %v1013, %v1018
        %v1023 = vld [vmem:[#allocation3 + $0x21] sm:$0xff]
        %v1024 = vmul.f32 %v1023, 0.007598758
        %v1025 = vadd.f32 %v1019, %v935
        %v1026 = vadd.f32 %v1020, %v936
        %v1027 = vadd.f32 %v1021, %v937
        %v1028 = vadd.f32 %v1022, %v1024
        %v1029 = vld [vmem:[#allocation3 + $0x22] sm:$0xff]
        %v1030 = vmul.f32 %v943, 0.0010283801
        %v1031 = vmul.f32 %v944, 0.0010283801
        %v1032 = vmul.f32 %v945, 0.0010283801
        %v1033 = vmul.f32 %v1029, 0.0010283801
        %v1034 = vadd.f32 %v1025, %v1030
        %v1035 = vadd.f32 %v1026, %v1031
        %v1036 = vadd.f32 %v1027, %v1032
        %v1037 = vadd.f32 %v1028, %v1033
        %v1038 = vmul.f32 %v321, %v321
        %v1039 = vmul.f32 %v322, %v322
        %v1040 = vmul.f32 %v323, %v323
        %v1041 = vmul.f32 %v324, %v324
        %1046 = vrot.lane.b32.xlu0 %v1038, 5
        %v1047 = vpop.permute.xlu0 %1046
        %1048 = vrot.lane.b32.xlu0 %v1039, 5
        %v1049 = vpop.permute.xlu0 %1048
        %1050 = vrot.lane.b32.xlu0 %v1040, 5
        %v1051 = vpop.permute.xlu0 %1050
        %1052 = vrot.lane.b32.xlu0 %v1041, 5
        %v1053 = vpop.permute.xlu0 %1052
        %1058 = vst.msk [vmem:[#allocation2] sm:$0xff] %vm349, %v1047
        %1059 = vst.msk [vmem:[#allocation2 + $0x8] sm:$0xff] %vm349, %v1049
        %1060 = vst.msk [vmem:[#allocation2 + $0x10] sm:$0xff] %vm349, %v1051
        %1061 = vst.msk [vmem:[#allocation2 + $0x18] sm:$0xff] %vm349, %v1053
        %v1062 = vld [vmem:[#allocation2] sm:$0xff]
        %v1063 = vld [vmem:[#allocation2 + $0x8] sm:$0xff]
        %v1064 = vld [vmem:[#allocation2 + $0x10] sm:$0xff]
        %v1065 = vld [vmem:[#allocation2 + $0x18] sm:$0xff]
        %v1066 = vmul.f32 %v1062, 0.0010283801
        %v1067 = vmul.f32 %v1063, 0.0010283801
        %v1068 = vmul.f32 %v1064, 0.0010283801
        %v1069 = vmul.f32 %v1065, 0.0010283801
        %v1070 = vmul.f32 %v1062, 0.007598758
        %v1071 = vmul.f32 %v1063, 0.007598758
        %v1072 = vmul.f32 %v1064, 0.007598758
        %v1073 = vmul.f32 %v1065, 0.007598758
        %1078 = vrot.lane.b32.xlu0 %v1070, 127
        %v1079 = vpop.permute.xlu0 %1078
        %1080 = vrot.lane.b32.xlu0 %v1071, 127
        %v1081 = vpop.permute.xlu0 %1080
        %1082 = vrot.lane.b32.xlu0 %v1072, 127
        %v1083 = vpop.permute.xlu0 %1082
        %1084 = vrot.lane.b32.xlu0 %v1073, 127
        %v1085 = vpop.permute.xlu0 %1084
        %v1090 = vadd.f32 %v1066, %v1079
        %v1091 = vadd.f32 %v1067, %v1081
        %v1092 = vadd.f32 %v1068, %v1083
        %v1093 = vadd.f32 %v1069, %v1085
        %v1094 = vmul.f32 %v1062, 0.036000773
        %v1095 = vmul.f32 %v1063, 0.036000773
        %v1096 = vmul.f32 %v1064, 0.036000773
        %v1097 = vmul.f32 %v1065, 0.036000773
        %1102 = vrot.lane.b32.xlu0 %v1094, 126
        %v1103 = vpop.permute.xlu0 %1102
        %1104 = vrot.lane.b32.xlu0 %v1095, 126
        %v1105 = vpop.permute.xlu0 %1104
        %1106 = vrot.lane.b32.xlu0 %v1096, 126
        %v1107 = vpop.permute.xlu0 %1106
        %1108 = vrot.lane.b32.xlu0 %v1097, 126
        %v1109 = vpop.permute.xlu0 %1108
        %v1114 = vadd.f32 %v1090, %v1103
        %v1115 = vadd.f32 %v1091, %v1105
        %v1116 = vadd.f32 %v1092, %v1107
        %v1117 = vadd.f32 %v1093, %v1109
        %v1118 = vmul.f32 %v1062, 0.10936069
        %v1119 = vmul.f32 %v1063, 0.10936069
        %v1120 = vmul.f32 %v1064, 0.10936069
        %v1121 = vmul.f32 %v1065, 0.10936069
        %1126 = vrot.lane.b32.xlu0 %v1118, 125
        %v1127 = vpop.permute.xlu0 %1126
        %1128 = vrot.lane.b32.xlu0 %v1119, 125
        %v1129 = vpop.permute.xlu0 %1128
        %1130 = vrot.lane.b32.xlu0 %v1120, 125
        %v1131 = vpop.permute.xlu0 %1130
        %1132 = vrot.lane.b32.xlu0 %v1121, 125
        %v1133 = vpop.permute.xlu0 %1132
        %v1138 = vadd.f32 %v1114, %v1127
        %v1139 = vadd.f32 %v1115, %v1129
        %v1140 = vadd.f32 %v1116, %v1131
        %v1141 = vadd.f32 %v1117, %v1133
        %v1142 = vmul.f32 %v1062, 0.21300554
        %v1143 = vmul.f32 %v1063, 0.21300554
        %v1144 = vmul.f32 %v1064, 0.21300554
        %v1145 = vmul.f32 %v1065, 0.21300554
        %1150 = vrot.lane.b32.xlu0 %v1142, 124
        %v1151 = vpop.permute.xlu0 %1150
        %1152 = vrot.lane.b32.xlu0 %v1143, 124
        %v1153 = vpop.permute.xlu0 %1152
        %1154 = vrot.lane.b32.xlu0 %v1144, 124
        %v1155 = vpop.permute.xlu0 %1154
        %1156 = vrot.lane.b32.xlu0 %v1145, 124
        %v1157 = vpop.permute.xlu0 %1156
        %v1162 = vadd.f32 %v1138, %v1151
        %v1163 = vadd.f32 %v1139, %v1153
        %v1164 = vadd.f32 %v1140, %v1155
        %v1165 = vadd.f32 %v1141, %v1157
        %v1166 = vmul.f32 %v1062, 0.26601171
        %v1167 = vmul.f32 %v1063, 0.26601171
        %v1168 = vmul.f32 %v1064, 0.26601171
        %v1169 = vmul.f32 %v1065, 0.26601171
        %1174 = vrot.lane.b32.xlu0 %v1166, 123
        %v1175 = vpop.permute.xlu0 %1174
        %1176 = vrot.lane.b32.xlu0 %v1167, 123
        %v1177 = vpop.permute.xlu0 %1176
        %1178 = vrot.lane.b32.xlu0 %v1168, 123
        %v1179 = vpop.permute.xlu0 %1178
        %1180 = vrot.lane.b32.xlu0 %v1169, 123
        %v1181 = vpop.permute.xlu0 %1180
        %v1186 = vadd.f32 %v1162, %v1175
        %v1187 = vadd.f32 %v1163, %v1177
        %v1188 = vadd.f32 %v1164, %v1179
        %v1189 = vadd.f32 %v1165, %v1181
        %1190 = vrot.lane.b32.xlu0 %v1142, 122
        %v1191 = vpop.permute.xlu0 %1190
        %1192 = vrot.lane.b32.xlu0 %v1143, 122
        %v1193 = vpop.permute.xlu0 %1192
        %1194 = vrot.lane.b32.xlu0 %v1144, 122
        %v1195 = vpop.permute.xlu0 %1194
        %1196 = vrot.lane.b32.xlu0 %v1145, 122
        %v1197 = vpop.permute.xlu0 %1196
        %v1202 = vadd.f32 %v1186, %v1191
        %v1203 = vadd.f32 %v1187, %v1193
        %v1204 = vadd.f32 %v1188, %v1195
        %v1205 = vadd.f32 %v1189, %v1197
        %1206 = vrot.lane.b32.xlu0 %v1118, 121
        %v1207 = vpop.permute.xlu0 %1206
        %1208 = vrot.lane.b32.xlu0 %v1119, 121
        %v1209 = vpop.permute.xlu0 %1208
        %1210 = vrot.lane.b32.xlu0 %v1120, 121
        %v1211 = vpop.permute.xlu0 %1210
        %1212 = vrot.lane.b32.xlu0 %v1121, 121
        %v1213 = vpop.permute.xlu0 %1212
        %v1218 = vadd.f32 %v1202, %v1207
        %v1219 = vadd.f32 %v1203, %v1209
        %v1220 = vadd.f32 %v1204, %v1211
        %v1221 = vadd.f32 %v1205, %v1213
        %1222 = vrot.lane.b32.xlu0 %v1094, 120
        %v1223 = vpop.permute.xlu0 %1222
        %1224 = vrot.lane.b32.xlu0 %v1095, 120
        %v1225 = vpop.permute.xlu0 %1224
        %1226 = vrot.lane.b32.xlu0 %v1096, 120
        %v1227 = vpop.permute.xlu0 %1226
        %1228 = vrot.lane.b32.xlu0 %v1097, 120
        %v1229 = vpop.permute.xlu0 %1228
        %v1234 = vadd.f32 %v1218, %v1223
        %v1235 = vadd.f32 %v1219, %v1225
        %v1236 = vadd.f32 %v1220, %v1227
        %v1237 = vadd.f32 %v1221, %v1229
        %1238 = vrot.lane.b32.xlu0 %v1070, 119
        %v1239 = vpop.permute.xlu0 %1238
        %1240 = vrot.lane.b32.xlu0 %v1071, 119
        %v1241 = vpop.permute.xlu0 %1240
        %1242 = vrot.lane.b32.xlu0 %v1072, 119
        %v1243 = vpop.permute.xlu0 %1242
        %1244 = vrot.lane.b32.xlu0 %v1073, 119
        %v1245 = vpop.permute.xlu0 %1244
        %v1250 = vadd.f32 %v1234, %v1239
        %v1251 = vadd.f32 %v1235, %v1241
        %v1252 = vadd.f32 %v1236, %v1243
        %v1253 = vadd.f32 %v1237, %v1245
        %1258 = vrot.lane.b32.xlu0 %v1066, 118
        %v1259 = vpop.permute.xlu0 %1258
        %1260 = vrot.lane.b32.xlu0 %v1067, 118
        %v1261 = vpop.permute.xlu0 %1260
        %1262 = vrot.lane.b32.xlu0 %v1068, 118
        %v1263 = vpop.permute.xlu0 %1262
        %1264 = vrot.lane.b32.xlu0 %v1069, 118
        %v1265 = vpop.permute.xlu0 %1264
        %v1270 = vadd.f32 %v1250, %v1259
        %v1271 = vadd.f32 %v1251, %v1261
        %v1272 = vadd.f32 %v1252, %v1263
        %v1273 = vadd.f32 %v1253, %v1265
        %1274 = vst.msk [vmem:[#allocation3 + $0x5] sm:$0xff] %vm309, %v1270
        %1275 = vst.msk [vmem:[#allocation3 + $0xd] sm:$0xff] %vm309, %v1271
        %1276 = vst.msk [vmem:[#allocation3 + $0x15] sm:$0xff] %vm309, %v1272
        %1277 = vst.msk [vmem:[#allocation3 + $0x1d] sm:$0xff] %vm309, %v1273
        %v1278 = vld [vmem:[#allocation3] sm:$0xff]
        %v1279 = vld [vmem:[#allocation3 + $0x8] sm:$0xff]
        %v1280 = vld [vmem:[#allocation3 + $0x10] sm:$0xff]
        %v1281 = vld [vmem:[#allocation3 + $0x18] sm:$0xff]
        %v1282 = vmul.f32 %v1278, 0.0010283801
        %v1283 = vmul.f32 %v1279, 0.0010283801
        %v1284 = vmul.f32 %v1280, 0.0010283801
        %v1285 = vmul.f32 %v1281, 0.0010283801
        %v1286 = vld [vmem:[#allocation3 + $0x1] sm:$0xff]
        %v1287 = vld [vmem:[#allocation3 + $0x9] sm:$0xff]
        %v1288 = vld [vmem:[#allocation3 + $0x11] sm:$0xff]
        %v1289 = vld [vmem:[#allocation3 + $0x19] sm:$0xff]
        %v1290 = vmul.f32 %v1286, 0.007598758
        %v1291 = vmul.f32 %v1287, 0.007598758
        %v1292 = vmul.f32 %v1288, 0.007598758
        %v1293 = vmul.f32 %v1289, 0.007598758
        %v1294 = vadd.f32 %v1282, %v1290
        %v1295 = vadd.f32 %v1283, %v1291
        %v1296 = vadd.f32 %v1284, %v1292
        %v1297 = vadd.f32 %v1285, %v1293
        %v1298 = vld [vmem:[#allocation3 + $0x2] sm:$0xff]
        %v1299 = vld [vmem:[#allocation3 + $0xa] sm:$0xff]
        %v1300 = vld [vmem:[#allocation3 + $0x12] sm:$0xff]
        %v1301 = vld [vmem:[#allocation3 + $0x1a] sm:$0xff]
        %v1302 = vmul.f32 %v1298, 0.036000773
        %v1303 = vmul.f32 %v1299, 0.036000773
        %v1304 = vmul.f32 %v1300, 0.036000773
        %v1305 = vmul.f32 %v1301, 0.036000773
        %v1306 = vadd.f32 %v1294, %v1302
        %v1307 = vadd.f32 %v1295, %v1303
        %v1308 = vadd.f32 %v1296, %v1304
        %v1309 = vadd.f32 %v1297, %v1305
        %v1310 = vld [vmem:[#allocation3 + $0x3] sm:$0xff]
        %v1311 = vld [vmem:[#allocation3 + $0xb] sm:$0xff]
        %v1312 = vld [vmem:[#allocation3 + $0x13] sm:$0xff]
        %v1313 = vld [vmem:[#allocation3 + $0x1b] sm:$0xff]
        %v1314 = vmul.f32 %v1310, 0.10936069
        %v1315 = vmul.f32 %v1311, 0.10936069
        %v1316 = vmul.f32 %v1312, 0.10936069
        %v1317 = vmul.f32 %v1313, 0.10936069
        %v1318 = vadd.f32 %v1306, %v1314
        %v1319 = vadd.f32 %v1307, %v1315
        %v1320 = vadd.f32 %v1308, %v1316
        %v1321 = vadd.f32 %v1309, %v1317
        %v1322 = vld [vmem:[#allocation3 + $0x4] sm:$0xff]
        %v1323 = vld [vmem:[#allocation3 + $0xc] sm:$0xff]
        %v1324 = vld [vmem:[#allocation3 + $0x14] sm:$0xff]
        %v1325 = vld [vmem:[#allocation3 + $0x1c] sm:$0xff]
        %v1326 = vmul.f32 %v1322, 0.21300554
        %v1327 = vmul.f32 %v1323, 0.21300554
        %v1328 = vmul.f32 %v1324, 0.21300554
        %v1329 = vmul.f32 %v1325, 0.21300554
        %v1330 = vadd.f32 %v1318, %v1326
        %v1331 = vadd.f32 %v1319, %v1327
        %v1332 = vadd.f32 %v1320, %v1328
        %v1333 = vadd.f32 %v1321, %v1329
        %v1334 = vld [vmem:[#allocation3 + $0x5] sm:$0xff]
        %v1335 = vld [vmem:[#allocation3 + $0xd] sm:$0xff]
        %v1336 = vld [vmem:[#allocation3 + $0x15] sm:$0xff]
        %v1337 = vld [vmem:[#allocation3 + $0x1d] sm:$0xff]
        %v1338 = vmul.f32 %v1334, 0.26601171
        %v1339 = vmul.f32 %v1335, 0.26601171
        %v1340 = vmul.f32 %v1336, 0.26601171
        %v1341 = vmul.f32 %v1337, 0.26601171
        %v1342 = vadd.f32 %v1330, %v1338
        %v1343 = vadd.f32 %v1331, %v1339
        %v1344 = vadd.f32 %v1332, %v1340
        %v1345 = vadd.f32 %v1333, %v1341
        %v1346 = vld [vmem:[#allocation3 + $0x6] sm:$0xff]
        %v1347 = vld [vmem:[#allocation3 + $0xe] sm:$0xff]
        %v1348 = vld [vmem:[#allocation3 + $0x16] sm:$0xff]
        %v1349 = vld [vmem:[#allocation3 + $0x1e] sm:$0xff]
        %v1350 = vmul.f32 %v1346, 0.21300554
        %v1351 = vmul.f32 %v1347, 0.21300554
        %v1352 = vmul.f32 %v1348, 0.21300554
        %v1353 = vmul.f32 %v1349, 0.21300554
        %v1354 = vadd.f32 %v1342, %v1350
        %v1355 = vadd.f32 %v1343, %v1351
        %v1356 = vadd.f32 %v1344, %v1352
        %v1357 = vadd.f32 %v1345, %v1353
        %v1358 = vld [vmem:[#allocation3 + $0x7] sm:$0xff]
        %v1359 = vld [vmem:[#allocation3 + $0xf] sm:$0xff]
        %v1360 = vld [vmem:[#allocation3 + $0x17] sm:$0xff]
        %v1361 = vld [vmem:[#allocation3 + $0x1f] sm:$0xff]
        %v1362 = vmul.f32 %v1358, 0.10936069
        %v1363 = vmul.f32 %v1359, 0.10936069
        %v1364 = vmul.f32 %v1360, 0.10936069
        %v1365 = vmul.f32 %v1361, 0.10936069
        %v1366 = vadd.f32 %v1354, %v1362
        %v1367 = vadd.f32 %v1355, %v1363
        %v1368 = vadd.f32 %v1356, %v1364
        %v1369 = vadd.f32 %v1357, %v1365
        %v1370 = vld [vmem:[#allocation3 + $0x20] sm:$0xff]
        %v1371 = vmul.f32 %v1279, 0.036000773
        %v1372 = vmul.f32 %v1280, 0.036000773
        %v1373 = vmul.f32 %v1281, 0.036000773
        %v1374 = vmul.f32 %v1370, 0.036000773
        %v1375 = vadd.f32 %v1366, %v1371
        %v1376 = vadd.f32 %v1367, %v1372
        %v1377 = vadd.f32 %v1368, %v1373
        %v1378 = vadd.f32 %v1369, %v1374
        %v1379 = vld [vmem:[#allocation3 + $0x21] sm:$0xff]
        %v1380 = vmul.f32 %v1379, 0.007598758
        %v1381 = vadd.f32 %v1375, %v1291
        %v1382 = vadd.f32 %v1376, %v1292
        %v1383 = vadd.f32 %v1377, %v1293
        %v1384 = vadd.f32 %v1378, %v1380
        %v1385 = vld [vmem:[#allocation3 + $0x22] sm:$0xff]
        %v1386 = vmul.f32 %v1299, 0.0010283801
        %v1387 = vmul.f32 %v1300, 0.0010283801
        %v1388 = vmul.f32 %v1301, 0.0010283801
        %v1389 = vmul.f32 %v1385, 0.0010283801
        %v1390 = vadd.f32 %v1381, %v1386
        %v1391 = vadd.f32 %v1382, %v1387
        %v1392 = vadd.f32 %v1383, %v1388
        %v1393 = vadd.f32 %v1384, %v1389
        %v1394 = vmul.f32 %v325, %v325
        %v1395 = vmul.f32 %v326, %v326
        %v1396 = vmul.f32 %v327, %v327
        %v1397 = vmul.f32 %v328, %v328
        %1402 = vrot.lane.b32.xlu0 %v1394, 5
        %v1403 = vpop.permute.xlu0 %1402
        %1404 = vrot.lane.b32.xlu0 %v1395, 5
        %v1405 = vpop.permute.xlu0 %1404
        %1406 = vrot.lane.b32.xlu0 %v1396, 5
        %v1407 = vpop.permute.xlu0 %1406
        %1408 = vrot.lane.b32.xlu0 %v1397, 5
        %v1409 = vpop.permute.xlu0 %1408
        %1414 = vst.msk [vmem:[#allocation2] sm:$0xff] %vm349, %v1403
        %1415 = vst.msk [vmem:[#allocation2 + $0x8] sm:$0xff] %vm349, %v1405
        %1416 = vst.msk [vmem:[#allocation2 + $0x10] sm:$0xff] %vm349, %v1407
        %1417 = vst.msk [vmem:[#allocation2 + $0x18] sm:$0xff] %vm349, %v1409
        %v1418 = vld [vmem:[#allocation2] sm:$0xff]
        %v1419 = vld [vmem:[#allocation2 + $0x8] sm:$0xff]
        %v1420 = vld [vmem:[#allocation2 + $0x10] sm:$0xff]
        %v1421 = vld [vmem:[#allocation2 + $0x18] sm:$0xff]
        %v1422 = vmul.f32 %v1418, 0.0010283801
        %v1423 = vmul.f32 %v1419, 0.0010283801
        %v1424 = vmul.f32 %v1420, 0.0010283801
        %v1425 = vmul.f32 %v1421, 0.0010283801
        %v1426 = vmul.f32 %v1418, 0.007598758
        %v1427 = vmul.f32 %v1419, 0.007598758
        %v1428 = vmul.f32 %v1420, 0.007598758
        %v1429 = vmul.f32 %v1421, 0.007598758
        %1434 = vrot.lane.b32.xlu0 %v1426, 127
        %v1435 = vpop.permute.xlu0 %1434
        %1436 = vrot.lane.b32.xlu0 %v1427, 127
        %v1437 = vpop.permute.xlu0 %1436
        %1438 = vrot.lane.b32.xlu0 %v1428, 127
        %v1439 = vpop.permute.xlu0 %1438
        %1440 = vrot.lane.b32.xlu0 %v1429, 127
        %v1441 = vpop.permute.xlu0 %1440
        %v1446 = vadd.f32 %v1422, %v1435
        %v1447 = vadd.f32 %v1423, %v1437
        %v1448 = vadd.f32 %v1424, %v1439
        %v1449 = vadd.f32 %v1425, %v1441
        %v1450 = vmul.f32 %v1418, 0.036000773
        %v1451 = vmul.f32 %v1419, 0.036000773
        %v1452 = vmul.f32 %v1420, 0.036000773
        %v1453 = vmul.f32 %v1421, 0.036000773
        %1458 = vrot.lane.b32.xlu0 %v1450, 126
        %v1459 = vpop.permute.xlu0 %1458
        %1460 = vrot.lane.b32.xlu0 %v1451, 126
        %v1461 = vpop.permute.xlu0 %1460
        %1462 = vrot.lane.b32.xlu0 %v1452, 126
        %v1463 = vpop.permute.xlu0 %1462
        %1464 = vrot.lane.b32.xlu0 %v1453, 126
        %v1465 = vpop.permute.xlu0 %1464
        %v1470 = vadd.f32 %v1446, %v1459
        %v1471 = vadd.f32 %v1447, %v1461
        %v1472 = vadd.f32 %v1448, %v1463
        %v1473 = vadd.f32 %v1449, %v1465
        %v1474 = vmul.f32 %v1418, 0.10936069
        %v1475 = vmul.f32 %v1419, 0.10936069
        %v1476 = vmul.f32 %v1420, 0.10936069
        %v1477 = vmul.f32 %v1421, 0.10936069
        %1482 = vrot.lane.b32.xlu0 %v1474, 125
        %v1483 = vpop.permute.xlu0 %1482
        %1484 = vrot.lane.b32.xlu0 %v1475, 125
        %v1485 = vpop.permute.xlu0 %1484
        %1486 = vrot.lane.b32.xlu0 %v1476, 125
        %v1487 = vpop.permute.xlu0 %1486
        %1488 = vrot.lane.b32.xlu0 %v1477, 125
        %v1489 = vpop.permute.xlu0 %1488
        %v1494 = vadd.f32 %v1470, %v1483
        %v1495 = vadd.f32 %v1471, %v1485
        %v1496 = vadd.f32 %v1472, %v1487
        %v1497 = vadd.f32 %v1473, %v1489
        %v1498 = vmul.f32 %v1418, 0.21300554
        %v1499 = vmul.f32 %v1419, 0.21300554
        %v1500 = vmul.f32 %v1420, 0.21300554
        %v1501 = vmul.f32 %v1421, 0.21300554
        %1506 = vrot.lane.b32.xlu0 %v1498, 124
        %v1507 = vpop.permute.xlu0 %1506
        %1508 = vrot.lane.b32.xlu0 %v1499, 124
        %v1509 = vpop.permute.xlu0 %1508
        %1510 = vrot.lane.b32.xlu0 %v1500, 124
        %v1511 = vpop.permute.xlu0 %1510
        %1512 = vrot.lane.b32.xlu0 %v1501, 124
        %v1513 = vpop.permute.xlu0 %1512
        %v1518 = vadd.f32 %v1494, %v1507
        %v1519 = vadd.f32 %v1495, %v1509
        %v1520 = vadd.f32 %v1496, %v1511
        %v1521 = vadd.f32 %v1497, %v1513
        %v1522 = vmul.f32 %v1418, 0.26601171
        %v1523 = vmul.f32 %v1419, 0.26601171
        %v1524 = vmul.f32 %v1420, 0.26601171
        %v1525 = vmul.f32 %v1421, 0.26601171
        %1530 = vrot.lane.b32.xlu0 %v1522, 123
        %v1531 = vpop.permute.xlu0 %1530
        %1532 = vrot.lane.b32.xlu0 %v1523, 123
        %v1533 = vpop.permute.xlu0 %1532
        %1534 = vrot.lane.b32.xlu0 %v1524, 123
        %v1535 = vpop.permute.xlu0 %1534
        %1536 = vrot.lane.b32.xlu0 %v1525, 123
        %v1537 = vpop.permute.xlu0 %1536
        %v1542 = vadd.f32 %v1518, %v1531
        %v1543 = vadd.f32 %v1519, %v1533
        %v1544 = vadd.f32 %v1520, %v1535
        %v1545 = vadd.f32 %v1521, %v1537
        %1546 = vrot.lane.b32.xlu0 %v1498, 122
        %v1547 = vpop.permute.xlu0 %1546
        %1548 = vrot.lane.b32.xlu0 %v1499, 122
        %v1549 = vpop.permute.xlu0 %1548
        %1550 = vrot.lane.b32.xlu0 %v1500, 122
        %v1551 = vpop.permute.xlu0 %1550
        %1552 = vrot.lane.b32.xlu0 %v1501, 122
        %v1553 = vpop.permute.xlu0 %1552
        %v1558 = vadd.f32 %v1542, %v1547
        %v1559 = vadd.f32 %v1543, %v1549
        %v1560 = vadd.f32 %v1544, %v1551
        %v1561 = vadd.f32 %v1545, %v1553
        %1562 = vrot.lane.b32.xlu0 %v1474, 121
        %v1563 = vpop.permute.xlu0 %1562
        %1564 = vrot.lane.b32.xlu0 %v1475, 121
        %v1565 = vpop.permute.xlu0 %1564
        %1566 = vrot.lane.b32.xlu0 %v1476, 121
        %v1567 = vpop.permute.xlu0 %1566
        %1568 = vrot.lane.b32.xlu0 %v1477, 121
        %v1569 = vpop.permute.xlu0 %1568
        %v1574 = vadd.f32 %v1558, %v1563
        %v1575 = vadd.f32 %v1559, %v1565
        %v1576 = vadd.f32 %v1560, %v1567
        %v1577 = vadd.f32 %v1561, %v1569
        %1578 = vrot.lane.b32.xlu0 %v1450, 120
        %v1579 = vpop.permute.xlu0 %1578
        %1580 = vrot.lane.b32.xlu0 %v1451, 120
        %v1581 = vpop.permute.xlu0 %1580
        %1582 = vrot.lane.b32.xlu0 %v1452, 120
        %v1583 = vpop.permute.xlu0 %1582
        %1584 = vrot.lane.b32.xlu0 %v1453, 120
        %v1585 = vpop.permute.xlu0 %1584
        %v1590 = vadd.f32 %v1574, %v1579
        %v1591 = vadd.f32 %v1575, %v1581
        %v1592 = vadd.f32 %v1576, %v1583
        %v1593 = vadd.f32 %v1577, %v1585
        %1594 = vrot.lane.b32.xlu0 %v1426, 119
        %v1595 = vpop.permute.xlu0 %1594
        %1596 = vrot.lane.b32.xlu0 %v1427, 119
        %v1597 = vpop.permute.xlu0 %1596
        %1598 = vrot.lane.b32.xlu0 %v1428, 119
        %v1599 = vpop.permute.xlu0 %1598
        %1600 = vrot.lane.b32.xlu0 %v1429, 119
        %v1601 = vpop.permute.xlu0 %1600
        %v1606 = vadd.f32 %v1590, %v1595
        %v1607 = vadd.f32 %v1591, %v1597
        %v1608 = vadd.f32 %v1592, %v1599
        %v1609 = vadd.f32 %v1593, %v1601
        %1614 = vrot.lane.b32.xlu0 %v1422, 118
        %v1615 = vpop.permute.xlu0 %1614
        %1616 = vrot.lane.b32.xlu0 %v1423, 118
        %v1617 = vpop.permute.xlu0 %1616
        %1618 = vrot.lane.b32.xlu0 %v1424, 118
        %v1619 = vpop.permute.xlu0 %1618
        %1620 = vrot.lane.b32.xlu0 %v1425, 118
        %v1621 = vpop.permute.xlu0 %1620
        %v1626 = vadd.f32 %v1606, %v1615
        %v1627 = vadd.f32 %v1607, %v1617
        %v1628 = vadd.f32 %v1608, %v1619
        %v1629 = vadd.f32 %v1609, %v1621
        %1630 = vst.msk [vmem:[#allocation3 + $0x5] sm:$0xff] %vm309, %v1626
        %1631 = vst.msk [vmem:[#allocation3 + $0xd] sm:$0xff] %vm309, %v1627
        %1632 = vst.msk [vmem:[#allocation3 + $0x15] sm:$0xff] %vm309, %v1628
        %1633 = vst.msk [vmem:[#allocation3 + $0x1d] sm:$0xff] %vm309, %v1629
        %v1634 = vld [vmem:[#allocation3] sm:$0xff]
        %v1635 = vld [vmem:[#allocation3 + $0x8] sm:$0xff]
        %v1636 = vld [vmem:[#allocation3 + $0x10] sm:$0xff]
        %v1637 = vld [vmem:[#allocation3 + $0x18] sm:$0xff]
        %v1638 = vmul.f32 %v1634, 0.0010283801
        %v1639 = vmul.f32 %v1635, 0.0010283801
        %v1640 = vmul.f32 %v1636, 0.0010283801
        %v1641 = vmul.f32 %v1637, 0.0010283801
        %v1642 = vld [vmem:[#allocation3 + $0x1] sm:$0xff]
        %v1643 = vld [vmem:[#allocation3 + $0x9] sm:$0xff]
        %v1644 = vld [vmem:[#allocation3 + $0x11] sm:$0xff]
        %v1645 = vld [vmem:[#allocation3 + $0x19] sm:$0xff]
        %v1646 = vmul.f32 %v1642, 0.007598758
        %v1647 = vmul.f32 %v1643, 0.007598758
        %v1648 = vmul.f32 %v1644, 0.007598758
        %v1649 = vmul.f32 %v1645, 0.007598758
        %v1650 = vadd.f32 %v1638, %v1646
        %v1651 = vadd.f32 %v1639, %v1647
        %v1652 = vadd.f32 %v1640, %v1648
        %v1653 = vadd.f32 %v1641, %v1649
        %v1654 = vld [vmem:[#allocation3 + $0x2] sm:$0xff]
        %v1655 = vld [vmem:[#allocation3 + $0xa] sm:$0xff]
        %v1656 = vld [vmem:[#allocation3 + $0x12] sm:$0xff]
        %v1657 = vld [vmem:[#allocation3 + $0x1a] sm:$0xff]
        %v1658 = vmul.f32 %v1654, 0.036000773
        %v1659 = vmul.f32 %v1655, 0.036000773
        %v1660 = vmul.f32 %v1656, 0.036000773
        %v1661 = vmul.f32 %v1657, 0.036000773
        %v1662 = vadd.f32 %v1650, %v1658
        %v1663 = vadd.f32 %v1651, %v1659
        %v1664 = vadd.f32 %v1652, %v1660
        %v1665 = vadd.f32 %v1653, %v1661
        %v1666 = vld [vmem:[#allocation3 + $0x3] sm:$0xff]
        %v1667 = vld [vmem:[#allocation3 + $0xb] sm:$0xff]
        %v1668 = vld [vmem:[#allocation3 + $0x13] sm:$0xff]
        %v1669 = vld [vmem:[#allocation3 + $0x1b] sm:$0xff]
        %v1670 = vmul.f32 %v1666, 0.10936069
        %v1671 = vmul.f32 %v1667, 0.10936069
        %v1672 = vmul.f32 %v1668, 0.10936069
        %v1673 = vmul.f32 %v1669, 0.10936069
        %v1674 = vadd.f32 %v1662, %v1670
        %v1675 = vadd.f32 %v1663, %v1671
        %v1676 = vadd.f32 %v1664, %v1672
        %v1677 = vadd.f32 %v1665, %v1673
        %v1678 = vld [vmem:[#allocation3 + $0x4] sm:$0xff]
        %v1679 = vld [vmem:[#allocation3 + $0xc] sm:$0xff]
        %v1680 = vld [vmem:[#allocation3 + $0x14] sm:$0xff]
        %v1681 = vld [vmem:[#allocation3 + $0x1c] sm:$0xff]
        %v1682 = vmul.f32 %v1678, 0.21300554
        %v1683 = vmul.f32 %v1679, 0.21300554
        %v1684 = vmul.f32 %v1680, 0.21300554
        %v1685 = vmul.f32 %v1681, 0.21300554
        %v1686 = vadd.f32 %v1674, %v1682
        %v1687 = vadd.f32 %v1675, %v1683
        %v1688 = vadd.f32 %v1676, %v1684
        %v1689 = vadd.f32 %v1677, %v1685
        %v1690 = vld [vmem:[#allocation3 + $0x5] sm:$0xff]
        %v1691 = vld [vmem:[#allocation3 + $0xd] sm:$0xff]
        %v1692 = vld [vmem:[#allocation3 + $0x15] sm:$0xff]
        %v1693 = vld [vmem:[#allocation3 + $0x1d] sm:$0xff]
        %v1694 = vmul.f32 %v1690, 0.26601171
        %v1695 = vmul.f32 %v1691, 0.26601171
        %v1696 = vmul.f32 %v1692, 0.26601171
        %v1697 = vmul.f32 %v1693, 0.26601171
        %v1698 = vadd.f32 %v1686, %v1694
        %v1699 = vadd.f32 %v1687, %v1695
        %v1700 = vadd.f32 %v1688, %v1696
        %v1701 = vadd.f32 %v1689, %v1697
        %v1702 = vld [vmem:[#allocation3 + $0x6] sm:$0xff]
        %v1703 = vld [vmem:[#allocation3 + $0xe] sm:$0xff]
        %v1704 = vld [vmem:[#allocation3 + $0x16] sm:$0xff]
        %v1705 = vld [vmem:[#allocation3 + $0x1e] sm:$0xff]
        %v1706 = vmul.f32 %v1702, 0.21300554
        %v1707 = vmul.f32 %v1703, 0.21300554
        %v1708 = vmul.f32 %v1704, 0.21300554
        %v1709 = vmul.f32 %v1705, 0.21300554
        %v1710 = vadd.f32 %v1698, %v1706
        %v1711 = vadd.f32 %v1699, %v1707
        %v1712 = vadd.f32 %v1700, %v1708
        %v1713 = vadd.f32 %v1701, %v1709
        %v1714 = vld [vmem:[#allocation3 + $0x7] sm:$0xff]
        %v1715 = vld [vmem:[#allocation3 + $0xf] sm:$0xff]
        %v1716 = vld [vmem:[#allocation3 + $0x17] sm:$0xff]
        %v1717 = vld [vmem:[#allocation3 + $0x1f] sm:$0xff]
        %v1718 = vmul.f32 %v1714, 0.10936069
        %v1719 = vmul.f32 %v1715, 0.10936069
        %v1720 = vmul.f32 %v1716, 0.10936069
        %v1721 = vmul.f32 %v1717, 0.10936069
        %v1722 = vadd.f32 %v1710, %v1718
        %v1723 = vadd.f32 %v1711, %v1719
        %v1724 = vadd.f32 %v1712, %v1720
        %v1725 = vadd.f32 %v1713, %v1721
        %v1726 = vld [vmem:[#allocation3 + $0x20] sm:$0xff]
        %v1727 = vmul.f32 %v1635, 0.036000773
        %v1728 = vmul.f32 %v1636, 0.036000773
        %v1729 = vmul.f32 %v1637, 0.036000773
        %v1730 = vmul.f32 %v1726, 0.036000773
        %v1731 = vadd.f32 %v1722, %v1727
        %v1732 = vadd.f32 %v1723, %v1728
        %v1733 = vadd.f32 %v1724, %v1729
        %v1734 = vadd.f32 %v1725, %v1730
        %v1735 = vld [vmem:[#allocation3 + $0x21] sm:$0xff]
        %v1736 = vmul.f32 %v1735, 0.007598758
        %v1737 = vadd.f32 %v1731, %v1647
        %v1738 = vadd.f32 %v1732, %v1648
        %v1739 = vadd.f32 %v1733, %v1649
        %v1740 = vadd.f32 %v1734, %v1736
        %v1741 = vld [vmem:[#allocation3 + $0x22] sm:$0xff]
        %v1742 = vmul.f32 %v1655, 0.0010283801
        %v1743 = vmul.f32 %v1656, 0.0010283801
        %v1744 = vmul.f32 %v1657, 0.0010283801
        %v1745 = vmul.f32 %v1741, 0.0010283801
        %v1746 = vadd.f32 %v1737, %v1742
        %v1747 = vadd.f32 %v1738, %v1743
        %v1748 = vadd.f32 %v1739, %v1744
        %v1749 = vadd.f32 %v1740, %v1745
        %v1750 = vmul.f32 %v321, %v325
        %v1751 = vmul.f32 %v322, %v326
        %v1752 = vmul.f32 %v323, %v327
        %v1753 = vmul.f32 %v324, %v328
        %1758 = vrot.lane.b32.xlu0 %v1750, 5
        %v1759 = vpop.permute.xlu0 %1758
        %1760 = vrot.lane.b32.xlu0 %v1751, 5
        %v1761 = vpop.permute.xlu0 %1760
        %1762 = vrot.lane.b32.xlu0 %v1752, 5
        %v1763 = vpop.permute.xlu0 %1762
        %1764 = vrot.lane.b32.xlu0 %v1753, 5
        %v1765 = vpop.permute.xlu0 %1764
        %1770 = vst.msk [vmem:[#allocation2] sm:$0xff] %vm349, %v1759
        %1771 = vst.msk [vmem:[#allocation2 + $0x8] sm:$0xff] %vm349, %v1761
        %1772 = vst.msk [vmem:[#allocation2 + $0x10] sm:$0xff] %vm349, %v1763
        %1773 = vst.msk [vmem:[#allocation2 + $0x18] sm:$0xff] %vm349, %v1765
        %v1774 = vld [vmem:[#allocation2] sm:$0xff]
        %v1775 = vld [vmem:[#allocation2 + $0x8] sm:$0xff]
        %v1776 = vld [vmem:[#allocation2 + $0x10] sm:$0xff]
        %v1777 = vld [vmem:[#allocation2 + $0x18] sm:$0xff]
        %v1778 = vmul.f32 %v1774, 0.0010283801
        %v1779 = vmul.f32 %v1775, 0.0010283801
        %v1780 = vmul.f32 %v1776, 0.0010283801
        %v1781 = vmul.f32 %v1777, 0.0010283801
        %v1782 = vmul.f32 %v1774, 0.007598758
        %v1783 = vmul.f32 %v1775, 0.007598758
        %v1784 = vmul.f32 %v1776, 0.007598758
        %v1785 = vmul.f32 %v1777, 0.007598758
        %1790 = vrot.lane.b32.xlu0 %v1782, 127
        %v1791 = vpop.permute.xlu0 %1790
        %1792 = vrot.lane.b32.xlu0 %v1783, 127
        %v1793 = vpop.permute.xlu0 %1792
        %1794 = vrot.lane.b32.xlu0 %v1784, 127
        %v1795 = vpop.permute.xlu0 %1794
        %1796 = vrot.lane.b32.xlu0 %v1785, 127
        %v1797 = vpop.permute.xlu0 %1796
        %v1802 = vadd.f32 %v1778, %v1791
        %v1803 = vadd.f32 %v1779, %v1793
        %v1804 = vadd.f32 %v1780, %v1795
        %v1805 = vadd.f32 %v1781, %v1797
        %v1806 = vmul.f32 %v1774, 0.036000773
        %v1807 = vmul.f32 %v1775, 0.036000773
        %v1808 = vmul.f32 %v1776, 0.036000773
        %v1809 = vmul.f32 %v1777, 0.036000773
        %1814 = vrot.lane.b32.xlu0 %v1806, 126
        %v1815 = vpop.permute.xlu0 %1814
        %1816 = vrot.lane.b32.xlu0 %v1807, 126
        %v1817 = vpop.permute.xlu0 %1816
        %1818 = vrot.lane.b32.xlu0 %v1808, 126
        %v1819 = vpop.permute.xlu0 %1818
        %1820 = vrot.lane.b32.xlu0 %v1809, 126
        %v1821 = vpop.permute.xlu0 %1820
        %v1826 = vadd.f32 %v1802, %v1815
        %v1827 = vadd.f32 %v1803, %v1817
        %v1828 = vadd.f32 %v1804, %v1819
        %v1829 = vadd.f32 %v1805, %v1821
        %v1830 = vmul.f32 %v1774, 0.10936069
        %v1831 = vmul.f32 %v1775, 0.10936069
        %v1832 = vmul.f32 %v1776, 0.10936069
        %v1833 = vmul.f32 %v1777, 0.10936069
        %1838 = vrot.lane.b32.xlu0 %v1830, 125
        %v1839 = vpop.permute.xlu0 %1838
        %1840 = vrot.lane.b32.xlu0 %v1831, 125
        %v1841 = vpop.permute.xlu0 %1840
        %1842 = vrot.lane.b32.xlu0 %v1832, 125
        %v1843 = vpop.permute.xlu0 %1842
        %1844 = vrot.lane.b32.xlu0 %v1833, 125
        %v1845 = vpop.permute.xlu0 %1844
        %v1850 = vadd.f32 %v1826, %v1839
        %v1851 = vadd.f32 %v1827, %v1841
        %v1852 = vadd.f32 %v1828, %v1843
        %v1853 = vadd.f32 %v1829, %v1845
        %v1854 = vmul.f32 %v1774, 0.21300554
        %v1855 = vmul.f32 %v1775, 0.21300554
        %v1856 = vmul.f32 %v1776, 0.21300554
        %v1857 = vmul.f32 %v1777, 0.21300554
        %1862 = vrot.lane.b32.xlu0 %v1854, 124
        %v1863 = vpop.permute.xlu0 %1862
        %1864 = vrot.lane.b32.xlu0 %v1855, 124
        %v1865 = vpop.permute.xlu0 %1864
        %1866 = vrot.lane.b32.xlu0 %v1856, 124
        %v1867 = vpop.permute.xlu0 %1866
        %1868 = vrot.lane.b32.xlu0 %v1857, 124
        %v1869 = vpop.permute.xlu0 %1868
        %v1874 = vadd.f32 %v1850, %v1863
        %v1875 = vadd.f32 %v1851, %v1865
        %v1876 = vadd.f32 %v1852, %v1867
        %v1877 = vadd.f32 %v1853, %v1869
        %v1878 = vmul.f32 %v1774, 0.26601171
        %v1879 = vmul.f32 %v1775, 0.26601171
        %v1880 = vmul.f32 %v1776, 0.26601171
        %v1881 = vmul.f32 %v1777, 0.26601171
        %1886 = vrot.lane.b32.xlu0 %v1878, 123
        %v1887 = vpop.permute.xlu0 %1886
        %1888 = vrot.lane.b32.xlu0 %v1879, 123
        %v1889 = vpop.permute.xlu0 %1888
        %1890 = vrot.lane.b32.xlu0 %v1880, 123
        %v1891 = vpop.permute.xlu0 %1890
        %1892 = vrot.lane.b32.xlu0 %v1881, 123
        %v1893 = vpop.permute.xlu0 %1892
        %v1898 = vadd.f32 %v1874, %v1887
        %v1899 = vadd.f32 %v1875, %v1889
        %v1900 = vadd.f32 %v1876, %v1891
        %v1901 = vadd.f32 %v1877, %v1893
        %1902 = vrot.lane.b32.xlu0 %v1854, 122
        %v1903 = vpop.permute.xlu0 %1902
        %1904 = vrot.lane.b32.xlu0 %v1855, 122
        %v1905 = vpop.permute.xlu0 %1904
        %1906 = vrot.lane.b32.xlu0 %v1856, 122
        %v1907 = vpop.permute.xlu0 %1906
        %1908 = vrot.lane.b32.xlu0 %v1857, 122
        %v1909 = vpop.permute.xlu0 %1908
        %v1914 = vadd.f32 %v1898, %v1903
        %v1915 = vadd.f32 %v1899, %v1905
        %v1916 = vadd.f32 %v1900, %v1907
        %v1917 = vadd.f32 %v1901, %v1909
        %1918 = vrot.lane.b32.xlu0 %v1830, 121
        %v1919 = vpop.permute.xlu0 %1918
        %1920 = vrot.lane.b32.xlu0 %v1831, 121
        %v1921 = vpop.permute.xlu0 %1920
        %1922 = vrot.lane.b32.xlu0 %v1832, 121
        %v1923 = vpop.permute.xlu0 %1922
        %1924 = vrot.lane.b32.xlu0 %v1833, 121
        %v1925 = vpop.permute.xlu0 %1924
        %v1930 = vadd.f32 %v1914, %v1919
        %v1931 = vadd.f32 %v1915, %v1921
        %v1932 = vadd.f32 %v1916, %v1923
        %v1933 = vadd.f32 %v1917, %v1925
        %1934 = vrot.lane.b32.xlu0 %v1806, 120
        %v1935 = vpop.permute.xlu0 %1934
        %1936 = vrot.lane.b32.xlu0 %v1807, 120
        %v1937 = vpop.permute.xlu0 %1936
        %1938 = vrot.lane.b32.xlu0 %v1808, 120
        %v1939 = vpop.permute.xlu0 %1938
        %1940 = vrot.lane.b32.xlu0 %v1809, 120
        %v1941 = vpop.permute.xlu0 %1940
        %v1946 = vadd.f32 %v1930, %v1935
        %v1947 = vadd.f32 %v1931, %v1937
        %v1948 = vadd.f32 %v1932, %v1939
        %v1949 = vadd.f32 %v1933, %v1941
        %1950 = vrot.lane.b32.xlu0 %v1782, 119
        %v1951 = vpop.permute.xlu0 %1950
        %1952 = vrot.lane.b32.xlu0 %v1783, 119
        %v1953 = vpop.permute.xlu0 %1952
        %1954 = vrot.lane.b32.xlu0 %v1784, 119
        %v1955 = vpop.permute.xlu0 %1954
        %1956 = vrot.lane.b32.xlu0 %v1785, 119
        %v1957 = vpop.permute.xlu0 %1956
        %v1962 = vadd.f32 %v1946, %v1951
        %v1963 = vadd.f32 %v1947, %v1953
        %v1964 = vadd.f32 %v1948, %v1955
        %v1965 = vadd.f32 %v1949, %v1957
        %1970 = vrot.lane.b32.xlu0 %v1778, 118
        %v1971 = vpop.permute.xlu0 %1970
        %1972 = vrot.lane.b32.xlu0 %v1779, 118
        %v1973 = vpop.permute.xlu0 %1972
        %1974 = vrot.lane.b32.xlu0 %v1780, 118
        %v1975 = vpop.permute.xlu0 %1974
        %1976 = vrot.lane.b32.xlu0 %v1781, 118
        %v1977 = vpop.permute.xlu0 %1976
        %v1982 = vadd.f32 %v1962, %v1971
        %v1983 = vadd.f32 %v1963, %v1973
        %v1984 = vadd.f32 %v1964, %v1975
        %v1985 = vadd.f32 %v1965, %v1977
        %1986 = vst.msk [vmem:[#allocation3 + $0x5] sm:$0xff] %vm309, %v1982
        %1987 = vst.msk [vmem:[#allocation3 + $0xd] sm:$0xff] %vm309, %v1983
        %1988 = vst.msk [vmem:[#allocation3 + $0x15] sm:$0xff] %vm309, %v1984
        %1989 = vst.msk [vmem:[#allocation3 + $0x1d] sm:$0xff] %vm309, %v1985
        %v1990 = vld [vmem:[#allocation3] sm:$0xff]
        %v1991 = vld [vmem:[#allocation3 + $0x8] sm:$0xff]
        %v1992 = vld [vmem:[#allocation3 + $0x10] sm:$0xff]
        %v1993 = vld [vmem:[#allocation3 + $0x18] sm:$0xff]
        %v1994 = vmul.f32 %v1990, 0.0010283801
        %v1995 = vmul.f32 %v1991, 0.0010283801
        %v1996 = vmul.f32 %v1992, 0.0010283801
        %v1997 = vmul.f32 %v1993, 0.0010283801
        %v1998 = vld [vmem:[#allocation3 + $0x1] sm:$0xff]
        %v1999 = vld [vmem:[#allocation3 + $0x9] sm:$0xff]
        %v2000 = vld [vmem:[#allocation3 + $0x11] sm:$0xff]
        %v2001 = vld [vmem:[#allocation3 + $0x19] sm:$0xff]
        %v2002 = vmul.f32 %v1998, 0.007598758
        %v2003 = vmul.f32 %v1999, 0.007598758
        %v2004 = vmul.f32 %v2000, 0.007598758
        %v2005 = vmul.f32 %v2001, 0.007598758
        %v2006 = vadd.f32 %v1994, %v2002
        %v2007 = vadd.f32 %v1995, %v2003
        %v2008 = vadd.f32 %v1996, %v2004
        %v2009 = vadd.f32 %v1997, %v2005
        %v2010 = vld [vmem:[#allocation3 + $0x2] sm:$0xff]
        %v2011 = vld [vmem:[#allocation3 + $0xa] sm:$0xff]
        %v2012 = vld [vmem:[#allocation3 + $0x12] sm:$0xff]
        %v2013 = vld [vmem:[#allocation3 + $0x1a] sm:$0xff]
        %v2014 = vmul.f32 %v2010, 0.036000773
        %v2015 = vmul.f32 %v2011, 0.036000773
        %v2016 = vmul.f32 %v2012, 0.036000773
        %v2017 = vmul.f32 %v2013, 0.036000773
        %v2018 = vadd.f32 %v2006, %v2014
        %v2019 = vadd.f32 %v2007, %v2015
        %v2020 = vadd.f32 %v2008, %v2016
        %v2021 = vadd.f32 %v2009, %v2017
        %v2022 = vld [vmem:[#allocation3 + $0x3] sm:$0xff]
        %v2023 = vld [vmem:[#allocation3 + $0xb] sm:$0xff]
        %v2024 = vld [vmem:[#allocation3 + $0x13] sm:$0xff]
        %v2025 = vld [vmem:[#allocation3 + $0x1b] sm:$0xff]
        %v2026 = vmul.f32 %v2022, 0.10936069
        %v2027 = vmul.f32 %v2023, 0.10936069
        %v2028 = vmul.f32 %v2024, 0.10936069
        %v2029 = vmul.f32 %v2025, 0.10936069
        %v2030 = vadd.f32 %v2018, %v2026
        %v2031 = vadd.f32 %v2019, %v2027
        %v2032 = vadd.f32 %v2020, %v2028
        %v2033 = vadd.f32 %v2021, %v2029
        %v2034 = vld [vmem:[#allocation3 + $0x4] sm:$0xff]
        %v2035 = vld [vmem:[#allocation3 + $0xc] sm:$0xff]
        %v2036 = vld [vmem:[#allocation3 + $0x14] sm:$0xff]
        %v2037 = vld [vmem:[#allocation3 + $0x1c] sm:$0xff]
        %v2038 = vmul.f32 %v2034, 0.21300554
        %v2039 = vmul.f32 %v2035, 0.21300554
        %v2040 = vmul.f32 %v2036, 0.21300554
        %v2041 = vmul.f32 %v2037, 0.21300554
        %v2042 = vadd.f32 %v2030, %v2038
        %v2043 = vadd.f32 %v2031, %v2039
        %v2044 = vadd.f32 %v2032, %v2040
        %v2045 = vadd.f32 %v2033, %v2041
        %v2046 = vld [vmem:[#allocation3 + $0x5] sm:$0xff]
        %v2047 = vld [vmem:[#allocation3 + $0xd] sm:$0xff]
        %v2048 = vld [vmem:[#allocation3 + $0x15] sm:$0xff]
        %v2049 = vld [vmem:[#allocation3 + $0x1d] sm:$0xff]
        %v2050 = vmul.f32 %v2046, 0.26601171
        %v2051 = vmul.f32 %v2047, 0.26601171
        %v2052 = vmul.f32 %v2048, 0.26601171
        %v2053 = vmul.f32 %v2049, 0.26601171
        %v2054 = vadd.f32 %v2042, %v2050
        %v2055 = vadd.f32 %v2043, %v2051
        %v2056 = vadd.f32 %v2044, %v2052
        %v2057 = vadd.f32 %v2045, %v2053
        %v2058 = vld [vmem:[#allocation3 + $0x6] sm:$0xff]
        %v2059 = vld [vmem:[#allocation3 + $0xe] sm:$0xff]
        %v2060 = vld [vmem:[#allocation3 + $0x16] sm:$0xff]
        %v2061 = vld [vmem:[#allocation3 + $0x1e] sm:$0xff]
        %v2062 = vmul.f32 %v2058, 0.21300554
        %v2063 = vmul.f32 %v2059, 0.21300554
        %v2064 = vmul.f32 %v2060, 0.21300554
        %v2065 = vmul.f32 %v2061, 0.21300554
        %v2066 = vadd.f32 %v2054, %v2062
        %v2067 = vadd.f32 %v2055, %v2063
        %v2068 = vadd.f32 %v2056, %v2064
        %v2069 = vadd.f32 %v2057, %v2065
        %v2070 = vld [vmem:[#allocation3 + $0x7] sm:$0xff]
        %v2071 = vld [vmem:[#allocation3 + $0xf] sm:$0xff]
        %v2072 = vld [vmem:[#allocation3 + $0x17] sm:$0xff]
        %v2073 = vld [vmem:[#allocation3 + $0x1f] sm:$0xff]
        %v2074 = vmul.f32 %v2070, 0.10936069
        %v2075 = vmul.f32 %v2071, 0.10936069
        %v2076 = vmul.f32 %v2072, 0.10936069
        %v2077 = vmul.f32 %v2073, 0.10936069
        %v2078 = vadd.f32 %v2066, %v2074
        %v2079 = vadd.f32 %v2067, %v2075
        %v2080 = vadd.f32 %v2068, %v2076
        %v2081 = vadd.f32 %v2069, %v2077
        %v2082 = vld [vmem:[#allocation3 + $0x20] sm:$0xff]
        %v2083 = vmul.f32 %v1991, 0.036000773
        %v2084 = vmul.f32 %v1992, 0.036000773
        %v2085 = vmul.f32 %v1993, 0.036000773
        %v2086 = vmul.f32 %v2082, 0.036000773
        %v2087 = vadd.f32 %v2078, %v2083
        %v2088 = vadd.f32 %v2079, %v2084
        %v2089 = vadd.f32 %v2080, %v2085
        %v2090 = vadd.f32 %v2081, %v2086
        %v2091 = vld [vmem:[#allocation3 + $0x21] sm:$0xff]
        %v2092 = vmul.f32 %v2091, 0.007598758
        %v2093 = vadd.f32 %v2087, %v2003
        %v2094 = vadd.f32 %v2088, %v2004
        %v2095 = vadd.f32 %v2089, %v2005
        %v2096 = vadd.f32 %v2090, %v2092
        %v2097 = vld [vmem:[#allocation3 + $0x22] sm:$0xff]
        %v2098 = vmul.f32 %v2011, 0.0010283801
        %v2099 = vmul.f32 %v2012, 0.0010283801
        %v2100 = vmul.f32 %v2013, 0.0010283801
        %v2101 = vmul.f32 %v2097, 0.0010283801
        %v2102 = vadd.f32 %v2093, %v2098
        %v2103 = vadd.f32 %v2094, %v2099
        %v2104 = vadd.f32 %v2095, %v2100
        %v2105 = vadd.f32 %v2096, %v2101
        %v2106 = vmul.f32 %v682, %v682
        %v2107 = vmul.f32 %v683, %v683
        %v2108 = vmul.f32 %v684, %v684
        %v2109 = vmul.f32 %v685, %v685
        %v2110 = vmul.f32 %v1034, %v1034
        %v2111 = vmul.f32 %v1035, %v1035
        %v2112 = vmul.f32 %v1036, %v1036
        %v2113 = vmul.f32 %v1037, %v1037
        %v2114 = vmul.f32 %v682, %v1034
        %v2115 = vmul.f32 %v683, %v1035
        %v2116 = vmul.f32 %v684, %v1036
        %v2117 = vmul.f32 %v685, %v1037
        %v2118 = vsub.f32 %v1390, %v2106
        %v2119 = vsub.f32 %v1391, %v2107
        %v2120 = vsub.f32 %v1392, %v2108
        %v2121 = vsub.f32 %v1393, %v2109
        %v2122 = vsub.f32 %v1746, %v2110
        %v2123 = vsub.f32 %v1747, %v2111
        %v2124 = vsub.f32 %v1748, %v2112
        %v2125 = vsub.f32 %v1749, %v2113
        %v2126 = vsub.f32 %v2102, %v2114
        %v2127 = vsub.f32 %v2103, %v2115
        %v2128 = vsub.f32 %v2104, %v2116
        %v2129 = vsub.f32 %v2105, %v2117
        %v2130 = vmul.f32 %v2114, 2.0
        %v2131 = vmul.f32 %v2115, 2.0
        %v2132 = vmul.f32 %v2116, 2.0
        %v2133 = vmul.f32 %v2117, 2.0
        %v2134 = vadd.f32 %v2130, 0.0001
        %v2135 = vadd.f32 %v2131, 0.0001
        %v2136 = vadd.f32 %v2132, 0.0001
        %v2137 = vadd.f32 %v2133, 0.0001
        %v2138 = vmul.f32 %v2126, 2.0
        %v2139 = vmul.f32 %v2127, 2.0
        %v2140 = vmul.f32 %v2128, 2.0
        %v2141 = vmul.f32 %v2129, 2.0
        %v2142 = vadd.f32 %v2138, 0.0009
        %v2143 = vadd.f32 %v2139, 0.0009
        %v2144 = vadd.f32 %v2140, 0.0009
        %v2145 = vadd.f32 %v2141, 0.0009
        %v2146 = vmul.f32 %v2134, %v2142
        %v2147 = vmul.f32 %v2135, %v2143
        %v2148 = vmul.f32 %v2136, %v2144
        %v2149 = vmul.f32 %v2137, %v2145
        %v2150 = vadd.f32 %v2106, %v2110
        %v2151 = vadd.f32 %v2107, %v2111
        %v2152 = vadd.f32 %v2108, %v2112
        %v2153 = vadd.f32 %v2109, %v2113
        %v2154 = vadd.f32 %v2150, 0.0001
        %v2155 = vadd.f32 %v2151, 0.0001
        %v2156 = vadd.f32 %v2152, 0.0001
        %v2157 = vadd.f32 %v2153, 0.0001
        %v2158 = vadd.f32 %v2118, %v2122
        %v2159 = vadd.f32 %v2119, %v2123
        %v2160 = vadd.f32 %v2120, %v2124
        %v2161 = vadd.f32 %v2121, %v2125
        %v2162 = vadd.f32 %v2158, 0.0009
        %v2163 = vadd.f32 %v2159, 0.0009
        %v2164 = vadd.f32 %v2160, 0.0009
        %v2165 = vadd.f32 %v2161, 0.0009
        %v2166 = vmul.f32 %v2154, %v2162
        %v2167 = vmul.f32 %v2155, %v2163
        %v2168 = vmul.f32 %v2156, %v2164
        %v2169 = vmul.f32 %v2157, %v2165
        %v2170 = vrcp.pop %v2166
        %v2171 = vrcp.pop %v2167
        %v2172 = vrcp.pop %v2168
        %v2173 = vrcp.pop %v2169
        %v2174 = vmul.f32 %v2146, %v2170
        %v2175 = vmul.f32 %v2147, %v2171
        %v2176 = vmul.f32 %v2148, %v2172
        %v2177 = vmul.f32 %v2149, %v2173
        %v2178 = vsel %vm309, %v2174, 0.0
        %v2179 = vsel %vm309, %v2175, 0.0
        %v2180 = vadd.f32 %v2178, %v2179
        %v2181 = vsel %vm309, %v2176, 0.0
        %v2182 = vadd.f32 %v2180, %v2181
        %v2183 = vsel %vm309, %v2177, 0.0
        %v2184 = vadd.f32 %v2182, %v2183
        %2185 = vadd.xlane.f32.xlu0 %v2184
        %v2186 = vpop.xlane.xlu0 %2185
        %v2187 = vrot.slane %v2186, 4
        %v2188 = vadd.f32 %v2186, %v2187
        %v2189 = vrot.slane %v2188, 2
        %v2190 = vadd.f32 %v2188, %v2189
        %v2191 = vrot.slane %v2190, 1
        %v2192 = vadd.f32 %v2190, %v2191
        %s2193 = vtos %v2192
        %v2194 = vsub.f32 %v329, %v325
        %v2195 = vsub.f32 %v330, %v326
        %v2196 = vsub.f32 %v331, %v327
        %v2197 = vsub.f32 %v332, %v328
        %v2198 = vand.u32 2147483647, %v2194
        %v2199 = vand.u32 2147483647, %v2195
        %v2200 = vand.u32 2147483647, %v2196
        %v2201 = vand.u32 2147483647, %v2197
        %v2202 = vsel %vm309, %v2198, 0.0
        %v2203 = vsel %vm309, %v2199, 0.0
        %v2204 = vadd.f32 %v2202, %v2203
        %v2205 = vsel %vm309, %v2200, 0.0
        %v2206 = vadd.f32 %v2204, %v2205
        %v2207 = vsel %vm309, %v2201, 0.0
        %v2208 = vadd.f32 %v2206, %v2207
        %2209 = vadd.xlane.f32.xlu0 %v2208
        %v2210 = vpop.xlane.xlu0 %2209
        %v2211 = vrot.slane %v2210, 4
        %v2212 = vadd.f32 %v2210, %v2211
        %v2213 = vrot.slane %v2212, 2
        %v2214 = vadd.f32 %v2212, %v2213
        %v2215 = vrot.slane %v2214, 1
        %v2216 = vadd.f32 %v2214, %v2215
        %s2217 = vtos %v2216
        %v2218 = vstv %s2193
        %2219 = vst [vmem:[%s296] sm:$0xff] %v2218
        %v2220 = vstv %s2217
        %2221 = vst [vmem:[%s303] sm:$0xff] %v2220
        %s2222 = sand.u32 %s114, 1
        %s2223 = scalar_lea.sflag [#allocation6], %s2222
        %s2224 = sand.u32 %s114, 1
        %s2225 = smul.addr %s2224, 8
        %s2226 = scalar_lea.vmem [#allocation10], %s2225
        %s2227 = sand.u32 %s140, 1
        %s2228 = scalar_lea.sflag [#allocation12], %s2227
        %s2229 = sand.u32 %s140, 1
        %s2230 = smul.addr %s2229, 8
        %s2231 = scalar_lea.vmem [#allocation11], %s2230
        // Predicated region
        $region45: #{tpu_custom_call.1} parent=31 // pred_check
          %p2232 = pneg %p124
        $region46: #{tpu_custom_call.1} parent=31 // pred_check_branch
          %2234 = sbr.rel (%p2232) target = $region48
        $region47: #{tpu_custom_call.1} parent=31 // pred_region
          %s2236 = ssub.s32 128, 128
          %2237 = vsyncadd %s2223, %s2236
          %s2238 = smul.addr %s28, 128
          %s2239 = scalar_lea.hbm %s3, %s2238
          %s2241 = sshll.u32 %s2226, 4
          %s2242 = int_to_ptr.vmem [resolvable:$true] %s2241
          %2244 = dma.vmem_to_hbm [thread:$0]  %s2242, 128, %s2239, %s2223
        $region48: #{tpu_custom_call.1} parent=31 // pred_fallthru
          _
        // Predicated region
        $region49: #{tpu_custom_call.1} parent=31 // pred_check
          %p2245 = pneg %p150
        $region50: #{tpu_custom_call.1} parent=31 // pred_check_branch
          %2247 = sbr.rel (%p2245) target = $region52
        $region51: #{tpu_custom_call.1} parent=31 // pred_region
          %s2249 = ssub.s32 128, 128
          %2250 = vsyncadd %s2228, %s2249
          %s2251 = smul.addr %s28, 128
          %s2252 = scalar_lea.hbm %s4, %s2251
          %s2254 = sshll.u32 %s2231, 4
          %s2255 = int_to_ptr.vmem [resolvable:$true] %s2254
          %2257 = dma.vmem_to_hbm [thread:$0]  %s2255, 128, %s2252, %s2228
        $region52: #{tpu_custom_call.1} parent=31 // pred_fallthru
          _
      $region32: #{tpu_custom_call.1} parent=5 // pred_fallthru
        _
      %p2258 = scmp.le.s32.totalorder 2, %s23
      // Predicated region
      $region53: #{tpu_custom_call.1} parent=5 // pred_check
        %p2259 = pneg %p2258
      $region54: #{tpu_custom_call.1} parent=5 // pred_check_branch
        %2261 = sbr.rel (%p2259) target = $region56
      $region55: #{tpu_custom_call.1} parent=5 // pred_region
        %s2262 = ssub.s32 %s23, 2
        // Predicated region
        $region57: #{tpu_custom_call.1} parent=55 // pred_check
          %p2263 = pneg %p130
        $region58: #{tpu_custom_call.1} parent=55 // pred_check_branch
          %2265 = sbr.rel (%p2263) target = $region60
        $region59: #{tpu_custom_call.1} parent=55 // pred_region
          %s2266 = sand.u32 %s115, 1
          %s2267 = scalar_lea.sflag [#allocation6], %s2266
          %s2268 = sand.u32 %s115, 1
          %s2269 = smul.addr %s2268, 8
          %s2270 = scalar_lea.vmem [#allocation10], %s2269
          %2271 = dma.done %s2267, 128
        $region60: #{tpu_custom_call.1} parent=55 // pred_fallthru
          _
        // Predicated region
        $region61: #{tpu_custom_call.1} parent=55 // pred_check
          %p2272 = pneg %p156
        $region62: #{tpu_custom_call.1} parent=55 // pred_check_branch
          %2274 = sbr.rel (%p2272) target = $region64
        $region63: #{tpu_custom_call.1} parent=55 // pred_region
          %s2275 = sand.u32 %s141, 1
          %s2276 = scalar_lea.sflag [#allocation12], %s2275
          %s2277 = sand.u32 %s141, 1
          %s2278 = smul.addr %s2277, 8
          %s2279 = scalar_lea.vmem [#allocation11], %s2278
          %2280 = dma.done %s2276, 128
        $region64: #{tpu_custom_call.1} parent=55 // pred_fallthru
          _
      $region56: #{tpu_custom_call.1} parent=5 // pred_fallthru
        _
    $region6: #{tpu_custom_call.1} parent=1 // loop_footer
      %s27 = sadd.s32 1, %s23
    $region7: #{tpu_custom_call.1} parent=1 // loop_footer_branch
      %22 = sbr.rel target = $region3
    $region8: #{tpu_custom_call.1} parent=1 // loop_exit
      _
    %2281 = vsyncpa [#allocation5], 1
    %s2282 = scalar_lea.sflag [#allocation5], 1
    %2283 = vsyncpa %s2282, 1
    %2284 = vsyncpa [#allocation8], 1
    %s2285 = scalar_lea.sflag [#allocation8], 1
    %2286 = vsyncpa %s2285, 1
    %2287 = vsyncpa [#allocation6], 1
    %s2288 = scalar_lea.sflag [#allocation6], 1
    %2289 = vsyncpa %s2288, 1
    %2290 = vsyncpa [#allocation12], 1
    %s2291 = scalar_lea.sflag [#allocation12], 1
    %2292 = vsyncpa %s2291, 1

</llo_original>
